<compile_context>
chip_gen: v6e
topology: v6e:2x2x1
jax: 0.10.0
libtpu: 0.0.40
codegen_flags: <defaults>
</compile_context>

<pallas_src>
import jax
import jax.numpy as jnp
from jax.experimental import pallas as pl
from jax.experimental.pallas import tpu as pltpu

H = 128   # hidden_size
V = 256   # output_size (vocab)


def decoder_kernel(tok_ref,       # VMEM: (T, 1)   int32 token ids
                   emb_ref,       # VMEM: (V, H)   bf16 embedding table
                   h0_ref,        # VMEM: (1, H)   f32 initial hidden
                   w_ih_ref,      # VMEM: (H, 3H)  bf16 = weight_ih_l0.T (gate order r,z,n)
                   b_ih_ref,      # VMEM: (1, 3H)  f32
                   w_hh_ref,      # VMEM: (H, 3H)  bf16 = weight_hh_l0.T
                   b_hh_ref,      # VMEM: (1, 3H)  f32
                   w_out_ref,     # VMEM: (H, V)   bf16 = out.weight.T
                   b_out_ref,     # VMEM: (1, V)   f32
                   logp_ref,      # out:  (T, V)   f32 log-probs, all steps
                   h_all_ref):    # out:  (T, H)   f32 hidden state, all steps
    T = logp_ref.shape[0]

    # ---- Prologue (runs once, M=T): embedding gather + input projection ----
    vocab_iota = jax.lax.broadcasted_iota(jnp.int32, (T, V), 1)
    onehot = (vocab_iota == tok_ref[...]).astype(jnp.bfloat16)                  # (T, V)
    x = jnp.dot(onehot, emb_ref[...], preferred_element_type=jnp.float32)       # (T, H)
    gi = jnp.dot(x.astype(jnp.bfloat16), w_ih_ref[...],
                 preferred_element_type=jnp.float32) + b_ih_ref[...]            # (T, 3H)

    # ---- Serial recurrence: only h @ W_hh (K=128) + gate math per step ----
    h = h0_ref[...]                                                             # (1, H) f32
    for t in range(T):   # T is small & static: fully unrolled, LLO sees across steps
        gh = jnp.dot(h.astype(jnp.bfloat16), w_hh_ref[...],
                     preferred_element_type=jnp.float32) + b_hh_ref[...]        # (1, 3H)
        gi_t = gi[t:t + 1, :]                                                   # (1, 3H)
        r = jax.nn.sigmoid(gi_t[:, 0 * H:1 * H] + gh[:, 0 * H:1 * H])
        z = jax.nn.sigmoid(gi_t[:, 1 * H:2 * H] + gh[:, 1 * H:2 * H])
        n = jnp.tanh(gi_t[:, 2 * H:3 * H] + r * gh[:, 2 * H:3 * H])
        h = (1.0 - z) * n + z * h                                               # (1, H) f32
        h_all_ref[t:t + 1, :] = h                                               # dense row write

    # ---- Epilogue (runs once, M=T): output Linear + batched LogSoftmax ----
    h_all = h_all_ref[...]                                                      # (T, H) f32
    logits = jnp.dot(h_all.astype(jnp.bfloat16), w_out_ref[...],
                     preferred_element_type=jnp.float32) + b_out_ref[...]       # (T, V)
    m = jnp.max(logits, axis=1, keepdims=True)
    shifted = logits - m
    lse = jnp.log(jnp.sum(jnp.exp(shifted), axis=1, keepdims=True))
    logp_ref[...] = shifted - lse


@jax.jit
def decoder_decode(tokens, hidden, params):
    """Run T teacher-forced decode steps (== T chained DecoderRNN.forward calls)
    in a single fused pallas_call.  Returns (logp (T,V), hidden per step (T,H))."""
    T = tokens.shape[0]
    tok2d = tokens.astype(jnp.int32).reshape(T, 1)
    h0 = hidden.reshape(1, H).astype(jnp.float32)

    cost = pl.CostEstimate(
        flops=int(2 * T * (V * H + H * 3 * H + H * 3 * H + H * V)),
        transcendentals=int(T * (3 * H + V)),
        bytes_accessed=int(params["embedding"].nbytes
                           + params["w_ih_t"].nbytes + params["b_ih"].nbytes
                           + params["w_hh_t"].nbytes + params["b_hh"].nbytes
                           + params["w_out_t"].nbytes + params["b_out"].nbytes
                           + T * (V + H) * 4 + T * 4 + H * 4),
    )

    logp, h_all = pl.pallas_call(
        decoder_kernel,
        out_shape=(jax.ShapeDtypeStruct((T, V), jnp.float32),
                   jax.ShapeDtypeStruct((T, H), jnp.float32)),
        grid=(1,),                                           # single invocation: whole decode fused
        in_specs=[
            pl.BlockSpec((T, 1), lambda i: (0, 0)),          # token ids
            pl.BlockSpec((V, H), lambda i: (0, 0)),          # embedding (DMA'd once)
            pl.BlockSpec((1, H), lambda i: (0, 0)),          # h0
            pl.BlockSpec((H, 3 * H), lambda i: (0, 0)),      # W_ih^T
            pl.BlockSpec((1, 3 * H), lambda i: (0, 0)),      # b_ih
            pl.BlockSpec((H, 3 * H), lambda i: (0, 0)),      # W_hh^T
            pl.BlockSpec((1, 3 * H), lambda i: (0, 0)),      # b_hh
            pl.BlockSpec((H, V), lambda i: (0, 0)),          # W_out^T
            pl.BlockSpec((1, V), lambda i: (0, 0)),          # b_out
        ],
        out_specs=(pl.BlockSpec((T, V), lambda i: (0, 0)),   # all-step log-probs
                   pl.BlockSpec((T, H), lambda i: (0, 0))),  # all-step hidden states
        compiler_params=pltpu.CompilerParams(
            dimension_semantics=("arbitrary",)),
        cost_estimate=cost,
    )(tok2d, params["embedding"], h0,
      params["w_ih_t"], params["b_ih"], params["w_hh_t"], params["b_hh"],
      params["w_out_t"], params["b_out"])
    return logp, h_all


def decoder_forward(token, hidden, params):
    """Mirrors DecoderRNN.forward(input, hidden) for a single token (batch=1, seq=1)."""
    tokens = jnp.asarray(token, dtype=jnp.int32).reshape(1)
    logp, h_all = decoder_decode(tokens, hidden, params)
    return logp, h_all[-1].reshape(1, 1, H)


def init_params(key):
    """Deterministic synthetic init (PyTorch-style uniform(-1/sqrt(H), 1/sqrt(H))).
    Returns (bf16/f32 kernel params, raw f32 params for the reference)."""
    ks = jax.random.split(key, 8)
    bound = 1.0 / jnp.sqrt(jnp.float32(H))
    u = lambda k, shape: jax.random.uniform(k, shape, jnp.float32, -bound, bound)

    raw = {
        "embedding": jax.random.normal(ks[0], (V, H), jnp.float32),
        "w_ih_t":    u(ks[1], (H, 3 * H)),     # = weight_ih_l0.T, gate order (r, z, n)
        "w_hh_t":    u(ks[2], (H, 3 * H)),     # = weight_hh_l0.T
        "b_ih":      u(ks[3], (1, 3 * H)),
        "b_hh":      u(ks[4], (1, 3 * H)),
        "w_out_t":   u(ks[5], (H, V)),         # = out.weight.T
        "b_out":     u(ks[6], (1, V)),
    }

    params = {
        "embedding": raw["embedding"].astype(jnp.bfloat16),
        "w_ih_t":    raw["w_ih_t"].astype(jnp.bfloat16),
        "b_ih":      raw["b_ih"],                              # f32
        "w_hh_t":    raw["w_hh_t"].astype(jnp.bfloat16),
        "b_hh":      raw["b_hh"],                              # f32
        "w_out_t":   raw["w_out_t"].astype(jnp.bfloat16),
        "b_out":     raw["b_out"],                             # f32
    }
    return params, raw


def reference_decode(tokens, hidden, raw):
    """Pure-JAX reference of T chained PyTorch forward passes (bf16 weight rounding
    mirrored at the same points as the kernel; all gate math in f32)."""
    emb = raw["embedding"].astype(jnp.bfloat16).astype(jnp.float32)
    w_ih = raw["w_ih_t"].astype(jnp.bfloat16).astype(jnp.float32)
    w_hh = raw["w_hh_t"].astype(jnp.bfloat16).astype(jnp.float32)
    w_out = raw["w_out_t"].astype(jnp.bfloat16).astype(jnp.float32)

    h = hidden.reshape(1, H).astype(jnp.float32)
    logps, hs = [], []
    for t in range(tokens.shape[0]):
        x = emb[tokens[t]].reshape(1, H)                        # already bf16-valued
        hb = h.astype(jnp.bfloat16).astype(jnp.float32)
        gi = x @ w_ih + raw["b_ih"]
        gh = hb @ w_hh + raw["b_hh"]
        r = jax.nn.sigmoid(gi[:, :H] + gh[:, :H])
        z = jax.nn.sigmoid(gi[:, H:2 * H] + gh[:, H:2 * H])
        n = jnp.tanh(gi[:, 2 * H:] + r * gh[:, 2 * H:])
        h = (1.0 - z) * n + z * h
        hnb = h.astype(jnp.bfloat16).astype(jnp.float32)
        logits = hnb @ w_out + raw["b_out"]
        logps.append(jax.nn.log_softmax(logits, axis=1))
        hs.append(h)
    return jnp.concatenate(logps, axis=0), jnp.concatenate(hs, axis=0)


if __name__ == "__main__":
    key = jax.random.PRNGKey(0)
    k_params, k_tok = jax.random.split(key)
    params, raw = init_params(k_params)

    T = 8                                                   # decode 8 tokens in one kernel call
    tokens = jax.random.randint(k_tok, (T,), 0, V, dtype=jnp.int32)
    hidden = jnp.zeros((1, 1, H), dtype=jnp.float32)        # initHidden()

    logp, h_all = decoder_decode(tokens, hidden, params)
    jax.block_until_ready((logp, h_all))

    ref_logp, ref_h = reference_decode(tokens, hidden, raw)
    assert logp.shape == (T, V) and h_all.shape == (T, H)
    assert jnp.allclose(logp, ref_logp, atol=2e-3, rtol=2e-3)
    assert jnp.allclose(h_all, ref_h, atol=2e-3, rtol=2e-3)

    # Single-step API matching DecoderRNN.forward(input, hidden).
    logp1, h1 = decoder_forward(tokens[0], hidden, params)
    jax.block_until_ready((logp1, h1))
    assert logp1.shape == (1, V) and h1.shape == (1, 1, H)
    assert jnp.allclose(logp1, ref_logp[0:1], atol=2e-3, rtol=2e-3)
    assert jnp.allclose(h1.reshape(1, H), ref_h[0:1], atol=2e-3, rtol=2e-3)

    print("KERNEL_OK")
</pallas_src>

<mosaic_0001>
module attributes {stable_mosaic.version = 11 : i64} {
  func.func @decoder_kernel(%arg0: i32, %arg1: memref<8x1xi32, #tpu.memory_space<vmem>>, %arg2: memref<256x128xbf16, #tpu.memory_space<vmem>>, %arg3: memref<1x128xf32, #tpu.memory_space<vmem>>, %arg4: memref<128x384xbf16, #tpu.memory_space<vmem>>, %arg5: memref<1x384xf32, #tpu.memory_space<vmem>>, %arg6: memref<128x384xbf16, #tpu.memory_space<vmem>>, %arg7: memref<1x384xf32, #tpu.memory_space<vmem>>, %arg8: memref<128x256xbf16, #tpu.memory_space<vmem>>, %arg9: memref<1x256xf32, #tpu.memory_space<vmem>>, %arg10: memref<8x256xf32, #tpu.memory_space<vmem>>, %arg11: memref<8x128xf32, #tpu.memory_space<vmem>>) attributes {dimension_semantics = [#tpu.dimension_semantics<arbitrary>], iteration_bounds = array<i64: 1>, scalar_prefetch = 0 : i64, scratch_operands = 0 : i64, tpu.core_type = #tpu.core_type<tc>, window_params = [{pipeline_mode = #tpu.pipeline_mode<synchronous>, transform_indices = @transform_0, window_bounds = array<i64: 8, 1>}, {pipeline_mode = #tpu.pipeline_mode<synchronous>, transform_indices = @transform_1, window_bounds = array<i64: 256, 128>}, {pipeline_mode = #tpu.pipeline_mode<synchronous>, transform_indices = @transform_2, window_bounds = array<i64: 1, 128>}, {pipeline_mode = #tpu.pipeline_mode<synchronous>, transform_indices = @transform_3, window_bounds = array<i64: 128, 384>}, {pipeline_mode = #tpu.pipeline_mode<synchronous>, transform_indices = @transform_4, window_bounds = array<i64: 1, 384>}, {pipeline_mode = #tpu.pipeline_mode<synchronous>, transform_indices = @transform_5, window_bounds = array<i64: 128, 384>}, {pipeline_mode = #tpu.pipeline_mode<synchronous>, transform_indices = @transform_6, window_bounds = array<i64: 1, 384>}, {pipeline_mode = #tpu.pipeline_mode<synchronous>, transform_indices = @transform_7, window_bounds = array<i64: 128, 256>}, {pipeline_mode = #tpu.pipeline_mode<synchronous>, transform_indices = @transform_8, window_bounds = array<i64: 1, 256>}, {pipeline_mode = #tpu.pipeline_mode<synchronous>, transform_indices = @transform_9, window_bounds = array<i64: 8, 256>}, {pipeline_mode = #tpu.pipeline_mode<synchronous>, transform_indices = @transform_10, window_bounds = array<i64: 8, 128>}]} {
    %0 = tpu.iota {dimensions = array<i32: 1>} : vector<8x256xi32>
    %c0 = arith.constant 0 : index
    %c0_0 = arith.constant 0 : index
    %1 = vector.load %arg1[%c0, %c0_0] : memref<8x1xi32, #tpu.memory_space<vmem>>, vector<8x1xi32>
    %2 = vector.broadcast %1 : vector<8x1xi32> to vector<8x256xi32>
    %3 = arith.cmpi eq, %0, %2 : vector<8x256xi32>
    %4 = arith.extui %3 : vector<8x256xi1> to vector<8x256xi32>
    %5 = arith.sitofp %4 : vector<8x256xi32> to vector<8x256xf32>
    %6 = arith.truncf %5 : vector<8x256xf32> to vector<8x256xbf16>
    %c0_1 = arith.constant 0 : index
    %c0_2 = arith.constant 0 : index
    %7 = vector.load %arg2[%c0_1, %c0_2] : memref<256x128xbf16, #tpu.memory_space<vmem>>, vector<256x128xbf16>
    %cst = arith.constant dense<0.000000e+00> : vector<8x128xf32>
    %8 = tpu.matmul %6, %7, %cst {dimension_numbers = #tpu.dot_dimension_numbers<[1], [0], [0], [1], [0, 0, 1, 1], [], []>} : vector<8x256xbf16>, vector<256x128xbf16>, vector<8x128xf32> -> vector<8x128xf32>
    %9 = arith.truncf %8 : vector<8x128xf32> to vector<8x128xbf16>
    %c0_3 = arith.constant 0 : index
    %c0_4 = arith.constant 0 : index
    %10 = vector.load %arg4[%c0_3, %c0_4] : memref<128x384xbf16, #tpu.memory_space<vmem>>, vector<128x384xbf16>
    %cst_5 = arith.constant dense<0.000000e+00> : vector<8x384xf32>
    %11 = tpu.matmul %9, %10, %cst_5 {dimension_numbers = #tpu.dot_dimension_numbers<[1], [0], [0], [1], [0, 0, 1, 1], [], []>} : vector<8x128xbf16>, vector<128x384xbf16>, vector<8x384xf32> -> vector<8x384xf32>
    %c0_6 = arith.constant 0 : index
    %c0_7 = arith.constant 0 : index
    %12 = vector.load %arg5[%c0_6, %c0_7] : memref<1x384xf32, #tpu.memory_space<vmem>>, vector<1x384xf32>
    %13 = vector.broadcast %12 : vector<1x384xf32> to vector<8x384xf32>
    %14 = arith.addf %11, %13 : vector<8x384xf32>
    %c0_8 = arith.constant 0 : index
    %c0_9 = arith.constant 0 : index
    %15 = vector.load %arg3[%c0_8, %c0_9] : memref<1x128xf32, #tpu.memory_space<vmem>>, vector<1x128xf32>
    %16 = arith.truncf %15 : vector<1x128xf32> to vector<1x128xbf16>
    %c0_10 = arith.constant 0 : index
    %c0_11 = arith.constant 0 : index
    %17 = vector.load %arg6[%c0_10, %c0_11] : memref<128x384xbf16, #tpu.memory_space<vmem>>, vector<128x384xbf16>
    %cst_12 = arith.constant dense<0.000000e+00> : vector<1x384xf32>
    %18 = tpu.matmul %16, %17, %cst_12 {dimension_numbers = #tpu.dot_dimension_numbers<[1], [0], [0], [1], [0, 0, 1, 1], [], []>} : vector<1x128xbf16>, vector<128x384xbf16>, vector<1x384xf32> -> vector<1x384xf32>
    %c0_13 = arith.constant 0 : index
    %c0_14 = arith.constant 0 : index
    %19 = vector.load %arg7[%c0_13, %c0_14] : memref<1x384xf32, #tpu.memory_space<vmem>>, vector<1x384xf32>
    %20 = arith.addf %18, %19 : vector<1x384xf32>
    %21 = vector.extract_strided_slice %14 {offsets = [0, 0], sizes = [1, 384], strides = [1, 1]} : vector<8x384xf32> to vector<1x384xf32>
    %22 = vector.extract_strided_slice %21 {offsets = [0, 0], sizes = [1, 128], strides = [1, 1]} : vector<1x384xf32> to vector<1x128xf32>
    %23 = vector.extract_strided_slice %20 {offsets = [0, 0], sizes = [1, 128], strides = [1, 1]} : vector<1x384xf32> to vector<1x128xf32>
    %24 = arith.addf %22, %23 : vector<1x128xf32>
    %25 = arith.negf %24 : vector<1x128xf32>
    %26 = math.exp %25 : vector<1x128xf32>
    %cst_15 = arith.constant 1.000000e+00 : f32
    %27 = vector.broadcast %cst_15 : f32 to vector<1x128xf32>
    %28 = arith.addf %27, %26 : vector<1x128xf32>
    %29 = arith.divf %27, %28 : vector<1x128xf32>
    %30 = vector.extract_strided_slice %21 {offsets = [0, 128], sizes = [1, 128], strides = [1, 1]} : vector<1x384xf32> to vector<1x128xf32>
    %31 = vector.extract_strided_slice %20 {offsets = [0, 128], sizes = [1, 128], strides = [1, 1]} : vector<1x384xf32> to vector<1x128xf32>
    %32 = arith.addf %30, %31 : vector<1x128xf32>
    %33 = arith.negf %32 : vector<1x128xf32>
    %34 = math.exp %33 : vector<1x128xf32>
    %cst_16 = arith.constant 1.000000e+00 : f32
    %35 = vector.broadcast %cst_16 : f32 to vector<1x128xf32>
    %36 = arith.addf %35, %34 : vector<1x128xf32>
    %37 = arith.divf %35, %36 : vector<1x128xf32>
    %38 = vector.extract_strided_slice %21 {offsets = [0, 256], sizes = [1, 128], strides = [1, 1]} : vector<1x384xf32> to vector<1x128xf32>
    %39 = vector.extract_strided_slice %20 {offsets = [0, 256], sizes = [1, 128], strides = [1, 1]} : vector<1x384xf32> to vector<1x128xf32>
    %40 = arith.mulf %29, %39 : vector<1x128xf32>
    %41 = arith.addf %38, %40 : vector<1x128xf32>
    %42 = math.tanh %41 : vector<1x128xf32>
    %cst_17 = arith.constant 1.000000e+00 : f32
    %43 = vector.broadcast %cst_17 : f32 to vector<1x128xf32>
    %44 = arith.subf %43, %37 : vector<1x128xf32>
    %45 = arith.mulf %44, %42 : vector<1x128xf32>
    %46 = arith.mulf %37, %15 : vector<1x128xf32>
    %47 = arith.addf %45, %46 : vector<1x128xf32>
    %c0_18 = arith.constant 0 : index
    %c0_19 = arith.constant 0 : index
    %48 = vector.load %arg11[%c0_18, %c0_19] : memref<8x128xf32, #tpu.memory_space<vmem>>, vector<1x128xf32>
    tpu.vector_store %arg11[%c0_18, %c0_19], %47 {strides = array<i32>} : memref<8x128xf32, #tpu.memory_space<vmem>>, vector<1x128xf32>,
    %49 = arith.truncf %47 : vector<1x128xf32> to vector<1x128xbf16>
    %c0_20 = arith.constant 0 : index
    %c0_21 = arith.constant 0 : index
    %50 = vector.load %arg6[%c0_20, %c0_21] : memref<128x384xbf16, #tpu.memory_space<vmem>>, vector<128x384xbf16>
    %cst_22 = arith.constant dense<0.000000e+00> : vector<1x384xf32>
    %51 = tpu.matmul %49, %50, %cst_22 {dimension_numbers = #tpu.dot_dimension_numbers<[1], [0], [0], [1], [0, 0, 1, 1], [], []>} : vector<1x128xbf16>, vector<128x384xbf16>, vector<1x384xf32> -> vector<1x384xf32>
    %c0_23 = arith.constant 0 : index
    %c0_24 = arith.constant 0 : index
    %52 = vector.load %arg7[%c0_23, %c0_24] : memref<1x384xf32, #tpu.memory_space<vmem>>, vector<1x384xf32>
    %53 = arith.addf %51, %52 : vector<1x384xf32>
    %54 = vector.extract_strided_slice %14 {offsets = [1, 0], sizes = [1, 384], strides = [1, 1]} : vector<8x384xf32> to vector<1x384xf32>
    %55 = vector.extract_strided_slice %54 {offsets = [0, 0], sizes = [1, 128], strides = [1, 1]} : vector<1x384xf32> to vector<1x128xf32>
    %56 = vector.extract_strided_slice %53 {offsets = [0, 0], sizes = [1, 128], strides = [1, 1]} : vector<1x384xf32> to vector<1x128xf32>
    %57 = arith.addf %55, %56 : vector<1x128xf32>
    %58 = arith.negf %57 : vector<1x128xf32>
    %59 = math.exp %58 : vector<1x128xf32>
    %cst_25 = arith.constant 1.000000e+00 : f32
    %60 = vector.broadcast %cst_25 : f32 to vector<1x128xf32>
    %61 = arith.addf %60, %59 : vector<1x128xf32>
    %62 = arith.divf %60, %61 : vector<1x128xf32>
    %63 = vector.extract_strided_slice %54 {offsets = [0, 128], sizes = [1, 128], strides = [1, 1]} : vector<1x384xf32> to vector<1x128xf32>
    %64 = vector.extract_strided_slice %53 {offsets = [0, 128], sizes = [1, 128], strides = [1, 1]} : vector<1x384xf32> to vector<1x128xf32>
    %65 = arith.addf %63, %64 : vector<1x128xf32>
    %66 = arith.negf %65 : vector<1x128xf32>
    %67 = math.exp %66 : vector<1x128xf32>
    %cst_26 = arith.constant 1.000000e+00 : f32
    %68 = vector.broadcast %cst_26 : f32 to vector<1x128xf32>
    %69 = arith.addf %68, %67 : vector<1x128xf32>
    %70 = arith.divf %68, %69 : vector<1x128xf32>
    %71 = vector.extract_strided_slice %54 {offsets = [0, 256], sizes = [1, 128], strides = [1, 1]} : vector<1x384xf32> to vector<1x128xf32>
    %72 = vector.extract_strided_slice %53 {offsets = [0, 256], sizes = [1, 128], strides = [1, 1]} : vector<1x384xf32> to vector<1x128xf32>
    %73 = arith.mulf %62, %72 : vector<1x128xf32>
    %74 = arith.addf %71, %73 : vector<1x128xf32>
    %75 = math.tanh %74 : vector<1x128xf32>
    %cst_27 = arith.constant 1.000000e+00 : f32
    %76 = vector.broadcast %cst_27 : f32 to vector<1x128xf32>
    %77 = arith.subf %76, %70 : vector<1x128xf32>
    %78 = arith.mulf %77, %75 : vector<1x128xf32>
    %79 = arith.mulf %70, %47 : vector<1x128xf32>
    %80 = arith.addf %78, %79 : vector<1x128xf32>
    %c1 = arith.constant 1 : index
    %c0_28 = arith.constant 0 : index
    %81 = vector.load %arg11[%c1, %c0_28] : memref<8x128xf32, #tpu.memory_space<vmem>>, vector<1x128xf32>
    tpu.vector_store %arg11[%c1, %c0_28], %80 {strides = array<i32>} : memref<8x128xf32, #tpu.memory_space<vmem>>, vector<1x128xf32>,
    %82 = arith.truncf %80 : vector<1x128xf32> to vector<1x128xbf16>
    %c0_29 = arith.constant 0 : index
    %c0_30 = arith.constant 0 : index
    %83 = vector.load %arg6[%c0_29, %c0_30] : memref<128x384xbf16, #tpu.memory_space<vmem>>, vector<128x384xbf16>
    %cst_31 = arith.constant dense<0.000000e+00> : vector<1x384xf32>
    %84 = tpu.matmul %82, %83, %cst_31 {dimension_numbers = #tpu.dot_dimension_numbers<[1], [0], [0], [1], [0, 0, 1, 1], [], []>} : vector<1x128xbf16>, vector<128x384xbf16>, vector<1x384xf32> -> vector<1x384xf32>
    %c0_32 = arith.constant 0 : index
    %c0_33 = arith.constant 0 : index
    %85 = vector.load %arg7[%c0_32, %c0_33] : memref<1x384xf32, #tpu.memory_space<vmem>>, vector<1x384xf32>
    %86 = arith.addf %84, %85 : vector<1x384xf32>
    %87 = vector.extract_strided_slice %14 {offsets = [2, 0], sizes = [1, 384], strides = [1, 1]} : vector<8x384xf32> to vector<1x384xf32>
    %88 = vector.extract_strided_slice %87 {offsets = [0, 0], sizes = [1, 128], strides = [1, 1]} : vector<1x384xf32> to vector<1x128xf32>
    %89 = vector.extract_strided_slice %86 {offsets = [0, 0], sizes = [1, 128], strides = [1, 1]} : vector<1x384xf32> to vector<1x128xf32>
    %90 = arith.addf %88, %89 : vector<1x128xf32>
    %91 = arith.negf %90 : vector<1x128xf32>
    %92 = math.exp %91 : vector<1x128xf32>
    %cst_34 = arith.constant 1.000000e+00 : f32
    %93 = vector.broadcast %cst_34 : f32 to vector<1x128xf32>
    %94 = arith.addf %93, %92 : vector<1x128xf32>
    %95 = arith.divf %93, %94 : vector<1x128xf32>
    %96 = vector.extract_strided_slice %87 {offsets = [0, 128], sizes = [1, 128], strides = [1, 1]} : vector<1x384xf32> to vector<1x128xf32>
    %97 = vector.extract_strided_slice %86 {offsets = [0, 128], sizes = [1, 128], strides = [1, 1]} : vector<1x384xf32> to vector<1x128xf32>
    %98 = arith.addf %96, %97 : vector<1x128xf32>
    %99 = arith.negf %98 : vector<1x128xf32>
    %100 = math.exp %99 : vector<1x128xf32>
    %cst_35 = arith.constant 1.000000e+00 : f32
    %101 = vector.broadcast %cst_35 : f32 to vector<1x128xf32>
    %102 = arith.addf %101, %100 : vector<1x128xf32>
    %103 = arith.divf %101, %102 : vector<1x128xf32>
    %104 = vector.extract_strided_slice %87 {offsets = [0, 256], sizes = [1, 128], strides = [1, 1]} : vector<1x384xf32> to vector<1x128xf32>
    %105 = vector.extract_strided_slice %86 {offsets = [0, 256], sizes = [1, 128], strides = [1, 1]} : vector<1x384xf32> to vector<1x128xf32>
    %106 = arith.mulf %95, %105 : vector<1x128xf32>
    %107 = arith.addf %104, %106 : vector<1x128xf32>
    %108 = math.tanh %107 : vector<1x128xf32>
    %cst_36 = arith.constant 1.000000e+00 : f32
    %109 = vector.broadcast %cst_36 : f32 to vector<1x128xf32>
    %110 = arith.subf %109, %103 : vector<1x128xf32>
    %111 = arith.mulf %110, %108 : vector<1x128xf32>
    %112 = arith.mulf %103, %80 : vector<1x128xf32>
    %113 = arith.addf %111, %112 : vector<1x128xf32>
    %c2 = arith.constant 2 : index
    %c0_37 = arith.constant 0 : index
    %114 = vector.load %arg11[%c2, %c0_37] : memref<8x128xf32, #tpu.memory_space<vmem>>, vector<1x128xf32>
    tpu.vector_store %arg11[%c2, %c0_37], %113 {strides = array<i32>} : memref<8x128xf32, #tpu.memory_space<vmem>>, vector<1x128xf32>,
    %115 = arith.truncf %113 : vector<1x128xf32> to vector<1x128xbf16>
    %c0_38 = arith.constant 0 : index
    %c0_39 = arith.constant 0 : index
    %116 = vector.load %arg6[%c0_38, %c0_39] : memref<128x384xbf16, #tpu.memory_space<vmem>>, vector<128x384xbf16>
    %cst_40 = arith.constant dense<0.000000e+00> : vector<1x384xf32>
    %117 = tpu.matmul %115, %116, %cst_40 {dimension_numbers = #tpu.dot_dimension_numbers<[1], [0], [0], [1], [0, 0, 1, 1], [], []>} : vector<1x128xbf16>, vector<128x384xbf16>, vector<1x384xf32> -> vector<1x384xf32>
    %c0_41 = arith.constant 0 : index
    %c0_42 = arith.constant 0 : index
    %118 = vector.load %arg7[%c0_41, %c0_42] : memref<1x384xf32, #tpu.memory_space<vmem>>, vector<1x384xf32>
    %119 = arith.addf %117, %118 : vector<1x384xf32>
    %120 = vector.extract_strided_slice %14 {offsets = [3, 0], sizes = [1, 384], strides = [1, 1]} : vector<8x384xf32> to vector<1x384xf32>
    %121 = vector.extract_strided_slice %120 {offsets = [0, 0], sizes = [1, 128], strides = [1, 1]} : vector<1x384xf32> to vector<1x128xf32>
    %122 = vector.extract_strided_slice %119 {offsets = [0, 0], sizes = [1, 128], strides = [1, 1]} : vector<1x384xf32> to vector<1x128xf32>
    %123 = arith.addf %121, %122 : vector<1x128xf32>
    %124 = arith.negf %123 : vector<1x128xf32>
    %125 = math.exp %124 : vector<1x128xf32>
    %cst_43 = arith.constant 1.000000e+00 : f32
    %126 = vector.broadcast %cst_43 : f32 to vector<1x128xf32>
    %127 = arith.addf %126, %125 : vector<1x128xf32>
    %128 = arith.divf %126, %127 : vector<1x128xf32>
    %129 = vector.extract_strided_slice %120 {offsets = [0, 128], sizes = [1, 128], strides = [1, 1]} : vector<1x384xf32> to vector<1x128xf32>
    %130 = vector.extract_strided_slice %119 {offsets = [0, 128], sizes = [1, 128], strides = [1, 1]} : vector<1x384xf32> to vector<1x128xf32>
    %131 = arith.addf %129, %130 : vector<1x128xf32>
    %132 = arith.negf %131 : vector<1x128xf32>
    %133 = math.exp %132 : vector<1x128xf32>
    %cst_44 = arith.constant 1.000000e+00 : f32
    %134 = vector.broadcast %cst_44 : f32 to vector<1x128xf32>
    %135 = arith.addf %134, %133 : vector<1x128xf32>
    %136 = arith.divf %134, %135 : vector<1x128xf32>
    %137 = vector.extract_strided_slice %120 {offsets = [0, 256], sizes = [1, 128], strides = [1, 1]} : vector<1x384xf32> to vector<1x128xf32>
    %138 = vector.extract_strided_slice %119 {offsets = [0, 256], sizes = [1, 128], strides = [1, 1]} : vector<1x384xf32> to vector<1x128xf32>
    %139 = arith.mulf %128, %138 : vector<1x128xf32>
    %140 = arith.addf %137, %139 : vector<1x128xf32>
    %141 = math.tanh %140 : vector<1x128xf32>
    %cst_45 = arith.constant 1.000000e+00 : f32
    %142 = vector.broadcast %cst_45 : f32 to vector<1x128xf32>
    %143 = arith.subf %142, %136 : vector<1x128xf32>
    %144 = arith.mulf %143, %141 : vector<1x128xf32>
    %145 = arith.mulf %136, %113 : vector<1x128xf32>
    %146 = arith.addf %144, %145 : vector<1x128xf32>
    %c3 = arith.constant 3 : index
    %c0_46 = arith.constant 0 : index
    %147 = vector.load %arg11[%c3, %c0_46] : memref<8x128xf32, #tpu.memory_space<vmem>>, vector<1x128xf32>
    tpu.vector_store %arg11[%c3, %c0_46], %146 {strides = array<i32>} : memref<8x128xf32, #tpu.memory_space<vmem>>, vector<1x128xf32>,
    %148 = arith.truncf %146 : vector<1x128xf32> to vector<1x128xbf16>
    %c0_47 = arith.constant 0 : index
    %c0_48 = arith.constant 0 : index
    %149 = vector.load %arg6[%c0_47, %c0_48] : memref<128x384xbf16, #tpu.memory_space<vmem>>, vector<128x384xbf16>
    %cst_49 = arith.constant dense<0.000000e+00> : vector<1x384xf32>
    %150 = tpu.matmul %148, %149, %cst_49 {dimension_numbers = #tpu.dot_dimension_numbers<[1], [0], [0], [1], [0, 0, 1, 1], [], []>} : vector<1x128xbf16>, vector<128x384xbf16>, vector<1x384xf32> -> vector<1x384xf32>
    %c0_50 = arith.constant 0 : index
    %c0_51 = arith.constant 0 : index
    %151 = vector.load %arg7[%c0_50, %c0_51] : memref<1x384xf32, #tpu.memory_space<vmem>>, vector<1x384xf32>
    %152 = arith.addf %150, %151 : vector<1x384xf32>
    %153 = vector.extract_strided_slice %14 {offsets = [4, 0], sizes = [1, 384], strides = [1, 1]} : vector<8x384xf32> to vector<1x384xf32>
    %154 = vector.extract_strided_slice %153 {offsets = [0, 0], sizes = [1, 128], strides = [1, 1]} : vector<1x384xf32> to vector<1x128xf32>
    %155 = vector.extract_strided_slice %152 {offsets = [0, 0], sizes = [1, 128], strides = [1, 1]} : vector<1x384xf32> to vector<1x128xf32>
    %156 = arith.addf %154, %155 : vector<1x128xf32>
    %157 = arith.negf %156 : vector<1x128xf32>
    %158 = math.exp %157 : vector<1x128xf32>
    %cst_52 = arith.constant 1.000000e+00 : f32
    %159 = vector.broadcast %cst_52 : f32 to vector<1x128xf32>
    %160 = arith.addf %159, %158 : vector<1x128xf32>
    %161 = arith.divf %159, %160 : vector<1x128xf32>
    %162 = vector.extract_strided_slice %153 {offsets = [0, 128], sizes = [1, 128], strides = [1, 1]} : vector<1x384xf32> to vector<1x128xf32>
    %163 = vector.extract_strided_slice %152 {offsets = [0, 128], sizes = [1, 128], strides = [1, 1]} : vector<1x384xf32> to vector<1x128xf32>
    %164 = arith.addf %162, %163 : vector<1x128xf32>
    %165 = arith.negf %164 : vector<1x128xf32>
    %166 = math.exp %165 : vector<1x128xf32>
    %cst_53 = arith.constant 1.000000e+00 : f32
    %167 = vector.broadcast %cst_53 : f32 to vector<1x128xf32>
    %168 = arith.addf %167, %166 : vector<1x128xf32>
    %169 = arith.divf %167, %168 : vector<1x128xf32>
    %170 = vector.extract_strided_slice %153 {offsets = [0, 256], sizes = [1, 128], strides = [1, 1]} : vector<1x384xf32> to vector<1x128xf32>
    %171 = vector.extract_strided_slice %152 {offsets = [0, 256], sizes = [1, 128], strides = [1, 1]} : vector<1x384xf32> to vector<1x128xf32>
    %172 = arith.mulf %161, %171 : vector<1x128xf32>
    %173 = arith.addf %170, %172 : vector<1x128xf32>
    %174 = math.tanh %173 : vector<1x128xf32>
    %cst_54 = arith.constant 1.000000e+00 : f32
    %175 = vector.broadcast %cst_54 : f32 to vector<1x128xf32>
    %176 = arith.subf %175, %169 : vector<1x128xf32>
    %177 = arith.mulf %176, %174 : vector<1x128xf32>
    %178 = arith.mulf %169, %146 : vector<1x128xf32>
    %179 = arith.addf %177, %178 : vector<1x128xf32>
    %c4 = arith.constant 4 : index
    %c0_55 = arith.constant 0 : index
    %180 = vector.load %arg11[%c4, %c0_55] : memref<8x128xf32, #tpu.memory_space<vmem>>, vector<1x128xf32>
    tpu.vector_store %arg11[%c4, %c0_55], %179 {strides = array<i32>} : memref<8x128xf32, #tpu.memory_space<vmem>>, vector<1x128xf32>,
    %181 = arith.truncf %179 : vector<1x128xf32> to vector<1x128xbf16>
    %c0_56 = arith.constant 0 : index
    %c0_57 = arith.constant 0 : index
    %182 = vector.load %arg6[%c0_56, %c0_57] : memref<128x384xbf16, #tpu.memory_space<vmem>>, vector<128x384xbf16>
    %cst_58 = arith.constant dense<0.000000e+00> : vector<1x384xf32>
    %183 = tpu.matmul %181, %182, %cst_58 {dimension_numbers = #tpu.dot_dimension_numbers<[1], [0], [0], [1], [0, 0, 1, 1], [], []>} : vector<1x128xbf16>, vector<128x384xbf16>, vector<1x384xf32> -> vector<1x384xf32>
    %c0_59 = arith.constant 0 : index
    %c0_60 = arith.constant 0 : index
    %184 = vector.load %arg7[%c0_59, %c0_60] : memref<1x384xf32, #tpu.memory_space<vmem>>, vector<1x384xf32>
    %185 = arith.addf %183, %184 : vector<1x384xf32>
    %186 = vector.extract_strided_slice %14 {offsets = [5, 0], sizes = [1, 384], strides = [1, 1]} : vector<8x384xf32> to vector<1x384xf32>
    %187 = vector.extract_strided_slice %186 {offsets = [0, 0], sizes = [1, 128], strides = [1, 1]} : vector<1x384xf32> to vector<1x128xf32>
    %188 = vector.extract_strided_slice %185 {offsets = [0, 0], sizes = [1, 128], strides = [1, 1]} : vector<1x384xf32> to vector<1x128xf32>
    %189 = arith.addf %187, %188 : vector<1x128xf32>
    %190 = arith.negf %189 : vector<1x128xf32>
    %191 = math.exp %190 : vector<1x128xf32>
    %cst_61 = arith.constant 1.000000e+00 : f32
    %192 = vector.broadcast %cst_61 : f32 to vector<1x128xf32>
    %193 = arith.addf %192, %191 : vector<1x128xf32>
    %194 = arith.divf %192, %193 : vector<1x128xf32>
    %195 = vector.extract_strided_slice %186 {offsets = [0, 128], sizes = [1, 128], strides = [1, 1]} : vector<1x384xf32> to vector<1x128xf32>
    %196 = vector.extract_strided_slice %185 {offsets = [0, 128], sizes = [1, 128], strides = [1, 1]} : vector<1x384xf32> to vector<1x128xf32>
    %197 = arith.addf %195, %196 : vector<1x128xf32>
    %198 = arith.negf %197 : vector<1x128xf32>
    %199 = math.exp %198 : vector<1x128xf32>
    %cst_62 = arith.constant 1.000000e+00 : f32
    %200 = vector.broadcast %cst_62 : f32 to vector<1x128xf32>
    %201 = arith.addf %200, %199 : vector<1x128xf32>
    %202 = arith.divf %200, %201 : vector<1x128xf32>
    %203 = vector.extract_strided_slice %186 {offsets = [0, 256], sizes = [1, 128], strides = [1, 1]} : vector<1x384xf32> to vector<1x128xf32>
    %204 = vector.extract_strided_slice %185 {offsets = [0, 256], sizes = [1, 128], strides = [1, 1]} : vector<1x384xf32> to vector<1x128xf32>
    %205 = arith.mulf %194, %204 : vector<1x128xf32>
    %206 = arith.addf %203, %205 : vector<1x128xf32>
    %207 = math.tanh %206 : vector<1x128xf32>
    %cst_63 = arith.constant 1.000000e+00 : f32
    %208 = vector.broadcast %cst_63 : f32 to vector<1x128xf32>
    %209 = arith.subf %208, %202 : vector<1x128xf32>
    %210 = arith.mulf %209, %207 : vector<1x128xf32>
    %211 = arith.mulf %202, %179 : vector<1x128xf32>
    %212 = arith.addf %210, %211 : vector<1x128xf32>
    %c5 = arith.constant 5 : index
    %c0_64 = arith.constant 0 : index
    %213 = vector.load %arg11[%c5, %c0_64] : memref<8x128xf32, #tpu.memory_space<vmem>>, vector<1x128xf32>
    tpu.vector_store %arg11[%c5, %c0_64], %212 {strides = array<i32>} : memref<8x128xf32, #tpu.memory_space<vmem>>, vector<1x128xf32>,
    %214 = arith.truncf %212 : vector<1x128xf32> to vector<1x128xbf16>
    %c0_65 = arith.constant 0 : index
    %c0_66 = arith.constant 0 : index
    %215 = vector.load %arg6[%c0_65, %c0_66] : memref<128x384xbf16, #tpu.memory_space<vmem>>, vector<128x384xbf16>
    %cst_67 = arith.constant dense<0.000000e+00> : vector<1x384xf32>
    %216 = tpu.matmul %214, %215, %cst_67 {dimension_numbers = #tpu.dot_dimension_numbers<[1], [0], [0], [1], [0, 0, 1, 1], [], []>} : vector<1x128xbf16>, vector<128x384xbf16>, vector<1x384xf32> -> vector<1x384xf32>
    %c0_68 = arith.constant 0 : index
    %c0_69 = arith.constant 0 : index
    %217 = vector.load %arg7[%c0_68, %c0_69] : memref<1x384xf32, #tpu.memory_space<vmem>>, vector<1x384xf32>
    %218 = arith.addf %216, %217 : vector<1x384xf32>
    %219 = vector.extract_strided_slice %14 {offsets = [6, 0], sizes = [1, 384], strides = [1, 1]} : vector<8x384xf32> to vector<1x384xf32>
    %220 = vector.extract_strided_slice %219 {offsets = [0, 0], sizes = [1, 128], strides = [1, 1]} : vector<1x384xf32> to vector<1x128xf32>
    %221 = vector.extract_strided_slice %218 {offsets = [0, 0], sizes = [1, 128], strides = [1, 1]} : vector<1x384xf32> to vector<1x128xf32>
    %222 = arith.addf %220, %221 : vector<1x128xf32>
    %223 = arith.negf %222 : vector<1x128xf32>
    %224 = math.exp %223 : vector<1x128xf32>
    %cst_70 = arith.constant 1.000000e+00 : f32
    %225 = vector.broadcast %cst_70 : f32 to vector<1x128xf32>
    %226 = arith.addf %225, %224 : vector<1x128xf32>
    %227 = arith.divf %225, %226 : vector<1x128xf32>
    %228 = vector.extract_strided_slice %219 {offsets = [0, 128], sizes = [1, 128], strides = [1, 1]} : vector<1x384xf32> to vector<1x128xf32>
    %229 = vector.extract_strided_slice %218 {offsets = [0, 128], sizes = [1, 128], strides = [1, 1]} : vector<1x384xf32> to vector<1x128xf32>
    %230 = arith.addf %228, %229 : vector<1x128xf32>
    %231 = arith.negf %230 : vector<1x128xf32>
    %232 = math.exp %231 : vector<1x128xf32>
    %cst_71 = arith.constant 1.000000e+00 : f32
    %233 = vector.broadcast %cst_71 : f32 to vector<1x128xf32>
    %234 = arith.addf %233, %232 : vector<1x128xf32>
    %235 = arith.divf %233, %234 : vector<1x128xf32>
    %236 = vector.extract_strided_slice %219 {offsets = [0, 256], sizes = [1, 128], strides = [1, 1]} : vector<1x384xf32> to vector<1x128xf32>
    %237 = vector.extract_strided_slice %218 {offsets = [0, 256], sizes = [1, 128], strides = [1, 1]} : vector<1x384xf32> to vector<1x128xf32>
    %238 = arith.mulf %227, %237 : vector<1x128xf32>
    %239 = arith.addf %236, %238 : vector<1x128xf32>
    %240 = math.tanh %239 : vector<1x128xf32>
    %cst_72 = arith.constant 1.000000e+00 : f32
    %241 = vector.broadcast %cst_72 : f32 to vector<1x128xf32>
    %242 = arith.subf %241, %235 : vector<1x128xf32>
    %243 = arith.mulf %242, %240 : vector<1x128xf32>
    %244 = arith.mulf %235, %212 : vector<1x128xf32>
    %245 = arith.addf %243, %244 : vector<1x128xf32>
    %c6 = arith.constant 6 : index
    %c0_73 = arith.constant 0 : index
    %246 = vector.load %arg11[%c6, %c0_73] : memref<8x128xf32, #tpu.memory_space<vmem>>, vector<1x128xf32>
    tpu.vector_store %arg11[%c6, %c0_73], %245 {strides = array<i32>} : memref<8x128xf32, #tpu.memory_space<vmem>>, vector<1x128xf32>,
    %247 = arith.truncf %245 : vector<1x128xf32> to vector<1x128xbf16>
    %c0_74 = arith.constant 0 : index
    %c0_75 = arith.constant 0 : index
    %248 = vector.load %arg6[%c0_74, %c0_75] : memref<128x384xbf16, #tpu.memory_space<vmem>>, vector<128x384xbf16>
    %cst_76 = arith.constant dense<0.000000e+00> : vector<1x384xf32>
    %249 = tpu.matmul %247, %248, %cst_76 {dimension_numbers = #tpu.dot_dimension_numbers<[1], [0], [0], [1], [0, 0, 1, 1], [], []>} : vector<1x128xbf16>, vector<128x384xbf16>, vector<1x384xf32> -> vector<1x384xf32>
    %c0_77 = arith.constant 0 : index
    %c0_78 = arith.constant 0 : index
    %250 = vector.load %arg7[%c0_77, %c0_78] : memref<1x384xf32, #tpu.memory_space<vmem>>, vector<1x384xf32>
    %251 = arith.addf %249, %250 : vector<1x384xf32>
    %252 = vector.extract_strided_slice %14 {offsets = [7, 0], sizes = [1, 384], strides = [1, 1]} : vector<8x384xf32> to vector<1x384xf32>
    %253 = vector.extract_strided_slice %252 {offsets = [0, 0], sizes = [1, 128], strides = [1, 1]} : vector<1x384xf32> to vector<1x128xf32>
    %254 = vector.extract_strided_slice %251 {offsets = [0, 0], sizes = [1, 128], strides = [1, 1]} : vector<1x384xf32> to vector<1x128xf32>
    %255 = arith.addf %253, %254 : vector<1x128xf32>
    %256 = arith.negf %255 : vector<1x128xf32>
    %257 = math.exp %256 : vector<1x128xf32>
    %cst_79 = arith.constant 1.000000e+00 : f32
    %258 = vector.broadcast %cst_79 : f32 to vector<1x128xf32>
    %259 = arith.addf %258, %257 : vector<1x128xf32>
    %260 = arith.divf %258, %259 : vector<1x128xf32>
    %261 = vector.extract_strided_slice %252 {offsets = [0, 128], sizes = [1, 128], strides = [1, 1]} : vector<1x384xf32> to vector<1x128xf32>
    %262 = vector.extract_strided_slice %251 {offsets = [0, 128], sizes = [1, 128], strides = [1, 1]} : vector<1x384xf32> to vector<1x128xf32>
    %263 = arith.addf %261, %262 : vector<1x128xf32>
    %264 = arith.negf %263 : vector<1x128xf32>
    %265 = math.exp %264 : vector<1x128xf32>
    %cst_80 = arith.constant 1.000000e+00 : f32
    %266 = vector.broadcast %cst_80 : f32 to vector<1x128xf32>
    %267 = arith.addf %266, %265 : vector<1x128xf32>
    %268 = arith.divf %266, %267 : vector<1x128xf32>
    %269 = vector.extract_strided_slice %252 {offsets = [0, 256], sizes = [1, 128], strides = [1, 1]} : vector<1x384xf32> to vector<1x128xf32>
    %270 = vector.extract_strided_slice %251 {offsets = [0, 256], sizes = [1, 128], strides = [1, 1]} : vector<1x384xf32> to vector<1x128xf32>
    %271 = arith.mulf %260, %270 : vector<1x128xf32>
    %272 = arith.addf %269, %271 : vector<1x128xf32>
    %273 = math.tanh %272 : vector<1x128xf32>
    %cst_81 = arith.constant 1.000000e+00 : f32
    %274 = vector.broadcast %cst_81 : f32 to vector<1x128xf32>
    %275 = arith.subf %274, %268 : vector<1x128xf32>
    %276 = arith.mulf %275, %273 : vector<1x128xf32>
    %277 = arith.mulf %268, %245 : vector<1x128xf32>
    %278 = arith.addf %276, %277 : vector<1x128xf32>
    %c7 = arith.constant 7 : index
    %c0_82 = arith.constant 0 : index
    %279 = vector.load %arg11[%c7, %c0_82] : memref<8x128xf32, #tpu.memory_space<vmem>>, vector<1x128xf32>
    tpu.vector_store %arg11[%c7, %c0_82], %278 {strides = array<i32>} : memref<8x128xf32, #tpu.memory_space<vmem>>, vector<1x128xf32>,
    %c0_83 = arith.constant 0 : index
    %c0_84 = arith.constant 0 : index
    %280 = vector.load %arg11[%c0_83, %c0_84] : memref<8x128xf32, #tpu.memory_space<vmem>>, vector<8x128xf32>
    %281 = arith.truncf %280 : vector<8x128xf32> to vector<8x128xbf16>
    %c0_85 = arith.constant 0 : index
    %c0_86 = arith.constant 0 : index
    %282 = vector.load %arg8[%c0_85, %c0_86] : memref<128x256xbf16, #tpu.memory_space<vmem>>, vector<128x256xbf16>
    %cst_87 = arith.constant dense<0.000000e+00> : vector<8x256xf32>
    %283 = tpu.matmul %281, %282, %cst_87 {dimension_numbers = #tpu.dot_dimension_numbers<[1], [0], [0], [1], [0, 0, 1, 1], [], []>} : vector<8x128xbf16>, vector<128x256xbf16>, vector<8x256xf32> -> vector<8x256xf32>
    %c0_88 = arith.constant 0 : index
    %c0_89 = arith.constant 0 : index
    %284 = vector.load %arg9[%c0_88, %c0_89] : memref<1x256xf32, #tpu.memory_space<vmem>>, vector<1x256xf32>
    %285 = vector.broadcast %284 : vector<1x256xf32> to vector<8x256xf32>
    %286 = arith.addf %283, %285 : vector<8x256xf32>
    %cst_90 = arith.constant dense<0xFF800000> : vector<8xf32>
    %287 = vector.multi_reduction <maximumf>, %286, %cst_90 [1] : vector<8x256xf32> to vector<8xf32>
    %288 = vector.shape_cast %287 : vector<8xf32> to vector<8x1xf32>
    %289 = vector.broadcast %288 : vector<8x1xf32> to vector<8x256xf32>
    %290 = arith.subf %286, %289 : vector<8x256xf32>
    %291 = math.exp %290 : vector<8x256xf32>
    %cst_91 = arith.constant dense<0.000000e+00> : vector<8xf32>
    %292 = vector.multi_reduction <add>, %291, %cst_91 [1] : vector<8x256xf32> to vector<8xf32>
    %293 = vector.shape_cast %292 : vector<8xf32> to vector<8x1xf32>
    %294 = math.log %293 : vector<8x1xf32>
    %295 = vector.broadcast %294 : vector<8x1xf32> to vector<8x256xf32>
    %296 = arith.subf %290, %295 : vector<8x256xf32>
    %c0_92 = arith.constant 0 : index
    %c0_93 = arith.constant 0 : index
    %297 = vector.load %arg10[%c0_92, %c0_93] : memref<8x256xf32, #tpu.memory_space<vmem>>, vector<8x256xf32>
    tpu.vector_store %arg10[%c0_92, %c0_93], %296 {strides = array<i32>} : memref<8x256xf32, #tpu.memory_space<vmem>>, vector<8x256xf32>,
    return
  }
  func.func @transform_0(%arg0: i32) -> (i32, i32) {
    %c0_i32 = arith.constant 0 : i32
    %c0_i32_0 = arith.constant 0 : i32
    %c0_i32_1 = arith.constant 0 : i32
    return %c0_i32, %c0_i32_0 : i32, i32
  }
  func.func @transform_1(%arg0: i32) -> (i32, i32) {
    %c0_i32 = arith.constant 0 : i32
    %c0_i32_0 = arith.constant 0 : i32
    %c0_i32_1 = arith.constant 0 : i32
    return %c0_i32, %c0_i32_0 : i32, i32
  }
  func.func @transform_2(%arg0: i32) -> (i32, i32) {
    %c0_i32 = arith.constant 0 : i32
    %c0_i32_0 = arith.constant 0 : i32
    %c0_i32_1 = arith.constant 0 : i32
    return %c0_i32, %c0_i32_0 : i32, i32
  }
  func.func @transform_3(%arg0: i32) -> (i32, i32) {
    %c0_i32 = arith.constant 0 : i32
    %c0_i32_0 = arith.constant 0 : i32
    %c0_i32_1 = arith.constant 0 : i32
    return %c0_i32, %c0_i32_0 : i32, i32
  }
  func.func @transform_4(%arg0: i32) -> (i32, i32) {
    %c0_i32 = arith.constant 0 : i32
    %c0_i32_0 = arith.constant 0 : i32
    %c0_i32_1 = arith.constant 0 : i32
    return %c0_i32, %c0_i32_0 : i32, i32
  }
  func.func @transform_5(%arg0: i32) -> (i32, i32) {
    %c0_i32 = arith.constant 0 : i32
    %c0_i32_0 = arith.constant 0 : i32
    %c0_i32_1 = arith.constant 0 : i32
    return %c0_i32, %c0_i32_0 : i32, i32
  }
  func.func @transform_6(%arg0: i32) -> (i32, i32) {
    %c0_i32 = arith.constant 0 : i32
    %c0_i32_0 = arith.constant 0 : i32
    %c0_i32_1 = arith.constant 0 : i32
    return %c0_i32, %c0_i32_0 : i32, i32
  }
  func.func @transform_7(%arg0: i32) -> (i32, i32) {
    %c0_i32 = arith.constant 0 : i32
    %c0_i32_0 = arith.constant 0 : i32
    %c0_i32_1 = arith.constant 0 : i32
    return %c0_i32, %c0_i32_0 : i32, i32
  }
  func.func @transform_8(%arg0: i32) -> (i32, i32) {
    %c0_i32 = arith.constant 0 : i32
    %c0_i32_0 = arith.constant 0 : i32
    %c0_i32_1 = arith.constant 0 : i32
    return %c0_i32, %c0_i32_0 : i32, i32
  }
  func.func @transform_9(%arg0: i32) -> (i32, i32) {
    %c0_i32 = arith.constant 0 : i32
    %c0_i32_0 = arith.constant 0 : i32
    %c0_i32_1 = arith.constant 0 : i32
    return %c0_i32, %c0_i32_0 : i32, i32
  }
  func.func @transform_10(%arg0: i32) -> (i32, i32) {
    %c0_i32 = arith.constant 0 : i32
    %c0_i32_0 = arith.constant 0 : i32
    %c0_i32_1 = arith.constant 0 : i32
    return %c0_i32, %c0_i32_0 : i32, i32
  }
}

</mosaic_0001>

<llo_original>
// kernel: decoder_decode.1
$region0: #{decoder_decode.1}
  #allocation0 [shape = 'u32[]', space=smem, size = 0x4, offset = 0x4, fixed_abs, tag = 'smem constant byte address 0x4 - core index']
  #allocation1 [shape = 'u32[144,128]{1,0:T(1,128)}', space=vmem, size = 0x12000, scoped, tag = 'internal scratch']
  %s0 = inlined_call_operand.vmem [shape: s32[8,1], index: 0, kind: input, shape index: {}]
  %s1 = inlined_call_operand.hbm [shape: bf16[256,128], index: 1, kind: input, shape index: {}]
  %s2 = inlined_call_operand.vmem [shape: f32[1,128], index: 2, kind: input, shape index: {}]
  %s3 = inlined_call_operand.hbm [shape: bf16[128,384], index: 3, kind: input, shape index: {}]
  %s4 = inlined_call_operand.vmem [shape: f32[1,384], index: 4, kind: input, shape index: {}]
  %s5 = inlined_call_operand.hbm [shape: bf16[128,384], index: 5, kind: input, shape index: {}]
  %s6 = inlined_call_operand.vmem [shape: f32[1,384], index: 6, kind: input, shape index: {}]
  %s7 = inlined_call_operand.hbm [shape: bf16[128,256], index: 7, kind: input, shape index: {}]
  %s8 = inlined_call_operand.vmem [shape: f32[1,256], index: 8, kind: input, shape index: {}]
  %s9 = inlined_call_operand.hbm [shape: f32[8,256], index: 9, kind: output, shape index: {0}]
  %s10 = inlined_call_operand.hbm [shape: f32[8,128], index: 10, kind: output, shape index: {1}]
  %11 = xla_tuple %s9, %s10
  %s12 = sld [smem:[#allocation0]]
  $region70: #{decoder_decode.1} parent=0
    _
  %s14 = ssub.s32 1, %s12
  %s15 = scalar_select 0, %s14, %s12
  $region1: #{decoder_decode.1} parent=0
    #allocation2 [shape = 'u8[65536]{0}', space=vmem, size = 0x10000, scoped, tag = 'input window, operand 1, single buffered']
    #allocation3 [shape = 's32[1]{0}', space=sflag, size = 0x4, scoped, tag = 'scoped memory for decoder_decode.1']
    #allocation4 [shape = 's32[1]{0}', space=sflag, size = 0x4, scoped, tag = 'scoped memory for decoder_decode.1']
    #allocation5 [shape = 'u8[98304]{0}', space=vmem, size = 0x18000, scoped, tag = 'input window, operand 3, single buffered']
    #allocation6 [shape = 's32[1]{0}', space=sflag, size = 0x4, scoped, tag = 'scoped memory for decoder_decode.1']
    #allocation7 [shape = 'u8[98304]{0}', space=vmem, size = 0x18000, scoped, tag = 'input window, operand 5, single buffered']
    #allocation8 [shape = 'u8[65536]{0}', space=vmem, size = 0x10000, scoped, tag = 'input window, operand 7, single buffered']
    #allocation9 [shape = 's32[1]{0}', space=sflag, size = 0x4, scoped, tag = 'scoped memory for decoder_decode.1']
    #allocation10 [shape = 'u8[8192]{0}', space=vmem, size = 0x2000, scoped, tag = 'output window, operand 0, single buffered']
    #allocation11 [shape = 'u8[4096]{0}', space=vmem, size = 0x1000, scoped, tag = 'output window, operand 1, single buffered']
    #allocation12 [shape = 's32[1]{0}', space=sflag, size = 0x4, scoped, tag = 'scoped memory for decoder_decode.1']
    %16 = vsyncpa [#allocation3], 0
    %17 = vsyncpa [#allocation6], 0
    %18 = vsyncpa [#allocation9], 0
    %19 = vsyncpa [#allocation4], 0
    %20 = vsyncpa [#allocation12], 0
    // Predicated region
    $region2: #{decoder_decode.1} parent=1 // pred_check
      _
    $region3: #{decoder_decode.1} parent=1 // pred_check_branch
      %22 = sbr.rel (0) target = $region5
    $region4: #{decoder_decode.1} parent=1 // pred_region
      _
    $region5: #{decoder_decode.1} parent=1 // pred_fallthru
      _
    // Predicated region
    $region6: #{decoder_decode.1} parent=1 // pred_check
      _
    $region7: #{decoder_decode.1} parent=1 // pred_check_branch
      %24 = sbr.rel (0) target = $region9
    $region8: #{decoder_decode.1} parent=1 // pred_region
      %s26 = ssub.s32 2048, 2048
      %27 = vsyncadd [#allocation3], %s26
      %s28 = sshll.u32 [#allocation2], 4
      %s29 = int_to_ptr.vmem [resolvable:$true] %s28
      %34 = dma.hbm_to_vmem [thread:$0]  %s1, 2048, %s29, [#allocation3], 64, 64, 4
    $region9: #{decoder_decode.1} parent=1 // pred_fallthru
      _
    // Predicated region
    $region10: #{decoder_decode.1} parent=1 // pred_check
      _
    $region11: #{decoder_decode.1} parent=1 // pred_check_branch
      %36 = sbr.rel (0) target = $region13
    $region12: #{decoder_decode.1} parent=1 // pred_region
      _
    $region13: #{decoder_decode.1} parent=1 // pred_fallthru
      _
    // Predicated region
    $region14: #{decoder_decode.1} parent=1 // pred_check
      _
    $region15: #{decoder_decode.1} parent=1 // pred_check_branch
      %38 = sbr.rel (0) target = $region17
    $region16: #{decoder_decode.1} parent=1 // pred_region
      %s40 = ssub.s32 3072, 3072
      %41 = vsyncadd [#allocation6], %s40
      %s42 = sshll.u32 [#allocation5], 4
      %s43 = int_to_ptr.vmem [resolvable:$true] %s42
      %48 = dma.hbm_to_vmem [thread:$0]  %s3, 3072, %s43, [#allocation6], 192, 192, 12
    $region17: #{decoder_decode.1} parent=1 // pred_fallthru
      _
    // Predicated region
    $region18: #{decoder_decode.1} parent=1 // pred_check
      _
    $region19: #{decoder_decode.1} parent=1 // pred_check_branch
      %50 = sbr.rel (0) target = $region21
    $region20: #{decoder_decode.1} parent=1 // pred_region
      _
    $region21: #{decoder_decode.1} parent=1 // pred_fallthru
      _
    // Predicated region
    $region22: #{decoder_decode.1} parent=1 // pred_check
      _
    $region23: #{decoder_decode.1} parent=1 // pred_check_branch
      %52 = sbr.rel (0) target = $region25
    $region24: #{decoder_decode.1} parent=1 // pred_region
      %s54 = ssub.s32 3072, 3072
      %55 = vsyncadd [#allocation6], %s54
      %s56 = sshll.u32 [#allocation7], 4
      %s57 = int_to_ptr.vmem [resolvable:$true] %s56
      %62 = dma.hbm_to_vmem [thread:$0]  %s5, 3072, %s57, [#allocation6], 192, 192, 12
    $region25: #{decoder_decode.1} parent=1 // pred_fallthru
      _
    // Predicated region
    $region26: #{decoder_decode.1} parent=1 // pred_check
      _
    $region27: #{decoder_decode.1} parent=1 // pred_check_branch
      %64 = sbr.rel (0) target = $region29
    $region28: #{decoder_decode.1} parent=1 // pred_region
      _
    $region29: #{decoder_decode.1} parent=1 // pred_fallthru
      _
    // Predicated region
    $region30: #{decoder_decode.1} parent=1 // pred_check
      _
    $region31: #{decoder_decode.1} parent=1 // pred_check_branch
      %66 = sbr.rel (0) target = $region33
    $region32: #{decoder_decode.1} parent=1 // pred_region
      %s68 = ssub.s32 2048, 2048
      %69 = vsyncadd [#allocation9], %s68
      %s70 = sshll.u32 [#allocation8], 4
      %s71 = int_to_ptr.vmem [resolvable:$true] %s70
      %76 = dma.hbm_to_vmem [thread:$0]  %s7, 2048, %s71, [#allocation9], 128, 128, 8
    $region33: #{decoder_decode.1} parent=1 // pred_fallthru
      _
    // Predicated region
    $region34: #{decoder_decode.1} parent=1 // pred_check
      _
    $region35: #{decoder_decode.1} parent=1 // pred_check_branch
      %78 = sbr.rel (0) target = $region37
    $region36: #{decoder_decode.1} parent=1 // pred_region
      _
    $region37: #{decoder_decode.1} parent=1 // pred_fallthru
      _
    // Predicated region
    $region38: #{decoder_decode.1} parent=1 // pred_check
      _
    $region39: #{decoder_decode.1} parent=1 // pred_check_branch
      %80 = sbr.rel (0) target = $region41
    $region40: #{decoder_decode.1} parent=1 // pred_region
      %81 = dma.done [#allocation3], 2048
    $region41: #{decoder_decode.1} parent=1 // pred_fallthru
      _
    // Predicated region
    $region42: #{decoder_decode.1} parent=1 // pred_check
      _
    $region43: #{decoder_decode.1} parent=1 // pred_check_branch
      %83 = sbr.rel (0) target = $region45
    $region44: #{decoder_decode.1} parent=1 // pred_region
      %84 = dma.done [#allocation6], 3072
    $region45: #{decoder_decode.1} parent=1 // pred_fallthru
      _
    // Predicated region
    $region46: #{decoder_decode.1} parent=1 // pred_check
      _
    $region47: #{decoder_decode.1} parent=1 // pred_check_branch
      %86 = sbr.rel (0) target = $region49
    $region48: #{decoder_decode.1} parent=1 // pred_region
      %87 = dma.done [#allocation6], 3072
    $region49: #{decoder_decode.1} parent=1 // pred_fallthru
      _
    // Predicated region
    $region50: #{decoder_decode.1} parent=1 // pred_check
      _
    $region51: #{decoder_decode.1} parent=1 // pred_check_branch
      %89 = sbr.rel (0) target = $region53
    $region52: #{decoder_decode.1} parent=1 // pred_region
      %90 = dma.done [#allocation9], 2048
    $region53: #{decoder_decode.1} parent=1 // pred_fallthru
      _
    %v92 = vlaneseq
    %v93 = vand.u32 %v92, 127
    %v94 = vadd.s32 %v93, 128
    %v95 = vld [vmem:[%s0] sm:$0xff]
    %96 = vset.pattern.permute.xlu0 0
    %97 = vperm.xlu0 %96, %v95
    %v98 = vpop.permute.xlu0 %97
    %vm99 = vcmp.eq.s32.totalorder %v93, %v98
    %vm100 = vcmp.eq.s32.totalorder %v94, %v98
    %v101 = vsel %vm99, 1, 0
    %v102 = vsel %vm100, 1, 0
    %v103 = vcvt.s32.f32 %v101
    %v104 = vcvt.s32.f32 %v102
    %v105 = vpack.c.bf16 %v103, %v103
    %v106 = vpack.c.bf16 %v104, %v104
    %v107 = vld [vmem:[#allocation2] sm:$0xf]
    %v108 = vld [vmem:[#allocation2 + $0x4] sm:$0xf]
    %v109 = vld [vmem:[#allocation2 + $0x8] sm:$0xf]
    %v110 = vld [vmem:[#allocation2 + $0xc] sm:$0xf]
    %v111 = vld [vmem:[#allocation2 + $0x10] sm:$0xf]
    %v112 = vld [vmem:[#allocation2 + $0x14] sm:$0xf]
    %v113 = vld [vmem:[#allocation2 + $0x18] sm:$0xf]
    %v114 = vld [vmem:[#allocation2 + $0x1c] sm:$0xf]
    %v115 = vld [vmem:[#allocation2 + $0x20] sm:$0xf]
    %v116 = vld [vmem:[#allocation2 + $0x24] sm:$0xf]
    %v117 = vld [vmem:[#allocation2 + $0x28] sm:$0xf]
    %v118 = vld [vmem:[#allocation2 + $0x2c] sm:$0xf]
    %v119 = vld [vmem:[#allocation2 + $0x30] sm:$0xf]
    %v120 = vld [vmem:[#allocation2 + $0x34] sm:$0xf]
    %v121 = vld [vmem:[#allocation2 + $0x38] sm:$0xf]
    %v122 = vld [vmem:[#allocation2 + $0x3c] sm:$0xf]
    %v123 = vld [vmem:[#allocation2 + $0x40] sm:$0xf]
    %v124 = vld [vmem:[#allocation2 + $0x44] sm:$0xf]
    %v125 = vld [vmem:[#allocation2 + $0x48] sm:$0xf]
    %v126 = vld [vmem:[#allocation2 + $0x4c] sm:$0xf]
    %v127 = vld [vmem:[#allocation2 + $0x50] sm:$0xf]
    %v128 = vld [vmem:[#allocation2 + $0x54] sm:$0xf]
    %v129 = vld [vmem:[#allocation2 + $0x58] sm:$0xf]
    %v130 = vld [vmem:[#allocation2 + $0x5c] sm:$0xf]
    %v131 = vld [vmem:[#allocation2 + $0x60] sm:$0xf]
    %v132 = vld [vmem:[#allocation2 + $0x64] sm:$0xf]
    %v133 = vld [vmem:[#allocation2 + $0x68] sm:$0xf]
    %v134 = vld [vmem:[#allocation2 + $0x6c] sm:$0xf]
    %v135 = vld [vmem:[#allocation2 + $0x70] sm:$0xf]
    %v136 = vld [vmem:[#allocation2 + $0x74] sm:$0xf]
    %v137 = vld [vmem:[#allocation2 + $0x78] sm:$0xf]
    %v138 = vld [vmem:[#allocation2 + $0x7c] sm:$0xf]
    %v171 = vunpack.c.l.b16 %v107
    %v172 = vunpack.c.l.b16 %v108
    %v173 = vunpack.c.l.b16 %v109
    %v174 = vunpack.c.l.b16 %v110
    %v175 = vunpack.c.l.b16 %v111
    %v176 = vunpack.c.l.b16 %v112
    %v177 = vunpack.c.l.b16 %v113
    %v178 = vunpack.c.l.b16 %v114
    %v179 = vunpack.c.l.b16 %v115
    %v180 = vunpack.c.l.b16 %v116
    %v181 = vunpack.c.l.b16 %v117
    %v182 = vunpack.c.l.b16 %v118
    %v183 = vunpack.c.l.b16 %v119
    %v184 = vunpack.c.l.b16 %v120
    %v185 = vunpack.c.l.b16 %v121
    %v186 = vunpack.c.l.b16 %v122
    %v187 = vunpack.c.l.b16 %v123
    %v188 = vunpack.c.l.b16 %v124
    %v189 = vunpack.c.l.b16 %v125
    %v190 = vunpack.c.l.b16 %v126
    %v191 = vunpack.c.l.b16 %v127
    %v192 = vunpack.c.l.b16 %v128
    %v193 = vunpack.c.l.b16 %v129
    %v194 = vunpack.c.l.b16 %v130
    %v195 = vunpack.c.l.b16 %v131
    %v196 = vunpack.c.l.b16 %v132
    %v197 = vunpack.c.l.b16 %v133
    %v198 = vunpack.c.l.b16 %v134
    %v199 = vunpack.c.l.b16 %v135
    %v200 = vunpack.c.l.b16 %v136
    %v201 = vunpack.c.l.b16 %v137
    %v202 = vunpack.c.l.b16 %v138
    %v203 = vpack.c.b16 %v172, %v171
    %v204 = vpack.c.b16 %v174, %v173
    %v205 = vpack.c.b16 %v176, %v175
    %v206 = vpack.c.b16 %v178, %v177
    %v207 = vpack.c.b16 %v180, %v179
    %v208 = vpack.c.b16 %v182, %v181
    %v209 = vpack.c.b16 %v184, %v183
    %v210 = vpack.c.b16 %v186, %v185
    %v211 = vpack.c.b16 %v188, %v187
    %v212 = vpack.c.b16 %v190, %v189
    %v213 = vpack.c.b16 %v192, %v191
    %v214 = vpack.c.b16 %v194, %v193
    %v215 = vpack.c.b16 %v196, %v195
    %v216 = vpack.c.b16 %v198, %v197
    %v217 = vpack.c.b16 %v200, %v199
    %v218 = vpack.c.b16 %v202, %v201
    %235 = vmatprep.subr.bf16.mxu0 0
    %236 = vmatpush1.bf16.msra.mxu0 %v210
    %237 = vmatprep.subr.bf16.mxu0 0
    %238 = vmatpush1.bf16.msra.mxu0 %v209
    %239 = vmatprep.subr.bf16.mxu0 0
    %240 = vmatpush1.bf16.msra.mxu0 %v208
    %241 = vmatprep.subr.bf16.mxu0 0
    %242 = vmatpush1.bf16.msra.mxu0 %v207
    %243 = vmatprep.subr.bf16.mxu0 0
    %244 = vmatpush1.bf16.msra.mxu0 %v206
    %245 = vmatprep.subr.bf16.mxu0 0
    %246 = vmatpush1.bf16.msra.mxu0 %v205
    %247 = vmatprep.subr.bf16.mxu0 0
    %248 = vmatpush1.bf16.msra.mxu0 %v204
    %249 = vmatprep.subr.bf16.mxu0 0
    %250 = vmatpush1.bf16.msra.mxu0 %v203
    %251 = vmatprep.subr.bf16.mxu0 0
    %252 = vmatpush2.bf16.msra.mxu0 %v218
    %253 = vmatprep.subr.bf16.mxu0 0
    %254 = vmatpush2.bf16.msra.mxu0 %v217
    %255 = vmatprep.subr.bf16.mxu0 0
    %256 = vmatpush2.bf16.msra.mxu0 %v216
    %257 = vmatprep.subr.bf16.mxu0 0
    %258 = vmatpush2.bf16.msra.mxu0 %v215
    %259 = vmatprep.subr.bf16.mxu0 0
    %260 = vmatpush2.bf16.msra.mxu0 %v214
    %261 = vmatprep.subr.bf16.mxu0 0
    %262 = vmatpush2.bf16.msra.mxu0 %v213
    %263 = vmatprep.subr.bf16.mxu0 0
    %264 = vmatpush2.bf16.msra.mxu0 %v212
    %265 = vmatprep.subr.bf16.mxu0 0
    %266 = vmatpush2.bf16.msra.mxu0 %v211
    %267 = vmatprep.mubr.bf16.mxu0 %v106
    %268 = vmatmul.mubr.bf16.gmra.mxu0 %v105
    %v269 = vpop.f32.mrf.mxu0
    %v270 = vadd.f32 0.0, %v269
    %v271 = vpop.f32.mrf.mxu0
    %v272 = vpop.f32.mrf.mxu0
    %v273 = vpop.f32.mrf.mxu0
    %274 = vdwg.mxu0
    %v275 = vpack.c.bf16 %v270, %v270
    %v276 = vld [vmem:[#allocation5] sm:$0xff]
    %v277 = vld [vmem:[#allocation5 + $0x8] sm:$0xf]
    %v278 = vld [vmem:[#allocation5 + $0xc] sm:$0xff]
    %v279 = vld [vmem:[#allocation5 + $0x14] sm:$0xf]
    %v280 = vld [vmem:[#allocation5 + $0x18] sm:$0xff]
    %v281 = vld [vmem:[#allocation5 + $0x20] sm:$0xf]
    %v282 = vld [vmem:[#allocation5 + $0x24] sm:$0xff]
    %v283 = vld [vmem:[#allocation5 + $0x2c] sm:$0xf]
    %v284 = vld [vmem:[#allocation5 + $0x30] sm:$0xff]
    %v285 = vld [vmem:[#allocation5 + $0x38] sm:$0xf]
    %v286 = vld [vmem:[#allocation5 + $0x3c] sm:$0xff]
    %v287 = vld [vmem:[#allocation5 + $0x44] sm:$0xf]
    %v288 = vld [vmem:[#allocation5 + $0x48] sm:$0xff]
    %v289 = vld [vmem:[#allocation5 + $0x50] sm:$0xf]
    %v290 = vld [vmem:[#allocation5 + $0x54] sm:$0xff]
    %v291 = vld [vmem:[#allocation5 + $0x5c] sm:$0xf]
    %v292 = vld [vmem:[#allocation5 + $0x60] sm:$0xff]
    %v293 = vld [vmem:[#allocation5 + $0x68] sm:$0xf]
    %v294 = vld [vmem:[#allocation5 + $0x6c] sm:$0xff]
    %v295 = vld [vmem:[#allocation5 + $0x74] sm:$0xf]
    %v296 = vld [vmem:[#allocation5 + $0x78] sm:$0xff]
    %v297 = vld [vmem:[#allocation5 + $0x80] sm:$0xf]
    %v298 = vld [vmem:[#allocation5 + $0x84] sm:$0xff]
    %v299 = vld [vmem:[#allocation5 + $0x8c] sm:$0xf]
    %v300 = vld [vmem:[#allocation5 + $0x90] sm:$0xff]
    %v301 = vld [vmem:[#allocation5 + $0x98] sm:$0xf]
    %v302 = vld [vmem:[#allocation5 + $0x9c] sm:$0xff]
    %v303 = vld [vmem:[#allocation5 + $0xa4] sm:$0xf]
    %v304 = vld [vmem:[#allocation5 + $0xa8] sm:$0xff]
    %v305 = vld [vmem:[#allocation5 + $0xb0] sm:$0xf]
    %v306 = vld [vmem:[#allocation5 + $0xb4] sm:$0xff]
    %v307 = vld [vmem:[#allocation5 + $0xbc] sm:$0xf]
    %v308 = vld [vmem:[%s4] sm:$0x7]
    %v310 = vlaneseq
    %v311 = vshrl.u32 %v310, 7
    %v312 = vsub.s32 0, %v311
    %v313 = vrot.slane %v308, %v312
    %v314 = vlaneseq
    %v315 = vshrl.u32 %v314, 7
    %v316 = vsub.s32 1, %v315
    %v317 = vrot.slane %v308, %v316
    %v318 = vlaneseq
    %v319 = vshrl.u32 %v318, 7
    %v320 = vsub.s32 2, %v319
    %v321 = vrot.slane %v308, %v320
    %v357 = vunpack.c.l.b16 %v276
    %v358 = vunpack.c.h.b16 %v276
    %v359 = vunpack.c.l.b16 %v277
    %v360 = vunpack.c.l.b16 %v278
    %v361 = vunpack.c.h.b16 %v278
    %v362 = vunpack.c.l.b16 %v279
    %v363 = vunpack.c.l.b16 %v280
    %v364 = vunpack.c.h.b16 %v280
    %v365 = vunpack.c.l.b16 %v281
    %v366 = vunpack.c.l.b16 %v282
    %v367 = vunpack.c.h.b16 %v282
    %v368 = vunpack.c.l.b16 %v283
    %v369 = vunpack.c.l.b16 %v284
    %v370 = vunpack.c.h.b16 %v284
    %v371 = vunpack.c.l.b16 %v285
    %v372 = vunpack.c.l.b16 %v286
    %v373 = vunpack.c.h.b16 %v286
    %v374 = vunpack.c.l.b16 %v287
    %v375 = vunpack.c.l.b16 %v288
    %v376 = vunpack.c.h.b16 %v288
    %v377 = vunpack.c.l.b16 %v289
    %v378 = vunpack.c.l.b16 %v290
    %v379 = vunpack.c.h.b16 %v290
    %v380 = vunpack.c.l.b16 %v291
    %v381 = vunpack.c.l.b16 %v292
    %v382 = vunpack.c.h.b16 %v292
    %v383 = vunpack.c.l.b16 %v293
    %v384 = vunpack.c.l.b16 %v294
    %v385 = vunpack.c.h.b16 %v294
    %v386 = vunpack.c.l.b16 %v295
    %v387 = vunpack.c.l.b16 %v296
    %v388 = vunpack.c.h.b16 %v296
    %v389 = vunpack.c.l.b16 %v297
    %v390 = vunpack.c.l.b16 %v298
    %v391 = vunpack.c.h.b16 %v298
    %v392 = vunpack.c.l.b16 %v299
    %v393 = vunpack.c.l.b16 %v300
    %v394 = vunpack.c.h.b16 %v300
    %v395 = vunpack.c.l.b16 %v301
    %v396 = vunpack.c.l.b16 %v302
    %v397 = vunpack.c.h.b16 %v302
    %v398 = vunpack.c.l.b16 %v303
    %v399 = vunpack.c.l.b16 %v304
    %v400 = vunpack.c.h.b16 %v304
    %v401 = vunpack.c.l.b16 %v305
    %v402 = vunpack.c.l.b16 %v306
    %v403 = vunpack.c.h.b16 %v306
    %v404 = vunpack.c.l.b16 %v307
    %v405 = vpack.c.b16 %v360, %v357
    %v406 = vpack.c.b16 %v361, %v358
    %v407 = vpack.c.b16 %v362, %v359
    %v408 = vpack.c.b16 %v366, %v363
    %v409 = vpack.c.b16 %v367, %v364
    %v410 = vpack.c.b16 %v368, %v365
    %v411 = vpack.c.b16 %v372, %v369
    %v412 = vpack.c.b16 %v373, %v370
    %v413 = vpack.c.b16 %v374, %v371
    %v414 = vpack.c.b16 %v378, %v375
    %v415 = vpack.c.b16 %v379, %v376
    %v416 = vpack.c.b16 %v380, %v377
    %v417 = vpack.c.b16 %v384, %v381
    %v418 = vpack.c.b16 %v385, %v382
    %v419 = vpack.c.b16 %v386, %v383
    %v420 = vpack.c.b16 %v390, %v387
    %v421 = vpack.c.b16 %v391, %v388
    %v422 = vpack.c.b16 %v392, %v389
    %v423 = vpack.c.b16 %v396, %v393
    %v424 = vpack.c.b16 %v397, %v394
    %v425 = vpack.c.b16 %v398, %v395
    %v426 = vpack.c.b16 %v402, %v399
    %v427 = vpack.c.b16 %v403, %v400
    %v428 = vpack.c.b16 %v404, %v401
    %453 = vmatprep.subr.bf16.mxu0 %v427
    %454 = vmatpush1.bf16.msra.mxu0 %v426
    %455 = vmatprep.subr.bf16.mxu0 %v424
    %456 = vmatpush1.bf16.msra.mxu0 %v423
    %457 = vmatprep.subr.bf16.mxu0 %v421
    %458 = vmatpush1.bf16.msra.mxu0 %v420
    %459 = vmatprep.subr.bf16.mxu0 %v418
    %460 = vmatpush1.bf16.msra.mxu0 %v417
    %461 = vmatprep.subr.bf16.mxu0 %v415
    %462 = vmatpush1.bf16.msra.mxu0 %v414
    %463 = vmatprep.subr.bf16.mxu0 %v412
    %464 = vmatpush1.bf16.msra.mxu0 %v411
    %465 = vmatprep.subr.bf16.mxu0 %v409
    %466 = vmatpush1.bf16.msra.mxu0 %v408
    %467 = vmatprep.subr.bf16.mxu0 %v406
    %468 = vmatpush1.bf16.msra.mxu0 %v405
    %469 = vmatprep.subr.bf16.mxu0 0
    %470 = vmatpush2.bf16.msra.mxu0 0
    %471 = vmatprep.subr.bf16.mxu0 0
    %472 = vmatpush2.bf16.msra.mxu0 0
    %473 = vmatprep.subr.bf16.mxu0 0
    %474 = vmatpush2.bf16.msra.mxu0 0
    %475 = vmatprep.subr.bf16.mxu0 0
    %476 = vmatpush2.bf16.msra.mxu0 0
    %477 = vmatprep.subr.bf16.mxu0 0
    %478 = vmatpush2.bf16.msra.mxu0 0
    %479 = vmatprep.subr.bf16.mxu0 0
    %480 = vmatpush2.bf16.msra.mxu0 0
    %481 = vmatprep.subr.bf16.mxu0 0
    %482 = vmatpush2.bf16.msra.mxu0 0
    %483 = vmatprep.subr.bf16.mxu0 0
    %484 = vmatpush2.bf16.msra.mxu0 0
    %485 = vmatprep.mubr.bf16.mxu0 0
    %486 = vmatmul.mubr.bf16.gmra.mxu0 %v275
    %v487 = vpop.f32.mrf.mxu0
    %v488 = vadd.f32 %v313, %v487
    %v489 = vpop.f32.mrf.mxu0
    %v490 = vadd.f32 %v317, %v489
    %v491 = vpop.f32.mrf.mxu0
    %v492 = vpop.f32.mrf.mxu0
    %493 = vdwg.mxu0
    %494 = vmatprep.subr.bf16.mxu0 0
    %495 = vmatpush1.bf16.msra.mxu0 %v428
    %496 = vmatprep.subr.bf16.mxu0 0
    %497 = vmatpush1.bf16.msra.mxu0 %v425
    %498 = vmatprep.subr.bf16.mxu0 0
    %499 = vmatpush1.bf16.msra.mxu0 %v422
    %500 = vmatprep.subr.bf16.mxu0 0
    %501 = vmatpush1.bf16.msra.mxu0 %v419
    %502 = vmatprep.subr.bf16.mxu0 0
    %503 = vmatpush1.bf16.msra.mxu0 %v416
    %504 = vmatprep.subr.bf16.mxu0 0
    %505 = vmatpush1.bf16.msra.mxu0 %v413
    %506 = vmatprep.subr.bf16.mxu0 0
    %507 = vmatpush1.bf16.msra.mxu0 %v410
    %508 = vmatprep.subr.bf16.mxu0 0
    %509 = vmatpush1.bf16.msra.mxu0 %v407
    %510 = vmatprep.subr.bf16.mxu0 0
    %511 = vmatpush2.bf16.msra.mxu0 0
    %512 = vmatprep.subr.bf16.mxu0 0
    %513 = vmatpush2.bf16.msra.mxu0 0
    %514 = vmatprep.subr.bf16.mxu0 0
    %515 = vmatpush2.bf16.msra.mxu0 0
    %516 = vmatprep.subr.bf16.mxu0 0
    %517 = vmatpush2.bf16.msra.mxu0 0
    %518 = vmatprep.subr.bf16.mxu0 0
    %519 = vmatpush2.bf16.msra.mxu0 0
    %520 = vmatprep.subr.bf16.mxu0 0
    %521 = vmatpush2.bf16.msra.mxu0 0
    %522 = vmatprep.subr.bf16.mxu0 0
    %523 = vmatpush2.bf16.msra.mxu0 0
    %524 = vmatprep.subr.bf16.mxu0 0
    %525 = vmatpush2.bf16.msra.mxu0 0
    %526 = vmatprep.mubr.bf16.mxu0 0
    %527 = vmatmul.mubr.bf16.gmra.mxu0 %v275
    %v528 = vpop.f32.mrf.mxu0
    %v529 = vadd.f32 %v321, %v528
    %v530 = vpop.f32.mrf.mxu0
    %v531 = vpop.f32.mrf.mxu0
    %v532 = vpop.f32.mrf.mxu0
    %533 = vdwg.mxu0
    %v534 = vld [vmem:[%s2] sm:$0x1]
    %v535 = vpack.c.bf16 %v534, %v534
    %v536 = vld [vmem:[#allocation7] sm:$0xff]
    %v537 = vld [vmem:[#allocation7 + $0x8] sm:$0xf]
    %v538 = vld [vmem:[#allocation7 + $0xc] sm:$0xff]
    %v539 = vld [vmem:[#allocation7 + $0x14] sm:$0xf]
    %v540 = vld [vmem:[#allocation7 + $0x18] sm:$0xff]
    %v541 = vld [vmem:[#allocation7 + $0x20] sm:$0xf]
    %v542 = vld [vmem:[#allocation7 + $0x24] sm:$0xff]
    %v543 = vld [vmem:[#allocation7 + $0x2c] sm:$0xf]
    %v544 = vld [vmem:[#allocation7 + $0x30] sm:$0xff]
    %v545 = vld [vmem:[#allocation7 + $0x38] sm:$0xf]
    %v546 = vld [vmem:[#allocation7 + $0x3c] sm:$0xff]
    %v547 = vld [vmem:[#allocation7 + $0x44] sm:$0xf]
    %v548 = vld [vmem:[#allocation7 + $0x48] sm:$0xff]
    %v549 = vld [vmem:[#allocation7 + $0x50] sm:$0xf]
    %v550 = vld [vmem:[#allocation7 + $0x54] sm:$0xff]
    %v551 = vld [vmem:[#allocation7 + $0x5c] sm:$0xf]
    %v552 = vld [vmem:[#allocation7 + $0x60] sm:$0xff]
    %v553 = vld [vmem:[#allocation7 + $0x68] sm:$0xf]
    %v554 = vld [vmem:[#allocation7 + $0x6c] sm:$0xff]
    %v555 = vld [vmem:[#allocation7 + $0x74] sm:$0xf]
    %v556 = vld [vmem:[#allocation7 + $0x78] sm:$0xff]
    %v557 = vld [vmem:[#allocation7 + $0x80] sm:$0xf]
    %v558 = vld [vmem:[#allocation7 + $0x84] sm:$0xff]
    %v559 = vld [vmem:[#allocation7 + $0x8c] sm:$0xf]
    %v560 = vld [vmem:[#allocation7 + $0x90] sm:$0xff]
    %v561 = vld [vmem:[#allocation7 + $0x98] sm:$0xf]
    %v562 = vld [vmem:[#allocation7 + $0x9c] sm:$0xff]
    %v563 = vld [vmem:[#allocation7 + $0xa4] sm:$0xf]
    %v564 = vld [vmem:[#allocation7 + $0xa8] sm:$0xff]
    %v565 = vld [vmem:[#allocation7 + $0xb0] sm:$0xf]
    %v566 = vld [vmem:[#allocation7 + $0xb4] sm:$0xff]
    %v567 = vld [vmem:[#allocation7 + $0xbc] sm:$0xf]
    %v568 = vld [vmem:[%s6] sm:$0x7]
    %v601 = vunpack.c.l.b16 %v536
    %v602 = vunpack.c.h.b16 %v536
    %v603 = vunpack.c.l.b16 %v537
    %v604 = vunpack.c.l.b16 %v538
    %v605 = vunpack.c.h.b16 %v538
    %v606 = vunpack.c.l.b16 %v539
    %v607 = vunpack.c.l.b16 %v540
    %v608 = vunpack.c.h.b16 %v540
    %v609 = vunpack.c.l.b16 %v541
    %v610 = vunpack.c.l.b16 %v542
    %v611 = vunpack.c.h.b16 %v542
    %v612 = vunpack.c.l.b16 %v543
    %v613 = vunpack.c.l.b16 %v544
    %v614 = vunpack.c.h.b16 %v544
    %v615 = vunpack.c.l.b16 %v545
    %v616 = vunpack.c.l.b16 %v546
    %v617 = vunpack.c.h.b16 %v546
    %v618 = vunpack.c.l.b16 %v547
    %v619 = vunpack.c.l.b16 %v548
    %v620 = vunpack.c.h.b16 %v548
    %v621 = vunpack.c.l.b16 %v549
    %v622 = vunpack.c.l.b16 %v550
    %v623 = vunpack.c.h.b16 %v550
    %v624 = vunpack.c.l.b16 %v551
    %v625 = vunpack.c.l.b16 %v552
    %v626 = vunpack.c.h.b16 %v552
    %v627 = vunpack.c.l.b16 %v553
    %v628 = vunpack.c.l.b16 %v554
    %v629 = vunpack.c.h.b16 %v554
    %v630 = vunpack.c.l.b16 %v555
    %v631 = vunpack.c.l.b16 %v556
    %v632 = vunpack.c.h.b16 %v556
    %v633 = vunpack.c.l.b16 %v557
    %v634 = vunpack.c.l.b16 %v558
    %v635 = vunpack.c.h.b16 %v558
    %v636 = vunpack.c.l.b16 %v559
    %v637 = vunpack.c.l.b16 %v560
    %v638 = vunpack.c.h.b16 %v560
    %v639 = vunpack.c.l.b16 %v561
    %v640 = vunpack.c.l.b16 %v562
    %v641 = vunpack.c.h.b16 %v562
    %v642 = vunpack.c.l.b16 %v563
    %v643 = vunpack.c.l.b16 %v564
    %v644 = vunpack.c.h.b16 %v564
    %v645 = vunpack.c.l.b16 %v565
    %v646 = vunpack.c.l.b16 %v566
    %v647 = vunpack.c.h.b16 %v566
    %v648 = vunpack.c.l.b16 %v567
    %v649 = vpack.c.b16 %v604, %v601
    %v650 = vpack.c.b16 %v605, %v602
    %v651 = vpack.c.b16 %v606, %v603
    %v652 = vpack.c.b16 %v610, %v607
    %v653 = vpack.c.b16 %v611, %v608
    %v654 = vpack.c.b16 %v612, %v609
    %v655 = vpack.c.b16 %v616, %v613
    %v656 = vpack.c.b16 %v617, %v614
    %v657 = vpack.c.b16 %v618, %v615
    %v658 = vpack.c.b16 %v622, %v619
    %v659 = vpack.c.b16 %v623, %v620
    %v660 = vpack.c.b16 %v624, %v621
    %v661 = vpack.c.b16 %v628, %v625
    %v662 = vpack.c.b16 %v629, %v626
    %v663 = vpack.c.b16 %v630, %v627
    %v664 = vpack.c.b16 %v634, %v631
    %v665 = vpack.c.b16 %v635, %v632
    %v666 = vpack.c.b16 %v636, %v633
    %v667 = vpack.c.b16 %v640, %v637
    %v668 = vpack.c.b16 %v641, %v638
    %v669 = vpack.c.b16 %v642, %v639
    %v670 = vpack.c.b16 %v646, %v643
    %v671 = vpack.c.b16 %v647, %v644
    %v672 = vpack.c.b16 %v648, %v645
    %v698 = vlaneseq
    %v699 = vshrl.u32 %v698, 7
    %v700 = vsub.s32 0, %v699
    %v701 = vrot.slane %v568, %v700
    %v702 = vlaneseq
    %v703 = vshrl.u32 %v702, 7
    %v704 = vsub.s32 1, %v703
    %v705 = vrot.slane %v568, %v704
    %v706 = vlaneseq
    %v707 = vshrl.u32 %v706, 7
    %v708 = vsub.s32 2, %v707
    %v709 = vrot.slane %v568, %v708
    %713 = vmatprep.subr.bf16.mxu0 %v671
    %714 = vmatpush1.bf16.msra.mxu0 %v670
    %715 = vmatprep.subr.bf16.mxu0 %v668
    %716 = vmatpush1.bf16.msra.mxu0 %v667
    %717 = vmatprep.subr.bf16.mxu0 %v665
    %718 = vmatpush1.bf16.msra.mxu0 %v664
    %719 = vmatprep.subr.bf16.mxu0 %v662
    %720 = vmatpush1.bf16.msra.mxu0 %v661
    %721 = vmatprep.subr.bf16.mxu0 %v659
    %722 = vmatpush1.bf16.msra.mxu0 %v658
    %723 = vmatprep.subr.bf16.mxu0 %v656
    %724 = vmatpush1.bf16.msra.mxu0 %v655
    %725 = vmatprep.subr.bf16.mxu0 %v653
    %726 = vmatpush1.bf16.msra.mxu0 %v652
    %727 = vmatprep.subr.bf16.mxu0 %v650
    %728 = vmatpush1.bf16.msra.mxu0 %v649
    %729 = vmatprep.subr.bf16.mxu0 0
    %730 = vmatpush2.bf16.msra.mxu0 0
    %731 = vmatprep.subr.bf16.mxu0 0
    %732 = vmatpush2.bf16.msra.mxu0 0
    %733 = vmatprep.subr.bf16.mxu0 0
    %734 = vmatpush2.bf16.msra.mxu0 0
    %735 = vmatprep.subr.bf16.mxu0 0
    %736 = vmatpush2.bf16.msra.mxu0 0
    %737 = vmatprep.subr.bf16.mxu0 0
    %738 = vmatpush2.bf16.msra.mxu0 0
    %739 = vmatprep.subr.bf16.mxu0 0
    %740 = vmatpush2.bf16.msra.mxu0 0
    %741 = vmatprep.subr.bf16.mxu0 0
    %742 = vmatpush2.bf16.msra.mxu0 0
    %743 = vmatprep.subr.bf16.mxu0 0
    %744 = vmatpush2.bf16.msra.mxu0 0
    %745 = vmatprep.mubr.bf16.mxu0 0
    %746 = vmatmul.mubr.bf16.gmra.mxu0 %v535
    %v747 = vpop.f32.mrf.mxu0
    %v748 = vadd.f32 %v701, %v747
    %v749 = vpop.f32.mrf.mxu0
    %v750 = vadd.f32 %v705, %v749
    %v751 = vpop.f32.mrf.mxu0
    %v752 = vpop.f32.mrf.mxu0
    %753 = vdwg.mxu0
    %754 = vmatprep.subr.bf16.mxu0 0
    %755 = vmatpush1.bf16.msra.mxu0 %v672
    %756 = vmatprep.subr.bf16.mxu0 0
    %757 = vmatpush1.bf16.msra.mxu0 %v669
    %758 = vmatprep.subr.bf16.mxu0 0
    %759 = vmatpush1.bf16.msra.mxu0 %v666
    %760 = vmatprep.subr.bf16.mxu0 0
    %761 = vmatpush1.bf16.msra.mxu0 %v663
    %762 = vmatprep.subr.bf16.mxu0 0
    %763 = vmatpush1.bf16.msra.mxu0 %v660
    %764 = vmatprep.subr.bf16.mxu0 0
    %765 = vmatpush1.bf16.msra.mxu0 %v657
    %766 = vmatprep.subr.bf16.mxu0 0
    %767 = vmatpush1.bf16.msra.mxu0 %v654
    %768 = vmatprep.subr.bf16.mxu0 0
    %769 = vmatpush1.bf16.msra.mxu0 %v651
    %770 = vmatprep.subr.bf16.mxu0 0
    %771 = vmatpush2.bf16.msra.mxu0 0
    %772 = vmatprep.subr.bf16.mxu0 0
    %773 = vmatpush2.bf16.msra.mxu0 0
    %774 = vmatprep.subr.bf16.mxu0 0
    %775 = vmatpush2.bf16.msra.mxu0 0
    %776 = vmatprep.subr.bf16.mxu0 0
    %777 = vmatpush2.bf16.msra.mxu0 0
    %778 = vmatprep.subr.bf16.mxu0 0
    %779 = vmatpush2.bf16.msra.mxu0 0
    %780 = vmatprep.subr.bf16.mxu0 0
    %781 = vmatpush2.bf16.msra.mxu0 0
    %782 = vmatprep.subr.bf16.mxu0 0
    %783 = vmatpush2.bf16.msra.mxu0 0
    %784 = vmatprep.subr.bf16.mxu0 0
    %785 = vmatpush2.bf16.msra.mxu0 0
    %786 = vmatprep.mubr.bf16.mxu0 0
    %787 = vmatmul.mubr.bf16.gmra.mxu0 %v535
    %v788 = vpop.f32.mrf.mxu0
    %v789 = vadd.f32 %v709, %v788
    %v790 = vpop.f32.mrf.mxu0
    %v791 = vpop.f32.mrf.mxu0
    %v792 = vpop.f32.mrf.mxu0
    %793 = vdwg.mxu0
    %v794 = vadd.f32 %v488, %v748
    %v795 = vxor.u32 %v794, 2147483648
    %v796 = vmul.f32 %v795, 1.442695
    %v797 = vpow.pop %v796
    %v798 = vadd.f32 %v797, 1.0
    %v799 = vrcp.pop %v798
    %v800 = vmul.f32 1.0, %v799
    %v801 = vadd.f32 %v490, %v750
    %v802 = vxor.u32 %v801, 2147483648
    %v803 = vmul.f32 %v802, 1.442695
    %v804 = vpow.pop %v803
    %v805 = vadd.f32 %v804, 1.0
    %v806 = vrcp.pop %v805
    %v807 = vmul.f32 1.0, %v806
    %v808 = vmul.f32 %v800, %v789
    %v809 = vadd.f32 %v529, %v808
    %v810 = vtanh.pop %v809
    %v811 = vsub.f32 1.0, %v807
    %v812 = vmul.f32 %v811, %v810
    %v813 = vmul.f32 %v807, %v534
    %v814 = vadd.f32 %v812, %v813
    %815 = vst [vmem:[#allocation11] sm:$0x1] %v814
    %v816 = vpack.c.bf16 %v814, %v814
    %v817 = vld [vmem:[#allocation7] sm:$0xff]
    %v818 = vld [vmem:[#allocation7 + $0x8] sm:$0xf]
    %v819 = vld [vmem:[#allocation7 + $0xc] sm:$0xff]
    %v820 = vld [vmem:[#allocation7 + $0x14] sm:$0xf]
    %v821 = vld [vmem:[#allocation7 + $0x18] sm:$0xff]
    %v822 = vld [vmem:[#allocation7 + $0x20] sm:$0xf]
    %v823 = vld [vmem:[#allocation7 + $0x24] sm:$0xff]
    %v824 = vld [vmem:[#allocation7 + $0x2c] sm:$0xf]
    %v825 = vld [vmem:[#allocation7 + $0x30] sm:$0xff]
    %v826 = vld [vmem:[#allocation7 + $0x38] sm:$0xf]
    %v827 = vld [vmem:[#allocation7 + $0x3c] sm:$0xff]
    %v828 = vld [vmem:[#allocation7 + $0x44] sm:$0xf]
    %v829 = vld [vmem:[#allocation7 + $0x48] sm:$0xff]
    %v830 = vld [vmem:[#allocation7 + $0x50] sm:$0xf]
    %v831 = vld [vmem:[#allocation7 + $0x54] sm:$0xff]
    %v832 = vld [vmem:[#allocation7 + $0x5c] sm:$0xf]
    %v833 = vld [vmem:[#allocation7 + $0x60] sm:$0xff]
    %v834 = vld [vmem:[#allocation7 + $0x68] sm:$0xf]
    %v835 = vld [vmem:[#allocation7 + $0x6c] sm:$0xff]
    %v836 = vld [vmem:[#allocation7 + $0x74] sm:$0xf]
    %v837 = vld [vmem:[#allocation7 + $0x78] sm:$0xff]
    %v838 = vld [vmem:[#allocation7 + $0x80] sm:$0xf]
    %v839 = vld [vmem:[#allocation7 + $0x84] sm:$0xff]
    %v840 = vld [vmem:[#allocation7 + $0x8c] sm:$0xf]
    %v841 = vld [vmem:[#allocation7 + $0x90] sm:$0xff]
    %v842 = vld [vmem:[#allocation7 + $0x98] sm:$0xf]
    %v843 = vld [vmem:[#allocation7 + $0x9c] sm:$0xff]
    %v844 = vld [vmem:[#allocation7 + $0xa4] sm:$0xf]
    %v845 = vld [vmem:[#allocation7 + $0xa8] sm:$0xff]
    %v846 = vld [vmem:[#allocation7 + $0xb0] sm:$0xf]
    %v847 = vld [vmem:[#allocation7 + $0xb4] sm:$0xff]
    %v848 = vld [vmem:[#allocation7 + $0xbc] sm:$0xf]
    %v849 = vld [vmem:[%s6] sm:$0x7]
    %v882 = vunpack.c.l.b16 %v817
    %v883 = vunpack.c.h.b16 %v817
    %v884 = vunpack.c.l.b16 %v818
    %v885 = vunpack.c.l.b16 %v819
    %v886 = vunpack.c.h.b16 %v819
    %v887 = vunpack.c.l.b16 %v820
    %v888 = vunpack.c.l.b16 %v821
    %v889 = vunpack.c.h.b16 %v821
    %v890 = vunpack.c.l.b16 %v822
    %v891 = vunpack.c.l.b16 %v823
    %v892 = vunpack.c.h.b16 %v823
    %v893 = vunpack.c.l.b16 %v824
    %v894 = vunpack.c.l.b16 %v825
    %v895 = vunpack.c.h.b16 %v825
    %v896 = vunpack.c.l.b16 %v826
    %v897 = vunpack.c.l.b16 %v827
    %v898 = vunpack.c.h.b16 %v827
    %v899 = vunpack.c.l.b16 %v828
    %v900 = vunpack.c.l.b16 %v829
    %v901 = vunpack.c.h.b16 %v829
    %v902 = vunpack.c.l.b16 %v830
    %v903 = vunpack.c.l.b16 %v831
    %v904 = vunpack.c.h.b16 %v831
    %v905 = vunpack.c.l.b16 %v832
    %v906 = vunpack.c.l.b16 %v833
    %v907 = vunpack.c.h.b16 %v833
    %v908 = vunpack.c.l.b16 %v834
    %v909 = vunpack.c.l.b16 %v835
    %v910 = vunpack.c.h.b16 %v835
    %v911 = vunpack.c.l.b16 %v836
    %v912 = vunpack.c.l.b16 %v837
    %v913 = vunpack.c.h.b16 %v837
    %v914 = vunpack.c.l.b16 %v838
    %v915 = vunpack.c.l.b16 %v839
    %v916 = vunpack.c.h.b16 %v839
    %v917 = vunpack.c.l.b16 %v840
    %v918 = vunpack.c.l.b16 %v841
    %v919 = vunpack.c.h.b16 %v841
    %v920 = vunpack.c.l.b16 %v842
    %v921 = vunpack.c.l.b16 %v843
    %v922 = vunpack.c.h.b16 %v843
    %v923 = vunpack.c.l.b16 %v844
    %v924 = vunpack.c.l.b16 %v845
    %v925 = vunpack.c.h.b16 %v845
    %v926 = vunpack.c.l.b16 %v846
    %v927 = vunpack.c.l.b16 %v847
    %v928 = vunpack.c.h.b16 %v847
    %v929 = vunpack.c.l.b16 %v848
    %v930 = vpack.c.b16 %v885, %v882
    %v931 = vpack.c.b16 %v886, %v883
    %v932 = vpack.c.b16 %v887, %v884
    %v933 = vpack.c.b16 %v891, %v888
    %v934 = vpack.c.b16 %v892, %v889
    %v935 = vpack.c.b16 %v893, %v890
    %v936 = vpack.c.b16 %v897, %v894
    %v937 = vpack.c.b16 %v898, %v895
    %v938 = vpack.c.b16 %v899, %v896
    %v939 = vpack.c.b16 %v903, %v900
    %v940 = vpack.c.b16 %v904, %v901
    %v941 = vpack.c.b16 %v905, %v902
    %v942 = vpack.c.b16 %v909, %v906
    %v943 = vpack.c.b16 %v910, %v907
    %v944 = vpack.c.b16 %v911, %v908
    %v945 = vpack.c.b16 %v915, %v912
    %v946 = vpack.c.b16 %v916, %v913
    %v947 = vpack.c.b16 %v917, %v914
    %v948 = vpack.c.b16 %v921, %v918
    %v949 = vpack.c.b16 %v922, %v919
    %v950 = vpack.c.b16 %v923, %v920
    %v951 = vpack.c.b16 %v927, %v924
    %v952 = vpack.c.b16 %v928, %v925
    %v953 = vpack.c.b16 %v929, %v926
    %v979 = vlaneseq
    %v980 = vshrl.u32 %v979, 7
    %v981 = vsub.s32 0, %v980
    %v982 = vrot.slane %v849, %v981
    %v983 = vlaneseq
    %v984 = vshrl.u32 %v983, 7
    %v985 = vsub.s32 1, %v984
    %v986 = vrot.slane %v849, %v985
    %v987 = vlaneseq
    %v988 = vshrl.u32 %v987, 7
    %v989 = vsub.s32 2, %v988
    %v990 = vrot.slane %v849, %v989
    %994 = vmatprep.subr.bf16.mxu0 %v952
    %995 = vmatpush1.bf16.msra.mxu0 %v951
    %996 = vmatprep.subr.bf16.mxu0 %v949
    %997 = vmatpush1.bf16.msra.mxu0 %v948
    %998 = vmatprep.subr.bf16.mxu0 %v946
    %999 = vmatpush1.bf16.msra.mxu0 %v945
    %1000 = vmatprep.subr.bf16.mxu0 %v943
    %1001 = vmatpush1.bf16.msra.mxu0 %v942
    %1002 = vmatprep.subr.bf16.mxu0 %v940
    %1003 = vmatpush1.bf16.msra.mxu0 %v939
    %1004 = vmatprep.subr.bf16.mxu0 %v937
    %1005 = vmatpush1.bf16.msra.mxu0 %v936
    %1006 = vmatprep.subr.bf16.mxu0 %v934
    %1007 = vmatpush1.bf16.msra.mxu0 %v933
    %1008 = vmatprep.subr.bf16.mxu0 %v931
    %1009 = vmatpush1.bf16.msra.mxu0 %v930
    %1010 = vmatprep.subr.bf16.mxu0 0
    %1011 = vmatpush2.bf16.msra.mxu0 0
    %1012 = vmatprep.subr.bf16.mxu0 0
    %1013 = vmatpush2.bf16.msra.mxu0 0
    %1014 = vmatprep.subr.bf16.mxu0 0
    %1015 = vmatpush2.bf16.msra.mxu0 0
    %1016 = vmatprep.subr.bf16.mxu0 0
    %1017 = vmatpush2.bf16.msra.mxu0 0
    %1018 = vmatprep.subr.bf16.mxu0 0
    %1019 = vmatpush2.bf16.msra.mxu0 0
    %1020 = vmatprep.subr.bf16.mxu0 0
    %1021 = vmatpush2.bf16.msra.mxu0 0
    %1022 = vmatprep.subr.bf16.mxu0 0
    %1023 = vmatpush2.bf16.msra.mxu0 0
    %1024 = vmatprep.subr.bf16.mxu0 0
    %1025 = vmatpush2.bf16.msra.mxu0 0
    %1026 = vmatprep.mubr.bf16.mxu0 0
    %1027 = vmatmul.mubr.bf16.gmra.mxu0 %v816
    %v1028 = vpop.f32.mrf.mxu0
    %v1029 = vadd.f32 %v982, %v1028
    %v1030 = vpop.f32.mrf.mxu0
    %v1031 = vadd.f32 %v986, %v1030
    %v1032 = vpop.f32.mrf.mxu0
    %v1033 = vpop.f32.mrf.mxu0
    %1034 = vdwg.mxu0
    %1035 = vmatprep.subr.bf16.mxu0 0
    %1036 = vmatpush1.bf16.msra.mxu0 %v953
    %1037 = vmatprep.subr.bf16.mxu0 0
    %1038 = vmatpush1.bf16.msra.mxu0 %v950
    %1039 = vmatprep.subr.bf16.mxu0 0
    %1040 = vmatpush1.bf16.msra.mxu0 %v947
    %1041 = vmatprep.subr.bf16.mxu0 0
    %1042 = vmatpush1.bf16.msra.mxu0 %v944
    %1043 = vmatprep.subr.bf16.mxu0 0
    %1044 = vmatpush1.bf16.msra.mxu0 %v941
    %1045 = vmatprep.subr.bf16.mxu0 0
    %1046 = vmatpush1.bf16.msra.mxu0 %v938
    %1047 = vmatprep.subr.bf16.mxu0 0
    %1048 = vmatpush1.bf16.msra.mxu0 %v935
    %1049 = vmatprep.subr.bf16.mxu0 0
    %1050 = vmatpush1.bf16.msra.mxu0 %v932
    %1051 = vmatprep.subr.bf16.mxu0 0
    %1052 = vmatpush2.bf16.msra.mxu0 0
    %1053 = vmatprep.subr.bf16.mxu0 0
    %1054 = vmatpush2.bf16.msra.mxu0 0
    %1055 = vmatprep.subr.bf16.mxu0 0
    %1056 = vmatpush2.bf16.msra.mxu0 0
    %1057 = vmatprep.subr.bf16.mxu0 0
    %1058 = vmatpush2.bf16.msra.mxu0 0
    %1059 = vmatprep.subr.bf16.mxu0 0
    %1060 = vmatpush2.bf16.msra.mxu0 0
    %1061 = vmatprep.subr.bf16.mxu0 0
    %1062 = vmatpush2.bf16.msra.mxu0 0
    %1063 = vmatprep.subr.bf16.mxu0 0
    %1064 = vmatpush2.bf16.msra.mxu0 0
    %1065 = vmatprep.subr.bf16.mxu0 0
    %1066 = vmatpush2.bf16.msra.mxu0 0
    %1067 = vmatprep.mubr.bf16.mxu0 0
    %1068 = vmatmul.mubr.bf16.gmra.mxu0 %v816
    %v1069 = vpop.f32.mrf.mxu0
    %v1070 = vadd.f32 %v990, %v1069
    %v1071 = vpop.f32.mrf.mxu0
    %v1072 = vpop.f32.mrf.mxu0
    %v1073 = vpop.f32.mrf.mxu0
    %1074 = vdwg.mxu0
    %v1076 = vrot.slane %v1029, 7
    %v1078 = vadd.f32 %v488, %v1076
    %v1079 = vxor.u32 %v1078, 2147483648
    %v1080 = vmul.f32 %v1079, 1.442695
    %v1081 = vpow.pop %v1080
    %v1082 = vadd.f32 %v1081, 1.0
    %v1083 = vrcp.pop %v1082
    %v1084 = vmul.f32 1.0, %v1083
    %v1086 = vrot.slane %v1031, 7
    %v1088 = vadd.f32 %v490, %v1086
    %v1089 = vxor.u32 %v1088, 2147483648
    %v1090 = vmul.f32 %v1089, 1.442695
    %v1091 = vpow.pop %v1090
    %v1092 = vadd.f32 %v1091, 1.0
    %v1093 = vrcp.pop %v1092
    %v1094 = vmul.f32 1.0, %v1093
    %v1096 = vrot.slane %v1070, 7
    %v1098 = vmul.f32 %v1084, %v1096
    %v1099 = vadd.f32 %v529, %v1098
    %v1100 = vtanh.pop %v1099
    %v1101 = vsub.f32 1.0, %v1094
    %v1102 = vmul.f32 %v1101, %v1100
    %v1104 = vrot.slane %v814, 7
    %v1106 = vmul.f32 %v1094, %v1104
    %v1107 = vadd.f32 %v1102, %v1106
    %1108 = vst [vmem:[#allocation11] sm:$0x2] %v1107
    %v1109 = vpack.c.bf16 %v1107, %v1107
    %v1110 = vld [vmem:[#allocation7] sm:$0xff]
    %v1111 = vld [vmem:[#allocation7 + $0x8] sm:$0xf]
    %v1112 = vld [vmem:[#allocation7 + $0xc] sm:$0xff]
    %v1113 = vld [vmem:[#allocation7 + $0x14] sm:$0xf]
    %v1114 = vld [vmem:[#allocation7 + $0x18] sm:$0xff]
    %v1115 = vld [vmem:[#allocation7 + $0x20] sm:$0xf]
    %v1116 = vld [vmem:[#allocation7 + $0x24] sm:$0xff]
    %v1117 = vld [vmem:[#allocation7 + $0x2c] sm:$0xf]
    %v1118 = vld [vmem:[#allocation7 + $0x30] sm:$0xff]
    %v1119 = vld [vmem:[#allocation7 + $0x38] sm:$0xf]
    %v1120 = vld [vmem:[#allocation7 + $0x3c] sm:$0xff]
    %v1121 = vld [vmem:[#allocation7 + $0x44] sm:$0xf]
    %v1122 = vld [vmem:[#allocation7 + $0x48] sm:$0xff]
    %v1123 = vld [vmem:[#allocation7 + $0x50] sm:$0xf]
    %v1124 = vld [vmem:[#allocation7 + $0x54] sm:$0xff]
    %v1125 = vld [vmem:[#allocation7 + $0x5c] sm:$0xf]
    %v1126 = vld [vmem:[#allocation7 + $0x60] sm:$0xff]
    %v1127 = vld [vmem:[#allocation7 + $0x68] sm:$0xf]
    %v1128 = vld [vmem:[#allocation7 + $0x6c] sm:$0xff]
    %v1129 = vld [vmem:[#allocation7 + $0x74] sm:$0xf]
    %v1130 = vld [vmem:[#allocation7 + $0x78] sm:$0xff]
    %v1131 = vld [vmem:[#allocation7 + $0x80] sm:$0xf]
    %v1132 = vld [vmem:[#allocation7 + $0x84] sm:$0xff]
    %v1133 = vld [vmem:[#allocation7 + $0x8c] sm:$0xf]
    %v1134 = vld [vmem:[#allocation7 + $0x90] sm:$0xff]
    %v1135 = vld [vmem:[#allocation7 + $0x98] sm:$0xf]
    %v1136 = vld [vmem:[#allocation7 + $0x9c] sm:$0xff]
    %v1137 = vld [vmem:[#allocation7 + $0xa4] sm:$0xf]
    %v1138 = vld [vmem:[#allocation7 + $0xa8] sm:$0xff]
    %v1139 = vld [vmem:[#allocation7 + $0xb0] sm:$0xf]
    %v1140 = vld [vmem:[#allocation7 + $0xb4] sm:$0xff]
    %v1141 = vld [vmem:[#allocation7 + $0xbc] sm:$0xf]
    %v1142 = vld [vmem:[%s6] sm:$0x7]
    %v1144 = vshrl.u32 %v1109, 16
    %v1179 = vunpack.c.l.b16 %v1110
    %v1180 = vunpack.c.h.b16 %v1110
    %v1181 = vunpack.c.l.b16 %v1111
    %v1182 = vunpack.c.l.b16 %v1112
    %v1183 = vunpack.c.h.b16 %v1112
    %v1184 = vunpack.c.l.b16 %v1113
    %v1185 = vunpack.c.l.b16 %v1114
    %v1186 = vunpack.c.h.b16 %v1114
    %v1187 = vunpack.c.l.b16 %v1115
    %v1188 = vunpack.c.l.b16 %v1116
    %v1189 = vunpack.c.h.b16 %v1116
    %v1190 = vunpack.c.l.b16 %v1117
    %v1191 = vunpack.c.l.b16 %v1118
    %v1192 = vunpack.c.h.b16 %v1118
    %v1193 = vunpack.c.l.b16 %v1119
    %v1194 = vunpack.c.l.b16 %v1120
    %v1195 = vunpack.c.h.b16 %v1120
    %v1196 = vunpack.c.l.b16 %v1121
    %v1197 = vunpack.c.l.b16 %v1122
    %v1198 = vunpack.c.h.b16 %v1122
    %v1199 = vunpack.c.l.b16 %v1123
    %v1200 = vunpack.c.l.b16 %v1124
    %v1201 = vunpack.c.h.b16 %v1124
    %v1202 = vunpack.c.l.b16 %v1125
    %v1203 = vunpack.c.l.b16 %v1126
    %v1204 = vunpack.c.h.b16 %v1126
    %v1205 = vunpack.c.l.b16 %v1127
    %v1206 = vunpack.c.l.b16 %v1128
    %v1207 = vunpack.c.h.b16 %v1128
    %v1208 = vunpack.c.l.b16 %v1129
    %v1209 = vunpack.c.l.b16 %v1130
    %v1210 = vunpack.c.h.b16 %v1130
    %v1211 = vunpack.c.l.b16 %v1131
    %v1212 = vunpack.c.l.b16 %v1132
    %v1213 = vunpack.c.h.b16 %v1132
    %v1214 = vunpack.c.l.b16 %v1133
    %v1215 = vunpack.c.l.b16 %v1134
    %v1216 = vunpack.c.h.b16 %v1134
    %v1217 = vunpack.c.l.b16 %v1135
    %v1218 = vunpack.c.l.b16 %v1136
    %v1219 = vunpack.c.h.b16 %v1136
    %v1220 = vunpack.c.l.b16 %v1137
    %v1221 = vunpack.c.l.b16 %v1138
    %v1222 = vunpack.c.h.b16 %v1138
    %v1223 = vunpack.c.l.b16 %v1139
    %v1224 = vunpack.c.l.b16 %v1140
    %v1225 = vunpack.c.h.b16 %v1140
    %v1226 = vunpack.c.l.b16 %v1141
    %v1227 = vpack.c.b16 %v1182, %v1179
    %v1228 = vpack.c.b16 %v1183, %v1180
    %v1229 = vpack.c.b16 %v1184, %v1181
    %v1230 = vpack.c.b16 %v1188, %v1185
    %v1231 = vpack.c.b16 %v1189, %v1186
    %v1232 = vpack.c.b16 %v1190, %v1187
    %v1233 = vpack.c.b16 %v1194, %v1191
    %v1234 = vpack.c.b16 %v1195, %v1192
    %v1235 = vpack.c.b16 %v1196, %v1193
    %v1236 = vpack.c.b16 %v1200, %v1197
    %v1237 = vpack.c.b16 %v1201, %v1198
    %v1238 = vpack.c.b16 %v1202, %v1199
    %v1239 = vpack.c.b16 %v1206, %v1203
    %v1240 = vpack.c.b16 %v1207, %v1204
    %v1241 = vpack.c.b16 %v1208, %v1205
    %v1242 = vpack.c.b16 %v1212, %v1209
    %v1243 = vpack.c.b16 %v1213, %v1210
    %v1244 = vpack.c.b16 %v1214, %v1211
    %v1245 = vpack.c.b16 %v1218, %v1215
    %v1246 = vpack.c.b16 %v1219, %v1216
    %v1247 = vpack.c.b16 %v1220, %v1217
    %v1248 = vpack.c.b16 %v1224, %v1221
    %v1249 = vpack.c.b16 %v1225, %v1222
    %v1250 = vpack.c.b16 %v1226, %v1223
    %v1276 = vlaneseq
    %v1277 = vshrl.u32 %v1276, 7
    %v1278 = vsub.s32 0, %v1277
    %v1279 = vrot.slane %v1142, %v1278
    %v1280 = vlaneseq
    %v1281 = vshrl.u32 %v1280, 7
    %v1282 = vsub.s32 1, %v1281
    %v1283 = vrot.slane %v1142, %v1282
    %v1284 = vlaneseq
    %v1285 = vshrl.u32 %v1284, 7
    %v1286 = vsub.s32 2, %v1285
    %v1287 = vrot.slane %v1142, %v1286
    %1291 = vmatprep.subr.bf16.mxu0 %v1249
    %1292 = vmatpush1.bf16.msra.mxu0 %v1248
    %1293 = vmatprep.subr.bf16.mxu0 %v1246
    %1294 = vmatpush1.bf16.msra.mxu0 %v1245
    %1295 = vmatprep.subr.bf16.mxu0 %v1243
    %1296 = vmatpush1.bf16.msra.mxu0 %v1242
    %1297 = vmatprep.subr.bf16.mxu0 %v1240
    %1298 = vmatpush1.bf16.msra.mxu0 %v1239
    %1299 = vmatprep.subr.bf16.mxu0 %v1237
    %1300 = vmatpush1.bf16.msra.mxu0 %v1236
    %1301 = vmatprep.subr.bf16.mxu0 %v1234
    %1302 = vmatpush1.bf16.msra.mxu0 %v1233
    %1303 = vmatprep.subr.bf16.mxu0 %v1231
    %1304 = vmatpush1.bf16.msra.mxu0 %v1230
    %1305 = vmatprep.subr.bf16.mxu0 %v1228
    %1306 = vmatpush1.bf16.msra.mxu0 %v1227
    %1307 = vmatprep.subr.bf16.mxu0 0
    %1308 = vmatpush2.bf16.msra.mxu0 0
    %1309 = vmatprep.subr.bf16.mxu0 0
    %1310 = vmatpush2.bf16.msra.mxu0 0
    %1311 = vmatprep.subr.bf16.mxu0 0
    %1312 = vmatpush2.bf16.msra.mxu0 0
    %1313 = vmatprep.subr.bf16.mxu0 0
    %1314 = vmatpush2.bf16.msra.mxu0 0
    %1315 = vmatprep.subr.bf16.mxu0 0
    %1316 = vmatpush2.bf16.msra.mxu0 0
    %1317 = vmatprep.subr.bf16.mxu0 0
    %1318 = vmatpush2.bf16.msra.mxu0 0
    %1319 = vmatprep.subr.bf16.mxu0 0
    %1320 = vmatpush2.bf16.msra.mxu0 0
    %1321 = vmatprep.subr.bf16.mxu0 0
    %1322 = vmatpush2.bf16.msra.mxu0 0
    %1323 = vmatprep.mubr.bf16.mxu0 0
    %1324 = vmatmul.mubr.bf16.gmra.mxu0 %v1144
    %v1325 = vpop.f32.mrf.mxu0
    %v1326 = vadd.f32 %v1279, %v1325
    %v1327 = vpop.f32.mrf.mxu0
    %v1328 = vadd.f32 %v1283, %v1327
    %v1329 = vpop.f32.mrf.mxu0
    %v1330 = vpop.f32.mrf.mxu0
    %1331 = vdwg.mxu0
    %1332 = vmatprep.subr.bf16.mxu0 0
    %1333 = vmatpush1.bf16.msra.mxu0 %v1250
    %1334 = vmatprep.subr.bf16.mxu0 0
    %1335 = vmatpush1.bf16.msra.mxu0 %v1247
    %1336 = vmatprep.subr.bf16.mxu0 0
    %1337 = vmatpush1.bf16.msra.mxu0 %v1244
    %1338 = vmatprep.subr.bf16.mxu0 0
    %1339 = vmatpush1.bf16.msra.mxu0 %v1241
    %1340 = vmatprep.subr.bf16.mxu0 0
    %1341 = vmatpush1.bf16.msra.mxu0 %v1238
    %1342 = vmatprep.subr.bf16.mxu0 0
    %1343 = vmatpush1.bf16.msra.mxu0 %v1235
    %1344 = vmatprep.subr.bf16.mxu0 0
    %1345 = vmatpush1.bf16.msra.mxu0 %v1232
    %1346 = vmatprep.subr.bf16.mxu0 0
    %1347 = vmatpush1.bf16.msra.mxu0 %v1229
    %1348 = vmatprep.subr.bf16.mxu0 0
    %1349 = vmatpush2.bf16.msra.mxu0 0
    %1350 = vmatprep.subr.bf16.mxu0 0
    %1351 = vmatpush2.bf16.msra.mxu0 0
    %1352 = vmatprep.subr.bf16.mxu0 0
    %1353 = vmatpush2.bf16.msra.mxu0 0
    %1354 = vmatprep.subr.bf16.mxu0 0
    %1355 = vmatpush2.bf16.msra.mxu0 0
    %1356 = vmatprep.subr.bf16.mxu0 0
    %1357 = vmatpush2.bf16.msra.mxu0 0
    %1358 = vmatprep.subr.bf16.mxu0 0
    %1359 = vmatpush2.bf16.msra.mxu0 0
    %1360 = vmatprep.subr.bf16.mxu0 0
    %1361 = vmatpush2.bf16.msra.mxu0 0
    %1362 = vmatprep.subr.bf16.mxu0 0
    %1363 = vmatpush2.bf16.msra.mxu0 0
    %1364 = vmatprep.mubr.bf16.mxu0 0
    %1365 = vmatmul.mubr.bf16.gmra.mxu0 %v1144
    %v1366 = vpop.f32.mrf.mxu0
    %v1367 = vadd.f32 %v1287, %v1366
    %v1368 = vpop.f32.mrf.mxu0
    %v1369 = vpop.f32.mrf.mxu0
    %v1370 = vpop.f32.mrf.mxu0
    %1371 = vdwg.mxu0
    %v1373 = vrot.slane %v1326, 6
    %v1375 = vadd.f32 %v488, %v1373
    %v1376 = vxor.u32 %v1375, 2147483648
    %v1377 = vmul.f32 %v1376, 1.442695
    %v1378 = vpow.pop %v1377
    %v1379 = vadd.f32 %v1378, 1.0
    %v1380 = vrcp.pop %v1379
    %v1381 = vmul.f32 1.0, %v1380
    %v1383 = vrot.slane %v1328, 6
    %v1385 = vadd.f32 %v490, %v1383
    %v1386 = vxor.u32 %v1385, 2147483648
    %v1387 = vmul.f32 %v1386, 1.442695
    %v1388 = vpow.pop %v1387
    %v1389 = vadd.f32 %v1388, 1.0
    %v1390 = vrcp.pop %v1389
    %v1391 = vmul.f32 1.0, %v1390
    %v1393 = vrot.slane %v1367, 6
    %v1395 = vmul.f32 %v1381, %v1393
    %v1396 = vadd.f32 %v529, %v1395
    %v1397 = vtanh.pop %v1396
    %v1398 = vsub.f32 1.0, %v1391
    %v1399 = vmul.f32 %v1398, %v1397
    %v1401 = vrot.slane %v1107, 7
    %v1403 = vmul.f32 %v1391, %v1401
    %v1404 = vadd.f32 %v1399, %v1403
    %1405 = vst [vmem:[#allocation11] sm:$0x4] %v1404
    %v1406 = vpack.c.bf16 %v1404, %v1404
    %v1407 = vld [vmem:[#allocation7] sm:$0xff]
    %v1408 = vld [vmem:[#allocation7 + $0x8] sm:$0xf]
    %v1409 = vld [vmem:[#allocation7 + $0xc] sm:$0xff]
    %v1410 = vld [vmem:[#allocation7 + $0x14] sm:$0xf]
    %v1411 = vld [vmem:[#allocation7 + $0x18] sm:$0xff]
    %v1412 = vld [vmem:[#allocation7 + $0x20] sm:$0xf]
    %v1413 = vld [vmem:[#allocation7 + $0x24] sm:$0xff]
    %v1414 = vld [vmem:[#allocation7 + $0x2c] sm:$0xf]
    %v1415 = vld [vmem:[#allocation7 + $0x30] sm:$0xff]
    %v1416 = vld [vmem:[#allocation7 + $0x38] sm:$0xf]
    %v1417 = vld [vmem:[#allocation7 + $0x3c] sm:$0xff]
    %v1418 = vld [vmem:[#allocation7 + $0x44] sm:$0xf]
    %v1419 = vld [vmem:[#allocation7 + $0x48] sm:$0xff]
    %v1420 = vld [vmem:[#allocation7 + $0x50] sm:$0xf]
    %v1421 = vld [vmem:[#allocation7 + $0x54] sm:$0xff]
    %v1422 = vld [vmem:[#allocation7 + $0x5c] sm:$0xf]
    %v1423 = vld [vmem:[#allocation7 + $0x60] sm:$0xff]
    %v1424 = vld [vmem:[#allocation7 + $0x68] sm:$0xf]
    %v1425 = vld [vmem:[#allocation7 + $0x6c] sm:$0xff]
    %v1426 = vld [vmem:[#allocation7 + $0x74] sm:$0xf]
    %v1427 = vld [vmem:[#allocation7 + $0x78] sm:$0xff]
    %v1428 = vld [vmem:[#allocation7 + $0x80] sm:$0xf]
    %v1429 = vld [vmem:[#allocation7 + $0x84] sm:$0xff]
    %v1430 = vld [vmem:[#allocation7 + $0x8c] sm:$0xf]
    %v1431 = vld [vmem:[#allocation7 + $0x90] sm:$0xff]
    %v1432 = vld [vmem:[#allocation7 + $0x98] sm:$0xf]
    %v1433 = vld [vmem:[#allocation7 + $0x9c] sm:$0xff]
    %v1434 = vld [vmem:[#allocation7 + $0xa4] sm:$0xf]
    %v1435 = vld [vmem:[#allocation7 + $0xa8] sm:$0xff]
    %v1436 = vld [vmem:[#allocation7 + $0xb0] sm:$0xf]
    %v1437 = vld [vmem:[#allocation7 + $0xb4] sm:$0xff]
    %v1438 = vld [vmem:[#allocation7 + $0xbc] sm:$0xf]
    %v1439 = vld [vmem:[%s6] sm:$0x7]
    %v1441 = vrot.slane %v1406, 1
    %v1475 = vunpack.c.l.b16 %v1407
    %v1476 = vunpack.c.h.b16 %v1407
    %v1477 = vunpack.c.l.b16 %v1408
    %v1478 = vunpack.c.l.b16 %v1409
    %v1479 = vunpack.c.h.b16 %v1409
    %v1480 = vunpack.c.l.b16 %v1410
    %v1481 = vunpack.c.l.b16 %v1411
    %v1482 = vunpack.c.h.b16 %v1411
    %v1483 = vunpack.c.l.b16 %v1412
    %v1484 = vunpack.c.l.b16 %v1413
    %v1485 = vunpack.c.h.b16 %v1413
    %v1486 = vunpack.c.l.b16 %v1414
    %v1487 = vunpack.c.l.b16 %v1415
    %v1488 = vunpack.c.h.b16 %v1415
    %v1489 = vunpack.c.l.b16 %v1416
    %v1490 = vunpack.c.l.b16 %v1417
    %v1491 = vunpack.c.h.b16 %v1417
    %v1492 = vunpack.c.l.b16 %v1418
    %v1493 = vunpack.c.l.b16 %v1419
    %v1494 = vunpack.c.h.b16 %v1419
    %v1495 = vunpack.c.l.b16 %v1420
    %v1496 = vunpack.c.l.b16 %v1421
    %v1497 = vunpack.c.h.b16 %v1421
    %v1498 = vunpack.c.l.b16 %v1422
    %v1499 = vunpack.c.l.b16 %v1423
    %v1500 = vunpack.c.h.b16 %v1423
    %v1501 = vunpack.c.l.b16 %v1424
    %v1502 = vunpack.c.l.b16 %v1425
    %v1503 = vunpack.c.h.b16 %v1425
    %v1504 = vunpack.c.l.b16 %v1426
    %v1505 = vunpack.c.l.b16 %v1427
    %v1506 = vunpack.c.h.b16 %v1427
    %v1507 = vunpack.c.l.b16 %v1428
    %v1508 = vunpack.c.l.b16 %v1429
    %v1509 = vunpack.c.h.b16 %v1429
    %v1510 = vunpack.c.l.b16 %v1430
    %v1511 = vunpack.c.l.b16 %v1431
    %v1512 = vunpack.c.h.b16 %v1431
    %v1513 = vunpack.c.l.b16 %v1432
    %v1514 = vunpack.c.l.b16 %v1433
    %v1515 = vunpack.c.h.b16 %v1433
    %v1516 = vunpack.c.l.b16 %v1434
    %v1517 = vunpack.c.l.b16 %v1435
    %v1518 = vunpack.c.h.b16 %v1435
    %v1519 = vunpack.c.l.b16 %v1436
    %v1520 = vunpack.c.l.b16 %v1437
    %v1521 = vunpack.c.h.b16 %v1437
    %v1522 = vunpack.c.l.b16 %v1438
    %v1523 = vpack.c.b16 %v1478, %v1475
    %v1524 = vpack.c.b16 %v1479, %v1476
    %v1525 = vpack.c.b16 %v1480, %v1477
    %v1526 = vpack.c.b16 %v1484, %v1481
    %v1527 = vpack.c.b16 %v1485, %v1482
    %v1528 = vpack.c.b16 %v1486, %v1483
    %v1529 = vpack.c.b16 %v1490, %v1487
    %v1530 = vpack.c.b16 %v1491, %v1488
    %v1531 = vpack.c.b16 %v1492, %v1489
    %v1532 = vpack.c.b16 %v1496, %v1493
    %v1533 = vpack.c.b16 %v1497, %v1494
    %v1534 = vpack.c.b16 %v1498, %v1495
    %v1535 = vpack.c.b16 %v1502, %v1499
    %v1536 = vpack.c.b16 %v1503, %v1500
    %v1537 = vpack.c.b16 %v1504, %v1501
    %v1538 = vpack.c.b16 %v1508, %v1505
    %v1539 = vpack.c.b16 %v1509, %v1506
    %v1540 = vpack.c.b16 %v1510, %v1507
    %v1541 = vpack.c.b16 %v1514, %v1511
    %v1542 = vpack.c.b16 %v1515, %v1512
    %v1543 = vpack.c.b16 %v1516, %v1513
    %v1544 = vpack.c.b16 %v1520, %v1517
    %v1545 = vpack.c.b16 %v1521, %v1518
    %v1546 = vpack.c.b16 %v1522, %v1519
    %v1572 = vlaneseq
    %v1573 = vshrl.u32 %v1572, 7
    %v1574 = vsub.s32 0, %v1573
    %v1575 = vrot.slane %v1439, %v1574
    %v1576 = vlaneseq
    %v1577 = vshrl.u32 %v1576, 7
    %v1578 = vsub.s32 1, %v1577
    %v1579 = vrot.slane %v1439, %v1578
    %v1580 = vlaneseq
    %v1581 = vshrl.u32 %v1580, 7
    %v1582 = vsub.s32 2, %v1581
    %v1583 = vrot.slane %v1439, %v1582
    %1587 = vmatprep.subr.bf16.mxu0 %v1545
    %1588 = vmatpush1.bf16.msra.mxu0 %v1544
    %1589 = vmatprep.subr.bf16.mxu0 %v1542
    %1590 = vmatpush1.bf16.msra.mxu0 %v1541
    %1591 = vmatprep.subr.bf16.mxu0 %v1539
    %1592 = vmatpush1.bf16.msra.mxu0 %v1538
    %1593 = vmatprep.subr.bf16.mxu0 %v1536
    %1594 = vmatpush1.bf16.msra.mxu0 %v1535
    %1595 = vmatprep.subr.bf16.mxu0 %v1533
    %1596 = vmatpush1.bf16.msra.mxu0 %v1532
    %1597 = vmatprep.subr.bf16.mxu0 %v1530
    %1598 = vmatpush1.bf16.msra.mxu0 %v1529
    %1599 = vmatprep.subr.bf16.mxu0 %v1527
    %1600 = vmatpush1.bf16.msra.mxu0 %v1526
    %1601 = vmatprep.subr.bf16.mxu0 %v1524
    %1602 = vmatpush1.bf16.msra.mxu0 %v1523
    %1603 = vmatprep.subr.bf16.mxu0 0
    %1604 = vmatpush2.bf16.msra.mxu0 0
    %1605 = vmatprep.subr.bf16.mxu0 0
    %1606 = vmatpush2.bf16.msra.mxu0 0
    %1607 = vmatprep.subr.bf16.mxu0 0
    %1608 = vmatpush2.bf16.msra.mxu0 0
    %1609 = vmatprep.subr.bf16.mxu0 0
    %1610 = vmatpush2.bf16.msra.mxu0 0
    %1611 = vmatprep.subr.bf16.mxu0 0
    %1612 = vmatpush2.bf16.msra.mxu0 0
    %1613 = vmatprep.subr.bf16.mxu0 0
    %1614 = vmatpush2.bf16.msra.mxu0 0
    %1615 = vmatprep.subr.bf16.mxu0 0
    %1616 = vmatpush2.bf16.msra.mxu0 0
    %1617 = vmatprep.subr.bf16.mxu0 0
    %1618 = vmatpush2.bf16.msra.mxu0 0
    %1619 = vmatprep.mubr.bf16.mxu0 0
    %1620 = vmatmul.mubr.bf16.gmra.mxu0 %v1441
    %v1621 = vpop.f32.mrf.mxu0
    %v1622 = vadd.f32 %v1575, %v1621
    %v1623 = vpop.f32.mrf.mxu0
    %v1624 = vadd.f32 %v1579, %v1623
    %v1625 = vpop.f32.mrf.mxu0
    %v1626 = vpop.f32.mrf.mxu0
    %1627 = vdwg.mxu0
    %1628 = vmatprep.subr.bf16.mxu0 0
    %1629 = vmatpush1.bf16.msra.mxu0 %v1546
    %1630 = vmatprep.subr.bf16.mxu0 0
    %1631 = vmatpush1.bf16.msra.mxu0 %v1543
    %1632 = vmatprep.subr.bf16.mxu0 0
    %1633 = vmatpush1.bf16.msra.mxu0 %v1540
    %1634 = vmatprep.subr.bf16.mxu0 0
    %1635 = vmatpush1.bf16.msra.mxu0 %v1537
    %1636 = vmatprep.subr.bf16.mxu0 0
    %1637 = vmatpush1.bf16.msra.mxu0 %v1534
    %1638 = vmatprep.subr.bf16.mxu0 0
    %1639 = vmatpush1.bf16.msra.mxu0 %v1531
    %1640 = vmatprep.subr.bf16.mxu0 0
    %1641 = vmatpush1.bf16.msra.mxu0 %v1528
    %1642 = vmatprep.subr.bf16.mxu0 0
    %1643 = vmatpush1.bf16.msra.mxu0 %v1525
    %1644 = vmatprep.subr.bf16.mxu0 0
    %1645 = vmatpush2.bf16.msra.mxu0 0
    %1646 = vmatprep.subr.bf16.mxu0 0
    %1647 = vmatpush2.bf16.msra.mxu0 0
    %1648 = vmatprep.subr.bf16.mxu0 0
    %1649 = vmatpush2.bf16.msra.mxu0 0
    %1650 = vmatprep.subr.bf16.mxu0 0
    %1651 = vmatpush2.bf16.msra.mxu0 0
    %1652 = vmatprep.subr.bf16.mxu0 0
    %1653 = vmatpush2.bf16.msra.mxu0 0
    %1654 = vmatprep.subr.bf16.mxu0 0
    %1655 = vmatpush2.bf16.msra.mxu0 0
    %1656 = vmatprep.subr.bf16.mxu0 0
    %1657 = vmatpush2.bf16.msra.mxu0 0
    %1658 = vmatprep.subr.bf16.mxu0 0
    %1659 = vmatpush2.bf16.msra.mxu0 0
    %1660 = vmatprep.mubr.bf16.mxu0 0
    %1661 = vmatmul.mubr.bf16.gmra.mxu0 %v1441
    %v1662 = vpop.f32.mrf.mxu0
    %v1663 = vadd.f32 %v1583, %v1662
    %v1664 = vpop.f32.mrf.mxu0
    %v1665 = vpop.f32.mrf.mxu0
    %v1666 = vpop.f32.mrf.mxu0
    %1667 = vdwg.mxu0
    %v1669 = vrot.slane %v1622, 5
    %v1671 = vadd.f32 %v488, %v1669
    %v1672 = vxor.u32 %v1671, 2147483648
    %v1673 = vmul.f32 %v1672, 1.442695
    %v1674 = vpow.pop %v1673
    %v1675 = vadd.f32 %v1674, 1.0
    %v1676 = vrcp.pop %v1675
    %v1677 = vmul.f32 1.0, %v1676
    %v1679 = vrot.slane %v1624, 5
    %v1681 = vadd.f32 %v490, %v1679
    %v1682 = vxor.u32 %v1681, 2147483648
    %v1683 = vmul.f32 %v1682, 1.442695
    %v1684 = vpow.pop %v1683
    %v1685 = vadd.f32 %v1684, 1.0
    %v1686 = vrcp.pop %v1685
    %v1687 = vmul.f32 1.0, %v1686
    %v1689 = vrot.slane %v1663, 5
    %v1691 = vmul.f32 %v1677, %v1689
    %v1692 = vadd.f32 %v529, %v1691
    %v1693 = vtanh.pop %v1692
    %v1694 = vsub.f32 1.0, %v1687
    %v1695 = vmul.f32 %v1694, %v1693
    %v1697 = vrot.slane %v1404, 7
    %v1699 = vmul.f32 %v1687, %v1697
    %v1700 = vadd.f32 %v1695, %v1699
    %1701 = vst [vmem:[#allocation11] sm:$0x8] %v1700
    %v1702 = vpack.c.bf16 %v1700, %v1700
    %v1703 = vld [vmem:[#allocation7] sm:$0xff]
    %v1704 = vld [vmem:[#allocation7 + $0x8] sm:$0xf]
    %v1705 = vld [vmem:[#allocation7 + $0xc] sm:$0xff]
    %v1706 = vld [vmem:[#allocation7 + $0x14] sm:$0xf]
    %v1707 = vld [vmem:[#allocation7 + $0x18] sm:$0xff]
    %v1708 = vld [vmem:[#allocation7 + $0x20] sm:$0xf]
    %v1709 = vld [vmem:[#allocation7 + $0x24] sm:$0xff]
    %v1710 = vld [vmem:[#allocation7 + $0x2c] sm:$0xf]
    %v1711 = vld [vmem:[#allocation7 + $0x30] sm:$0xff]
    %v1712 = vld [vmem:[#allocation7 + $0x38] sm:$0xf]
    %v1713 = vld [vmem:[#allocation7 + $0x3c] sm:$0xff]
    %v1714 = vld [vmem:[#allocation7 + $0x44] sm:$0xf]
    %v1715 = vld [vmem:[#allocation7 + $0x48] sm:$0xff]
    %v1716 = vld [vmem:[#allocation7 + $0x50] sm:$0xf]
    %v1717 = vld [vmem:[#allocation7 + $0x54] sm:$0xff]
    %v1718 = vld [vmem:[#allocation7 + $0x5c] sm:$0xf]
    %v1719 = vld [vmem:[#allocation7 + $0x60] sm:$0xff]
    %v1720 = vld [vmem:[#allocation7 + $0x68] sm:$0xf]
    %v1721 = vld [vmem:[#allocation7 + $0x6c] sm:$0xff]
    %v1722 = vld [vmem:[#allocation7 + $0x74] sm:$0xf]
    %v1723 = vld [vmem:[#allocation7 + $0x78] sm:$0xff]
    %v1724 = vld [vmem:[#allocation7 + $0x80] sm:$0xf]
    %v1725 = vld [vmem:[#allocation7 + $0x84] sm:$0xff]
    %v1726 = vld [vmem:[#allocation7 + $0x8c] sm:$0xf]
    %v1727 = vld [vmem:[#allocation7 + $0x90] sm:$0xff]
    %v1728 = vld [vmem:[#allocation7 + $0x98] sm:$0xf]
    %v1729 = vld [vmem:[#allocation7 + $0x9c] sm:$0xff]
    %v1730 = vld [vmem:[#allocation7 + $0xa4] sm:$0xf]
    %v1731 = vld [vmem:[#allocation7 + $0xa8] sm:$0xff]
    %v1732 = vld [vmem:[#allocation7 + $0xb0] sm:$0xf]
    %v1733 = vld [vmem:[#allocation7 + $0xb4] sm:$0xff]
    %v1734 = vld [vmem:[#allocation7 + $0xbc] sm:$0xf]
    %v1735 = vld [vmem:[%s6] sm:$0x7]
    %v1737 = vshrl.u32 %v1702, 16
    %v1739 = vrot.slane %v1737, 1
    %v1773 = vunpack.c.l.b16 %v1703
    %v1774 = vunpack.c.h.b16 %v1703
    %v1775 = vunpack.c.l.b16 %v1704
    %v1776 = vunpack.c.l.b16 %v1705
    %v1777 = vunpack.c.h.b16 %v1705
    %v1778 = vunpack.c.l.b16 %v1706
    %v1779 = vunpack.c.l.b16 %v1707
    %v1780 = vunpack.c.h.b16 %v1707
    %v1781 = vunpack.c.l.b16 %v1708
    %v1782 = vunpack.c.l.b16 %v1709
    %v1783 = vunpack.c.h.b16 %v1709
    %v1784 = vunpack.c.l.b16 %v1710
    %v1785 = vunpack.c.l.b16 %v1711
    %v1786 = vunpack.c.h.b16 %v1711
    %v1787 = vunpack.c.l.b16 %v1712
    %v1788 = vunpack.c.l.b16 %v1713
    %v1789 = vunpack.c.h.b16 %v1713
    %v1790 = vunpack.c.l.b16 %v1714
    %v1791 = vunpack.c.l.b16 %v1715
    %v1792 = vunpack.c.h.b16 %v1715
    %v1793 = vunpack.c.l.b16 %v1716
    %v1794 = vunpack.c.l.b16 %v1717
    %v1795 = vunpack.c.h.b16 %v1717
    %v1796 = vunpack.c.l.b16 %v1718
    %v1797 = vunpack.c.l.b16 %v1719
    %v1798 = vunpack.c.h.b16 %v1719
    %v1799 = vunpack.c.l.b16 %v1720
    %v1800 = vunpack.c.l.b16 %v1721
    %v1801 = vunpack.c.h.b16 %v1721
    %v1802 = vunpack.c.l.b16 %v1722
    %v1803 = vunpack.c.l.b16 %v1723
    %v1804 = vunpack.c.h.b16 %v1723
    %v1805 = vunpack.c.l.b16 %v1724
    %v1806 = vunpack.c.l.b16 %v1725
    %v1807 = vunpack.c.h.b16 %v1725
    %v1808 = vunpack.c.l.b16 %v1726
    %v1809 = vunpack.c.l.b16 %v1727
    %v1810 = vunpack.c.h.b16 %v1727
    %v1811 = vunpack.c.l.b16 %v1728
    %v1812 = vunpack.c.l.b16 %v1729
    %v1813 = vunpack.c.h.b16 %v1729
    %v1814 = vunpack.c.l.b16 %v1730
    %v1815 = vunpack.c.l.b16 %v1731
    %v1816 = vunpack.c.h.b16 %v1731
    %v1817 = vunpack.c.l.b16 %v1732
    %v1818 = vunpack.c.l.b16 %v1733
    %v1819 = vunpack.c.h.b16 %v1733
    %v1820 = vunpack.c.l.b16 %v1734
    %v1821 = vpack.c.b16 %v1776, %v1773
    %v1822 = vpack.c.b16 %v1777, %v1774
    %v1823 = vpack.c.b16 %v1778, %v1775
    %v1824 = vpack.c.b16 %v1782, %v1779
    %v1825 = vpack.c.b16 %v1783, %v1780
    %v1826 = vpack.c.b16 %v1784, %v1781
    %v1827 = vpack.c.b16 %v1788, %v1785
    %v1828 = vpack.c.b16 %v1789, %v1786
    %v1829 = vpack.c.b16 %v1790, %v1787
    %v1830 = vpack.c.b16 %v1794, %v1791
    %v1831 = vpack.c.b16 %v1795, %v1792
    %v1832 = vpack.c.b16 %v1796, %v1793
    %v1833 = vpack.c.b16 %v1800, %v1797
    %v1834 = vpack.c.b16 %v1801, %v1798
    %v1835 = vpack.c.b16 %v1802, %v1799
    %v1836 = vpack.c.b16 %v1806, %v1803
    %v1837 = vpack.c.b16 %v1807, %v1804
    %v1838 = vpack.c.b16 %v1808, %v1805
    %v1839 = vpack.c.b16 %v1812, %v1809
    %v1840 = vpack.c.b16 %v1813, %v1810
    %v1841 = vpack.c.b16 %v1814, %v1811
    %v1842 = vpack.c.b16 %v1818, %v1815
    %v1843 = vpack.c.b16 %v1819, %v1816
    %v1844 = vpack.c.b16 %v1820, %v1817
    %v1870 = vlaneseq
    %v1871 = vshrl.u32 %v1870, 7
    %v1872 = vsub.s32 0, %v1871
    %v1873 = vrot.slane %v1735, %v1872
    %v1874 = vlaneseq
    %v1875 = vshrl.u32 %v1874, 7
    %v1876 = vsub.s32 1, %v1875
    %v1877 = vrot.slane %v1735, %v1876
    %v1878 = vlaneseq
    %v1879 = vshrl.u32 %v1878, 7
    %v1880 = vsub.s32 2, %v1879
    %v1881 = vrot.slane %v1735, %v1880
    %1885 = vmatprep.subr.bf16.mxu0 %v1843
    %1886 = vmatpush1.bf16.msra.mxu0 %v1842
    %1887 = vmatprep.subr.bf16.mxu0 %v1840
    %1888 = vmatpush1.bf16.msra.mxu0 %v1839
    %1889 = vmatprep.subr.bf16.mxu0 %v1837
    %1890 = vmatpush1.bf16.msra.mxu0 %v1836
    %1891 = vmatprep.subr.bf16.mxu0 %v1834
    %1892 = vmatpush1.bf16.msra.mxu0 %v1833
    %1893 = vmatprep.subr.bf16.mxu0 %v1831
    %1894 = vmatpush1.bf16.msra.mxu0 %v1830
    %1895 = vmatprep.subr.bf16.mxu0 %v1828
    %1896 = vmatpush1.bf16.msra.mxu0 %v1827
    %1897 = vmatprep.subr.bf16.mxu0 %v1825
    %1898 = vmatpush1.bf16.msra.mxu0 %v1824
    %1899 = vmatprep.subr.bf16.mxu0 %v1822
    %1900 = vmatpush1.bf16.msra.mxu0 %v1821
    %1901 = vmatprep.subr.bf16.mxu0 0
    %1902 = vmatpush2.bf16.msra.mxu0 0
    %1903 = vmatprep.subr.bf16.mxu0 0
    %1904 = vmatpush2.bf16.msra.mxu0 0
    %1905 = vmatprep.subr.bf16.mxu0 0
    %1906 = vmatpush2.bf16.msra.mxu0 0
    %1907 = vmatprep.subr.bf16.mxu0 0
    %1908 = vmatpush2.bf16.msra.mxu0 0
    %1909 = vmatprep.subr.bf16.mxu0 0
    %1910 = vmatpush2.bf16.msra.mxu0 0
    %1911 = vmatprep.subr.bf16.mxu0 0
    %1912 = vmatpush2.bf16.msra.mxu0 0
    %1913 = vmatprep.subr.bf16.mxu0 0
    %1914 = vmatpush2.bf16.msra.mxu0 0
    %1915 = vmatprep.subr.bf16.mxu0 0
    %1916 = vmatpush2.bf16.msra.mxu0 0
    %1917 = vmatprep.mubr.bf16.mxu0 0
    %1918 = vmatmul.mubr.bf16.gmra.mxu0 %v1739
    %v1919 = vpop.f32.mrf.mxu0
    %v1920 = vadd.f32 %v1873, %v1919
    %v1921 = vpop.f32.mrf.mxu0
    %v1922 = vadd.f32 %v1877, %v1921
    %v1923 = vpop.f32.mrf.mxu0
    %v1924 = vpop.f32.mrf.mxu0
    %1925 = vdwg.mxu0
    %1926 = vmatprep.subr.bf16.mxu0 0
    %1927 = vmatpush1.bf16.msra.mxu0 %v1844
    %1928 = vmatprep.subr.bf16.mxu0 0
    %1929 = vmatpush1.bf16.msra.mxu0 %v1841
    %1930 = vmatprep.subr.bf16.mxu0 0
    %1931 = vmatpush1.bf16.msra.mxu0 %v1838
    %1932 = vmatprep.subr.bf16.mxu0 0
    %1933 = vmatpush1.bf16.msra.mxu0 %v1835
    %1934 = vmatprep.subr.bf16.mxu0 0
    %1935 = vmatpush1.bf16.msra.mxu0 %v1832
    %1936 = vmatprep.subr.bf16.mxu0 0
    %1937 = vmatpush1.bf16.msra.mxu0 %v1829
    %1938 = vmatprep.subr.bf16.mxu0 0
    %1939 = vmatpush1.bf16.msra.mxu0 %v1826
    %1940 = vmatprep.subr.bf16.mxu0 0
    %1941 = vmatpush1.bf16.msra.mxu0 %v1823
    %1942 = vmatprep.subr.bf16.mxu0 0
    %1943 = vmatpush2.bf16.msra.mxu0 0
    %1944 = vmatprep.subr.bf16.mxu0 0
    %1945 = vmatpush2.bf16.msra.mxu0 0
    %1946 = vmatprep.subr.bf16.mxu0 0
    %1947 = vmatpush2.bf16.msra.mxu0 0
    %1948 = vmatprep.subr.bf16.mxu0 0
    %1949 = vmatpush2.bf16.msra.mxu0 0
    %1950 = vmatprep.subr.bf16.mxu0 0
    %1951 = vmatpush2.bf16.msra.mxu0 0
    %1952 = vmatprep.subr.bf16.mxu0 0
    %1953 = vmatpush2.bf16.msra.mxu0 0
    %1954 = vmatprep.subr.bf16.mxu0 0
    %1955 = vmatpush2.bf16.msra.mxu0 0
    %1956 = vmatprep.subr.bf16.mxu0 0
    %1957 = vmatpush2.bf16.msra.mxu0 0
    %1958 = vmatprep.mubr.bf16.mxu0 0
    %1959 = vmatmul.mubr.bf16.gmra.mxu0 %v1739
    %v1960 = vpop.f32.mrf.mxu0
    %v1961 = vadd.f32 %v1881, %v1960
    %v1962 = vpop.f32.mrf.mxu0
    %v1963 = vpop.f32.mrf.mxu0
    %v1964 = vpop.f32.mrf.mxu0
    %1965 = vdwg.mxu0
    %v1967 = vrot.slane %v1920, 4
    %v1969 = vadd.f32 %v488, %v1967
    %v1970 = vxor.u32 %v1969, 2147483648
    %v1971 = vmul.f32 %v1970, 1.442695
    %v1972 = vpow.pop %v1971
    %v1973 = vadd.f32 %v1972, 1.0
    %v1974 = vrcp.pop %v1973
    %v1975 = vmul.f32 1.0, %v1974
    %v1977 = vrot.slane %v1922, 4
    %v1979 = vadd.f32 %v490, %v1977
    %v1980 = vxor.u32 %v1979, 2147483648
    %v1981 = vmul.f32 %v1980, 1.442695
    %v1982 = vpow.pop %v1981
    %v1983 = vadd.f32 %v1982, 1.0
    %v1984 = vrcp.pop %v1983
    %v1985 = vmul.f32 1.0, %v1984
    %v1987 = vrot.slane %v1961, 4
    %v1989 = vmul.f32 %v1975, %v1987
    %v1990 = vadd.f32 %v529, %v1989
    %v1991 = vtanh.pop %v1990
    %v1992 = vsub.f32 1.0, %v1985
    %v1993 = vmul.f32 %v1992, %v1991
    %v1995 = vrot.slane %v1700, 7
    %v1997 = vmul.f32 %v1985, %v1995
    %v1998 = vadd.f32 %v1993, %v1997
    %1999 = vst [vmem:[#allocation11] sm:$0x10] %v1998
    %v2000 = vpack.c.bf16 %v1998, %v1998
    %v2001 = vld [vmem:[#allocation7] sm:$0xff]
    %v2002 = vld [vmem:[#allocation7 + $0x8] sm:$0xf]
    %v2003 = vld [vmem:[#allocation7 + $0xc] sm:$0xff]
    %v2004 = vld [vmem:[#allocation7 + $0x14] sm:$0xf]
    %v2005 = vld [vmem:[#allocation7 + $0x18] sm:$0xff]
    %v2006 = vld [vmem:[#allocation7 + $0x20] sm:$0xf]
    %v2007 = vld [vmem:[#allocation7 + $0x24] sm:$0xff]
    %v2008 = vld [vmem:[#allocation7 + $0x2c] sm:$0xf]
    %v2009 = vld [vmem:[#allocation7 + $0x30] sm:$0xff]
    %v2010 = vld [vmem:[#allocation7 + $0x38] sm:$0xf]
    %v2011 = vld [vmem:[#allocation7 + $0x3c] sm:$0xff]
    %v2012 = vld [vmem:[#allocation7 + $0x44] sm:$0xf]
    %v2013 = vld [vmem:[#allocation7 + $0x48] sm:$0xff]
    %v2014 = vld [vmem:[#allocation7 + $0x50] sm:$0xf]
    %v2015 = vld [vmem:[#allocation7 + $0x54] sm:$0xff]
    %v2016 = vld [vmem:[#allocation7 + $0x5c] sm:$0xf]
    %v2017 = vld [vmem:[#allocation7 + $0x60] sm:$0xff]
    %v2018 = vld [vmem:[#allocation7 + $0x68] sm:$0xf]
    %v2019 = vld [vmem:[#allocation7 + $0x6c] sm:$0xff]
    %v2020 = vld [vmem:[#allocation7 + $0x74] sm:$0xf]
    %v2021 = vld [vmem:[#allocation7 + $0x78] sm:$0xff]
    %v2022 = vld [vmem:[#allocation7 + $0x80] sm:$0xf]
    %v2023 = vld [vmem:[#allocation7 + $0x84] sm:$0xff]
    %v2024 = vld [vmem:[#allocation7 + $0x8c] sm:$0xf]
    %v2025 = vld [vmem:[#allocation7 + $0x90] sm:$0xff]
    %v2026 = vld [vmem:[#allocation7 + $0x98] sm:$0xf]
    %v2027 = vld [vmem:[#allocation7 + $0x9c] sm:$0xff]
    %v2028 = vld [vmem:[#allocation7 + $0xa4] sm:$0xf]
    %v2029 = vld [vmem:[#allocation7 + $0xa8] sm:$0xff]
    %v2030 = vld [vmem:[#allocation7 + $0xb0] sm:$0xf]
    %v2031 = vld [vmem:[#allocation7 + $0xb4] sm:$0xff]
    %v2032 = vld [vmem:[#allocation7 + $0xbc] sm:$0xf]
    %v2033 = vld [vmem:[%s6] sm:$0x7]
    %v2035 = vrot.slane %v2000, 2
    %v2069 = vunpack.c.l.b16 %v2001
    %v2070 = vunpack.c.h.b16 %v2001
    %v2071 = vunpack.c.l.b16 %v2002
    %v2072 = vunpack.c.l.b16 %v2003
    %v2073 = vunpack.c.h.b16 %v2003
    %v2074 = vunpack.c.l.b16 %v2004
    %v2075 = vunpack.c.l.b16 %v2005
    %v2076 = vunpack.c.h.b16 %v2005
    %v2077 = vunpack.c.l.b16 %v2006
    %v2078 = vunpack.c.l.b16 %v2007
    %v2079 = vunpack.c.h.b16 %v2007
    %v2080 = vunpack.c.l.b16 %v2008
    %v2081 = vunpack.c.l.b16 %v2009
    %v2082 = vunpack.c.h.b16 %v2009
    %v2083 = vunpack.c.l.b16 %v2010
    %v2084 = vunpack.c.l.b16 %v2011
    %v2085 = vunpack.c.h.b16 %v2011
    %v2086 = vunpack.c.l.b16 %v2012
    %v2087 = vunpack.c.l.b16 %v2013
    %v2088 = vunpack.c.h.b16 %v2013
    %v2089 = vunpack.c.l.b16 %v2014
    %v2090 = vunpack.c.l.b16 %v2015
    %v2091 = vunpack.c.h.b16 %v2015
    %v2092 = vunpack.c.l.b16 %v2016
    %v2093 = vunpack.c.l.b16 %v2017
    %v2094 = vunpack.c.h.b16 %v2017
    %v2095 = vunpack.c.l.b16 %v2018
    %v2096 = vunpack.c.l.b16 %v2019
    %v2097 = vunpack.c.h.b16 %v2019
    %v2098 = vunpack.c.l.b16 %v2020
    %v2099 = vunpack.c.l.b16 %v2021
    %v2100 = vunpack.c.h.b16 %v2021
    %v2101 = vunpack.c.l.b16 %v2022
    %v2102 = vunpack.c.l.b16 %v2023
    %v2103 = vunpack.c.h.b16 %v2023
    %v2104 = vunpack.c.l.b16 %v2024
    %v2105 = vunpack.c.l.b16 %v2025
    %v2106 = vunpack.c.h.b16 %v2025
    %v2107 = vunpack.c.l.b16 %v2026
    %v2108 = vunpack.c.l.b16 %v2027
    %v2109 = vunpack.c.h.b16 %v2027
    %v2110 = vunpack.c.l.b16 %v2028
    %v2111 = vunpack.c.l.b16 %v2029
    %v2112 = vunpack.c.h.b16 %v2029
    %v2113 = vunpack.c.l.b16 %v2030
    %v2114 = vunpack.c.l.b16 %v2031
    %v2115 = vunpack.c.h.b16 %v2031
    %v2116 = vunpack.c.l.b16 %v2032
    %v2117 = vpack.c.b16 %v2072, %v2069
    %v2118 = vpack.c.b16 %v2073, %v2070
    %v2119 = vpack.c.b16 %v2074, %v2071
    %v2120 = vpack.c.b16 %v2078, %v2075
    %v2121 = vpack.c.b16 %v2079, %v2076
    %v2122 = vpack.c.b16 %v2080, %v2077
    %v2123 = vpack.c.b16 %v2084, %v2081
    %v2124 = vpack.c.b16 %v2085, %v2082
    %v2125 = vpack.c.b16 %v2086, %v2083
    %v2126 = vpack.c.b16 %v2090, %v2087
    %v2127 = vpack.c.b16 %v2091, %v2088
    %v2128 = vpack.c.b16 %v2092, %v2089
    %v2129 = vpack.c.b16 %v2096, %v2093
    %v2130 = vpack.c.b16 %v2097, %v2094
    %v2131 = vpack.c.b16 %v2098, %v2095
    %v2132 = vpack.c.b16 %v2102, %v2099
    %v2133 = vpack.c.b16 %v2103, %v2100
    %v2134 = vpack.c.b16 %v2104, %v2101
    %v2135 = vpack.c.b16 %v2108, %v2105
    %v2136 = vpack.c.b16 %v2109, %v2106
    %v2137 = vpack.c.b16 %v2110, %v2107
    %v2138 = vpack.c.b16 %v2114, %v2111
    %v2139 = vpack.c.b16 %v2115, %v2112
    %v2140 = vpack.c.b16 %v2116, %v2113
    %v2166 = vlaneseq
    %v2167 = vshrl.u32 %v2166, 7
    %v2168 = vsub.s32 0, %v2167
    %v2169 = vrot.slane %v2033, %v2168
    %v2170 = vlaneseq
    %v2171 = vshrl.u32 %v2170, 7
    %v2172 = vsub.s32 1, %v2171
    %v2173 = vrot.slane %v2033, %v2172
    %v2174 = vlaneseq
    %v2175 = vshrl.u32 %v2174, 7
    %v2176 = vsub.s32 2, %v2175
    %v2177 = vrot.slane %v2033, %v2176
    %2181 = vmatprep.subr.bf16.mxu0 %v2139
    %2182 = vmatpush1.bf16.msra.mxu0 %v2138
    %2183 = vmatprep.subr.bf16.mxu0 %v2136
    %2184 = vmatpush1.bf16.msra.mxu0 %v2135
    %2185 = vmatprep.subr.bf16.mxu0 %v2133
    %2186 = vmatpush1.bf16.msra.mxu0 %v2132
    %2187 = vmatprep.subr.bf16.mxu0 %v2130
    %2188 = vmatpush1.bf16.msra.mxu0 %v2129
    %2189 = vmatprep.subr.bf16.mxu0 %v2127
    %2190 = vmatpush1.bf16.msra.mxu0 %v2126
    %2191 = vmatprep.subr.bf16.mxu0 %v2124
    %2192 = vmatpush1.bf16.msra.mxu0 %v2123
    %2193 = vmatprep.subr.bf16.mxu0 %v2121
    %2194 = vmatpush1.bf16.msra.mxu0 %v2120
    %2195 = vmatprep.subr.bf16.mxu0 %v2118
    %2196 = vmatpush1.bf16.msra.mxu0 %v2117
    %2197 = vmatprep.subr.bf16.mxu0 0
    %2198 = vmatpush2.bf16.msra.mxu0 0
    %2199 = vmatprep.subr.bf16.mxu0 0
    %2200 = vmatpush2.bf16.msra.mxu0 0
    %2201 = vmatprep.subr.bf16.mxu0 0
    %2202 = vmatpush2.bf16.msra.mxu0 0
    %2203 = vmatprep.subr.bf16.mxu0 0
    %2204 = vmatpush2.bf16.msra.mxu0 0
    %2205 = vmatprep.subr.bf16.mxu0 0
    %2206 = vmatpush2.bf16.msra.mxu0 0
    %2207 = vmatprep.subr.bf16.mxu0 0
    %2208 = vmatpush2.bf16.msra.mxu0 0
    %2209 = vmatprep.subr.bf16.mxu0 0
    %2210 = vmatpush2.bf16.msra.mxu0 0
    %2211 = vmatprep.subr.bf16.mxu0 0
    %2212 = vmatpush2.bf16.msra.mxu0 0
    %2213 = vmatprep.mubr.bf16.mxu0 0
    %2214 = vmatmul.mubr.bf16.gmra.mxu0 %v2035
    %v2215 = vpop.f32.mrf.mxu0
    %v2216 = vadd.f32 %v2169, %v2215
    %v2217 = vpop.f32.mrf.mxu0
    %v2218 = vadd.f32 %v2173, %v2217
    %v2219 = vpop.f32.mrf.mxu0
    %v2220 = vpop.f32.mrf.mxu0
    %2221 = vdwg.mxu0
    %2222 = vmatprep.subr.bf16.mxu0 0
    %2223 = vmatpush1.bf16.msra.mxu0 %v2140
    %2224 = vmatprep.subr.bf16.mxu0 0
    %2225 = vmatpush1.bf16.msra.mxu0 %v2137
    %2226 = vmatprep.subr.bf16.mxu0 0
    %2227 = vmatpush1.bf16.msra.mxu0 %v2134
    %2228 = vmatprep.subr.bf16.mxu0 0
    %2229 = vmatpush1.bf16.msra.mxu0 %v2131
    %2230 = vmatprep.subr.bf16.mxu0 0
    %2231 = vmatpush1.bf16.msra.mxu0 %v2128
    %2232 = vmatprep.subr.bf16.mxu0 0
    %2233 = vmatpush1.bf16.msra.mxu0 %v2125
    %2234 = vmatprep.subr.bf16.mxu0 0
    %2235 = vmatpush1.bf16.msra.mxu0 %v2122
    %2236 = vmatprep.subr.bf16.mxu0 0
    %2237 = vmatpush1.bf16.msra.mxu0 %v2119
    %2238 = vmatprep.subr.bf16.mxu0 0
    %2239 = vmatpush2.bf16.msra.mxu0 0
    %2240 = vmatprep.subr.bf16.mxu0 0
    %2241 = vmatpush2.bf16.msra.mxu0 0
    %2242 = vmatprep.subr.bf16.mxu0 0
    %2243 = vmatpush2.bf16.msra.mxu0 0
    %2244 = vmatprep.subr.bf16.mxu0 0
    %2245 = vmatpush2.bf16.msra.mxu0 0
    %2246 = vmatprep.subr.bf16.mxu0 0
    %2247 = vmatpush2.bf16.msra.mxu0 0
    %2248 = vmatprep.subr.bf16.mxu0 0
    %2249 = vmatpush2.bf16.msra.mxu0 0
    %2250 = vmatprep.subr.bf16.mxu0 0
    %2251 = vmatpush2.bf16.msra.mxu0 0
    %2252 = vmatprep.subr.bf16.mxu0 0
    %2253 = vmatpush2.bf16.msra.mxu0 0
    %2254 = vmatprep.mubr.bf16.mxu0 0
    %2255 = vmatmul.mubr.bf16.gmra.mxu0 %v2035
    %v2256 = vpop.f32.mrf.mxu0
    %v2257 = vadd.f32 %v2177, %v2256
    %v2258 = vpop.f32.mrf.mxu0
    %v2259 = vpop.f32.mrf.mxu0
    %v2260 = vpop.f32.mrf.mxu0
    %2261 = vdwg.mxu0
    %v2263 = vrot.slane %v2216, 3
    %v2265 = vadd.f32 %v488, %v2263
    %v2266 = vxor.u32 %v2265, 2147483648
    %v2267 = vmul.f32 %v2266, 1.442695
    %v2268 = vpow.pop %v2267
    %v2269 = vadd.f32 %v2268, 1.0
    %v2270 = vrcp.pop %v2269
    %v2271 = vmul.f32 1.0, %v2270
    %v2273 = vrot.slane %v2218, 3
    %v2275 = vadd.f32 %v490, %v2273
    %v2276 = vxor.u32 %v2275, 2147483648
    %v2277 = vmul.f32 %v2276, 1.442695
    %v2278 = vpow.pop %v2277
    %v2279 = vadd.f32 %v2278, 1.0
    %v2280 = vrcp.pop %v2279
    %v2281 = vmul.f32 1.0, %v2280
    %v2283 = vrot.slane %v2257, 3
    %v2285 = vmul.f32 %v2271, %v2283
    %v2286 = vadd.f32 %v529, %v2285
    %v2287 = vtanh.pop %v2286
    %v2288 = vsub.f32 1.0, %v2281
    %v2289 = vmul.f32 %v2288, %v2287
    %v2291 = vrot.slane %v1998, 7
    %v2293 = vmul.f32 %v2281, %v2291
    %v2294 = vadd.f32 %v2289, %v2293
    %2295 = vst [vmem:[#allocation11] sm:$0x20] %v2294
    %v2296 = vpack.c.bf16 %v2294, %v2294
    %v2297 = vld [vmem:[#allocation7] sm:$0xff]
    %v2298 = vld [vmem:[#allocation7 + $0x8] sm:$0xf]
    %v2299 = vld [vmem:[#allocation7 + $0xc] sm:$0xff]
    %v2300 = vld [vmem:[#allocation7 + $0x14] sm:$0xf]
    %v2301 = vld [vmem:[#allocation7 + $0x18] sm:$0xff]
    %v2302 = vld [vmem:[#allocation7 + $0x20] sm:$0xf]
    %v2303 = vld [vmem:[#allocation7 + $0x24] sm:$0xff]
    %v2304 = vld [vmem:[#allocation7 + $0x2c] sm:$0xf]
    %v2305 = vld [vmem:[#allocation7 + $0x30] sm:$0xff]
    %v2306 = vld [vmem:[#allocation7 + $0x38] sm:$0xf]
    %v2307 = vld [vmem:[#allocation7 + $0x3c] sm:$0xff]
    %v2308 = vld [vmem:[#allocation7 + $0x44] sm:$0xf]
    %v2309 = vld [vmem:[#allocation7 + $0x48] sm:$0xff]
    %v2310 = vld [vmem:[#allocation7 + $0x50] sm:$0xf]
    %v2311 = vld [vmem:[#allocation7 + $0x54] sm:$0xff]
    %v2312 = vld [vmem:[#allocation7 + $0x5c] sm:$0xf]
    %v2313 = vld [vmem:[#allocation7 + $0x60] sm:$0xff]
    %v2314 = vld [vmem:[#allocation7 + $0x68] sm:$0xf]
    %v2315 = vld [vmem:[#allocation7 + $0x6c] sm:$0xff]
    %v2316 = vld [vmem:[#allocation7 + $0x74] sm:$0xf]
    %v2317 = vld [vmem:[#allocation7 + $0x78] sm:$0xff]
    %v2318 = vld [vmem:[#allocation7 + $0x80] sm:$0xf]
    %v2319 = vld [vmem:[#allocation7 + $0x84] sm:$0xff]
    %v2320 = vld [vmem:[#allocation7 + $0x8c] sm:$0xf]
    %v2321 = vld [vmem:[#allocation7 + $0x90] sm:$0xff]
    %v2322 = vld [vmem:[#allocation7 + $0x98] sm:$0xf]
    %v2323 = vld [vmem:[#allocation7 + $0x9c] sm:$0xff]
    %v2324 = vld [vmem:[#allocation7 + $0xa4] sm:$0xf]
    %v2325 = vld [vmem:[#allocation7 + $0xa8] sm:$0xff]
    %v2326 = vld [vmem:[#allocation7 + $0xb0] sm:$0xf]
    %v2327 = vld [vmem:[#allocation7 + $0xb4] sm:$0xff]
    %v2328 = vld [vmem:[#allocation7 + $0xbc] sm:$0xf]
    %v2329 = vld [vmem:[%s6] sm:$0x7]
    %v2331 = vshrl.u32 %v2296, 16
    %v2333 = vrot.slane %v2331, 2
    %v2367 = vunpack.c.l.b16 %v2297
    %v2368 = vunpack.c.h.b16 %v2297
    %v2369 = vunpack.c.l.b16 %v2298
    %v2370 = vunpack.c.l.b16 %v2299
    %v2371 = vunpack.c.h.b16 %v2299
    %v2372 = vunpack.c.l.b16 %v2300
    %v2373 = vunpack.c.l.b16 %v2301
    %v2374 = vunpack.c.h.b16 %v2301
    %v2375 = vunpack.c.l.b16 %v2302
    %v2376 = vunpack.c.l.b16 %v2303
    %v2377 = vunpack.c.h.b16 %v2303
    %v2378 = vunpack.c.l.b16 %v2304
    %v2379 = vunpack.c.l.b16 %v2305
    %v2380 = vunpack.c.h.b16 %v2305
    %v2381 = vunpack.c.l.b16 %v2306
    %v2382 = vunpack.c.l.b16 %v2307
    %v2383 = vunpack.c.h.b16 %v2307
    %v2384 = vunpack.c.l.b16 %v2308
    %v2385 = vunpack.c.l.b16 %v2309
    %v2386 = vunpack.c.h.b16 %v2309
    %v2387 = vunpack.c.l.b16 %v2310
    %v2388 = vunpack.c.l.b16 %v2311
    %v2389 = vunpack.c.h.b16 %v2311
    %v2390 = vunpack.c.l.b16 %v2312
    %v2391 = vunpack.c.l.b16 %v2313
    %v2392 = vunpack.c.h.b16 %v2313
    %v2393 = vunpack.c.l.b16 %v2314
    %v2394 = vunpack.c.l.b16 %v2315
    %v2395 = vunpack.c.h.b16 %v2315
    %v2396 = vunpack.c.l.b16 %v2316
    %v2397 = vunpack.c.l.b16 %v2317
    %v2398 = vunpack.c.h.b16 %v2317
    %v2399 = vunpack.c.l.b16 %v2318
    %v2400 = vunpack.c.l.b16 %v2319
    %v2401 = vunpack.c.h.b16 %v2319
    %v2402 = vunpack.c.l.b16 %v2320
    %v2403 = vunpack.c.l.b16 %v2321
    %v2404 = vunpack.c.h.b16 %v2321
    %v2405 = vunpack.c.l.b16 %v2322
    %v2406 = vunpack.c.l.b16 %v2323
    %v2407 = vunpack.c.h.b16 %v2323
    %v2408 = vunpack.c.l.b16 %v2324
    %v2409 = vunpack.c.l.b16 %v2325
    %v2410 = vunpack.c.h.b16 %v2325
    %v2411 = vunpack.c.l.b16 %v2326
    %v2412 = vunpack.c.l.b16 %v2327
    %v2413 = vunpack.c.h.b16 %v2327
    %v2414 = vunpack.c.l.b16 %v2328
    %v2415 = vpack.c.b16 %v2370, %v2367
    %v2416 = vpack.c.b16 %v2371, %v2368
    %v2417 = vpack.c.b16 %v2372, %v2369
    %v2418 = vpack.c.b16 %v2376, %v2373
    %v2419 = vpack.c.b16 %v2377, %v2374
    %v2420 = vpack.c.b16 %v2378, %v2375
    %v2421 = vpack.c.b16 %v2382, %v2379
    %v2422 = vpack.c.b16 %v2383, %v2380
    %v2423 = vpack.c.b16 %v2384, %v2381
    %v2424 = vpack.c.b16 %v2388, %v2385
    %v2425 = vpack.c.b16 %v2389, %v2386
    %v2426 = vpack.c.b16 %v2390, %v2387
    %v2427 = vpack.c.b16 %v2394, %v2391
    %v2428 = vpack.c.b16 %v2395, %v2392
    %v2429 = vpack.c.b16 %v2396, %v2393
    %v2430 = vpack.c.b16 %v2400, %v2397
    %v2431 = vpack.c.b16 %v2401, %v2398
    %v2432 = vpack.c.b16 %v2402, %v2399
    %v2433 = vpack.c.b16 %v2406, %v2403
    %v2434 = vpack.c.b16 %v2407, %v2404
    %v2435 = vpack.c.b16 %v2408, %v2405
    %v2436 = vpack.c.b16 %v2412, %v2409
    %v2437 = vpack.c.b16 %v2413, %v2410
    %v2438 = vpack.c.b16 %v2414, %v2411
    %v2464 = vlaneseq
    %v2465 = vshrl.u32 %v2464, 7
    %v2466 = vsub.s32 0, %v2465
    %v2467 = vrot.slane %v2329, %v2466
    %v2468 = vlaneseq
    %v2469 = vshrl.u32 %v2468, 7
    %v2470 = vsub.s32 1, %v2469
    %v2471 = vrot.slane %v2329, %v2470
    %v2472 = vlaneseq
    %v2473 = vshrl.u32 %v2472, 7
    %v2474 = vsub.s32 2, %v2473
    %v2475 = vrot.slane %v2329, %v2474
    %2479 = vmatprep.subr.bf16.mxu0 %v2437
    %2480 = vmatpush1.bf16.msra.mxu0 %v2436
    %2481 = vmatprep.subr.bf16.mxu0 %v2434
    %2482 = vmatpush1.bf16.msra.mxu0 %v2433
    %2483 = vmatprep.subr.bf16.mxu0 %v2431
    %2484 = vmatpush1.bf16.msra.mxu0 %v2430
    %2485 = vmatprep.subr.bf16.mxu0 %v2428
    %2486 = vmatpush1.bf16.msra.mxu0 %v2427
    %2487 = vmatprep.subr.bf16.mxu0 %v2425
    %2488 = vmatpush1.bf16.msra.mxu0 %v2424
    %2489 = vmatprep.subr.bf16.mxu0 %v2422
    %2490 = vmatpush1.bf16.msra.mxu0 %v2421
    %2491 = vmatprep.subr.bf16.mxu0 %v2419
    %2492 = vmatpush1.bf16.msra.mxu0 %v2418
    %2493 = vmatprep.subr.bf16.mxu0 %v2416
    %2494 = vmatpush1.bf16.msra.mxu0 %v2415
    %2495 = vmatprep.subr.bf16.mxu0 0
    %2496 = vmatpush2.bf16.msra.mxu0 0
    %2497 = vmatprep.subr.bf16.mxu0 0
    %2498 = vmatpush2.bf16.msra.mxu0 0
    %2499 = vmatprep.subr.bf16.mxu0 0
    %2500 = vmatpush2.bf16.msra.mxu0 0
    %2501 = vmatprep.subr.bf16.mxu0 0
    %2502 = vmatpush2.bf16.msra.mxu0 0
    %2503 = vmatprep.subr.bf16.mxu0 0
    %2504 = vmatpush2.bf16.msra.mxu0 0
    %2505 = vmatprep.subr.bf16.mxu0 0
    %2506 = vmatpush2.bf16.msra.mxu0 0
    %2507 = vmatprep.subr.bf16.mxu0 0
    %2508 = vmatpush2.bf16.msra.mxu0 0
    %2509 = vmatprep.subr.bf16.mxu0 0
    %2510 = vmatpush2.bf16.msra.mxu0 0
    %2511 = vmatprep.mubr.bf16.mxu0 0
    %2512 = vmatmul.mubr.bf16.gmra.mxu0 %v2333
    %v2513 = vpop.f32.mrf.mxu0
    %v2514 = vadd.f32 %v2467, %v2513
    %v2515 = vpop.f32.mrf.mxu0
    %v2516 = vadd.f32 %v2471, %v2515
    %v2517 = vpop.f32.mrf.mxu0
    %v2518 = vpop.f32.mrf.mxu0
    %2519 = vdwg.mxu0
    %2520 = vmatprep.subr.bf16.mxu0 0
    %2521 = vmatpush1.bf16.msra.mxu0 %v2438
    %2522 = vmatprep.subr.bf16.mxu0 0
    %2523 = vmatpush1.bf16.msra.mxu0 %v2435
    %2524 = vmatprep.subr.bf16.mxu0 0
    %2525 = vmatpush1.bf16.msra.mxu0 %v2432
    %2526 = vmatprep.subr.bf16.mxu0 0
    %2527 = vmatpush1.bf16.msra.mxu0 %v2429
    %2528 = vmatprep.subr.bf16.mxu0 0
    %2529 = vmatpush1.bf16.msra.mxu0 %v2426
    %2530 = vmatprep.subr.bf16.mxu0 0
    %2531 = vmatpush1.bf16.msra.mxu0 %v2423
    %2532 = vmatprep.subr.bf16.mxu0 0
    %2533 = vmatpush1.bf16.msra.mxu0 %v2420
    %2534 = vmatprep.subr.bf16.mxu0 0
    %2535 = vmatpush1.bf16.msra.mxu0 %v2417
    %2536 = vmatprep.subr.bf16.mxu0 0
    %2537 = vmatpush2.bf16.msra.mxu0 0
    %2538 = vmatprep.subr.bf16.mxu0 0
    %2539 = vmatpush2.bf16.msra.mxu0 0
    %2540 = vmatprep.subr.bf16.mxu0 0
    %2541 = vmatpush2.bf16.msra.mxu0 0
    %2542 = vmatprep.subr.bf16.mxu0 0
    %2543 = vmatpush2.bf16.msra.mxu0 0
    %2544 = vmatprep.subr.bf16.mxu0 0
    %2545 = vmatpush2.bf16.msra.mxu0 0
    %2546 = vmatprep.subr.bf16.mxu0 0
    %2547 = vmatpush2.bf16.msra.mxu0 0
    %2548 = vmatprep.subr.bf16.mxu0 0
    %2549 = vmatpush2.bf16.msra.mxu0 0
    %2550 = vmatprep.subr.bf16.mxu0 0
    %2551 = vmatpush2.bf16.msra.mxu0 0
    %2552 = vmatprep.mubr.bf16.mxu0 0
    %2553 = vmatmul.mubr.bf16.gmra.mxu0 %v2333
    %v2554 = vpop.f32.mrf.mxu0
    %v2555 = vadd.f32 %v2475, %v2554
    %v2556 = vpop.f32.mrf.mxu0
    %v2557 = vpop.f32.mrf.mxu0
    %v2558 = vpop.f32.mrf.mxu0
    %2559 = vdwg.mxu0
    %v2561 = vrot.slane %v2514, 2
    %v2563 = vadd.f32 %v488, %v2561
    %v2564 = vxor.u32 %v2563, 2147483648
    %v2565 = vmul.f32 %v2564, 1.442695
    %v2566 = vpow.pop %v2565
    %v2567 = vadd.f32 %v2566, 1.0
    %v2568 = vrcp.pop %v2567
    %v2569 = vmul.f32 1.0, %v2568
    %v2571 = vrot.slane %v2516, 2
    %v2573 = vadd.f32 %v490, %v2571
    %v2574 = vxor.u32 %v2573, 2147483648
    %v2575 = vmul.f32 %v2574, 1.442695
    %v2576 = vpow.pop %v2575
    %v2577 = vadd.f32 %v2576, 1.0
    %v2578 = vrcp.pop %v2577
    %v2579 = vmul.f32 1.0, %v2578
    %v2581 = vrot.slane %v2555, 2
    %v2583 = vmul.f32 %v2569, %v2581
    %v2584 = vadd.f32 %v529, %v2583
    %v2585 = vtanh.pop %v2584
    %v2586 = vsub.f32 1.0, %v2579
    %v2587 = vmul.f32 %v2586, %v2585
    %v2589 = vrot.slane %v2294, 7
    %v2591 = vmul.f32 %v2579, %v2589
    %v2592 = vadd.f32 %v2587, %v2591
    %2593 = vst [vmem:[#allocation11] sm:$0x40] %v2592
    %v2594 = vpack.c.bf16 %v2592, %v2592
    %v2595 = vld [vmem:[#allocation7] sm:$0xff]
    %v2596 = vld [vmem:[#allocation7 + $0x8] sm:$0xf]
    %v2597 = vld [vmem:[#allocation7 + $0xc] sm:$0xff]
    %v2598 = vld [vmem:[#allocation7 + $0x14] sm:$0xf]
    %v2599 = vld [vmem:[#allocation7 + $0x18] sm:$0xff]
    %v2600 = vld [vmem:[#allocation7 + $0x20] sm:$0xf]
    %v2601 = vld [vmem:[#allocation7 + $0x24] sm:$0xff]
    %v2602 = vld [vmem:[#allocation7 + $0x2c] sm:$0xf]
    %v2603 = vld [vmem:[#allocation7 + $0x30] sm:$0xff]
    %v2604 = vld [vmem:[#allocation7 + $0x38] sm:$0xf]
    %v2605 = vld [vmem:[#allocation7 + $0x3c] sm:$0xff]
    %v2606 = vld [vmem:[#allocation7 + $0x44] sm:$0xf]
    %v2607 = vld [vmem:[#allocation7 + $0x48] sm:$0xff]
    %v2608 = vld [vmem:[#allocation7 + $0x50] sm:$0xf]
    %v2609 = vld [vmem:[#allocation7 + $0x54] sm:$0xff]
    %v2610 = vld [vmem:[#allocation7 + $0x5c] sm:$0xf]
    %v2611 = vld [vmem:[#allocation7 + $0x60] sm:$0xff]
    %v2612 = vld [vmem:[#allocation7 + $0x68] sm:$0xf]
    %v2613 = vld [vmem:[#allocation7 + $0x6c] sm:$0xff]
    %v2614 = vld [vmem:[#allocation7 + $0x74] sm:$0xf]
    %v2615 = vld [vmem:[#allocation7 + $0x78] sm:$0xff]
    %v2616 = vld [vmem:[#allocation7 + $0x80] sm:$0xf]
    %v2617 = vld [vmem:[#allocation7 + $0x84] sm:$0xff]
    %v2618 = vld [vmem:[#allocation7 + $0x8c] sm:$0xf]
    %v2619 = vld [vmem:[#allocation7 + $0x90] sm:$0xff]
    %v2620 = vld [vmem:[#allocation7 + $0x98] sm:$0xf]
    %v2621 = vld [vmem:[#allocation7 + $0x9c] sm:$0xff]
    %v2622 = vld [vmem:[#allocation7 + $0xa4] sm:$0xf]
    %v2623 = vld [vmem:[#allocation7 + $0xa8] sm:$0xff]
    %v2624 = vld [vmem:[#allocation7 + $0xb0] sm:$0xf]
    %v2625 = vld [vmem:[#allocation7 + $0xb4] sm:$0xff]
    %v2626 = vld [vmem:[#allocation7 + $0xbc] sm:$0xf]
    %v2627 = vld [vmem:[%s6] sm:$0x7]
    %v2629 = vrot.slane %v2594, 3
    %v2663 = vunpack.c.l.b16 %v2595
    %v2664 = vunpack.c.h.b16 %v2595
    %v2665 = vunpack.c.l.b16 %v2596
    %v2666 = vunpack.c.l.b16 %v2597
    %v2667 = vunpack.c.h.b16 %v2597
    %v2668 = vunpack.c.l.b16 %v2598
    %v2669 = vunpack.c.l.b16 %v2599
    %v2670 = vunpack.c.h.b16 %v2599
    %v2671 = vunpack.c.l.b16 %v2600
    %v2672 = vunpack.c.l.b16 %v2601
    %v2673 = vunpack.c.h.b16 %v2601
    %v2674 = vunpack.c.l.b16 %v2602
    %v2675 = vunpack.c.l.b16 %v2603
    %v2676 = vunpack.c.h.b16 %v2603
    %v2677 = vunpack.c.l.b16 %v2604
    %v2678 = vunpack.c.l.b16 %v2605
    %v2679 = vunpack.c.h.b16 %v2605
    %v2680 = vunpack.c.l.b16 %v2606
    %v2681 = vunpack.c.l.b16 %v2607
    %v2682 = vunpack.c.h.b16 %v2607
    %v2683 = vunpack.c.l.b16 %v2608
    %v2684 = vunpack.c.l.b16 %v2609
    %v2685 = vunpack.c.h.b16 %v2609
    %v2686 = vunpack.c.l.b16 %v2610
    %v2687 = vunpack.c.l.b16 %v2611
    %v2688 = vunpack.c.h.b16 %v2611
    %v2689 = vunpack.c.l.b16 %v2612
    %v2690 = vunpack.c.l.b16 %v2613
    %v2691 = vunpack.c.h.b16 %v2613
    %v2692 = vunpack.c.l.b16 %v2614
    %v2693 = vunpack.c.l.b16 %v2615
    %v2694 = vunpack.c.h.b16 %v2615
    %v2695 = vunpack.c.l.b16 %v2616
    %v2696 = vunpack.c.l.b16 %v2617
    %v2697 = vunpack.c.h.b16 %v2617
    %v2698 = vunpack.c.l.b16 %v2618
    %v2699 = vunpack.c.l.b16 %v2619
    %v2700 = vunpack.c.h.b16 %v2619
    %v2701 = vunpack.c.l.b16 %v2620
    %v2702 = vunpack.c.l.b16 %v2621
    %v2703 = vunpack.c.h.b16 %v2621
    %v2704 = vunpack.c.l.b16 %v2622
    %v2705 = vunpack.c.l.b16 %v2623
    %v2706 = vunpack.c.h.b16 %v2623
    %v2707 = vunpack.c.l.b16 %v2624
    %v2708 = vunpack.c.l.b16 %v2625
    %v2709 = vunpack.c.h.b16 %v2625
    %v2710 = vunpack.c.l.b16 %v2626
    %v2711 = vpack.c.b16 %v2666, %v2663
    %v2712 = vpack.c.b16 %v2667, %v2664
    %v2713 = vpack.c.b16 %v2668, %v2665
    %v2714 = vpack.c.b16 %v2672, %v2669
    %v2715 = vpack.c.b16 %v2673, %v2670
    %v2716 = vpack.c.b16 %v2674, %v2671
    %v2717 = vpack.c.b16 %v2678, %v2675
    %v2718 = vpack.c.b16 %v2679, %v2676
    %v2719 = vpack.c.b16 %v2680, %v2677
    %v2720 = vpack.c.b16 %v2684, %v2681
    %v2721 = vpack.c.b16 %v2685, %v2682
    %v2722 = vpack.c.b16 %v2686, %v2683
    %v2723 = vpack.c.b16 %v2690, %v2687
    %v2724 = vpack.c.b16 %v2691, %v2688
    %v2725 = vpack.c.b16 %v2692, %v2689
    %v2726 = vpack.c.b16 %v2696, %v2693
    %v2727 = vpack.c.b16 %v2697, %v2694
    %v2728 = vpack.c.b16 %v2698, %v2695
    %v2729 = vpack.c.b16 %v2702, %v2699
    %v2730 = vpack.c.b16 %v2703, %v2700
    %v2731 = vpack.c.b16 %v2704, %v2701
    %v2732 = vpack.c.b16 %v2708, %v2705
    %v2733 = vpack.c.b16 %v2709, %v2706
    %v2734 = vpack.c.b16 %v2710, %v2707
    %v2760 = vlaneseq
    %v2761 = vshrl.u32 %v2760, 7
    %v2762 = vsub.s32 0, %v2761
    %v2763 = vrot.slane %v2627, %v2762
    %v2764 = vlaneseq
    %v2765 = vshrl.u32 %v2764, 7
    %v2766 = vsub.s32 1, %v2765
    %v2767 = vrot.slane %v2627, %v2766
    %v2768 = vlaneseq
    %v2769 = vshrl.u32 %v2768, 7
    %v2770 = vsub.s32 2, %v2769
    %v2771 = vrot.slane %v2627, %v2770
    %2775 = vmatprep.subr.bf16.mxu0 %v2733
    %2776 = vmatpush1.bf16.msra.mxu0 %v2732
    %2777 = vmatprep.subr.bf16.mxu0 %v2730
    %2778 = vmatpush1.bf16.msra.mxu0 %v2729
    %2779 = vmatprep.subr.bf16.mxu0 %v2727
    %2780 = vmatpush1.bf16.msra.mxu0 %v2726
    %2781 = vmatprep.subr.bf16.mxu0 %v2724
    %2782 = vmatpush1.bf16.msra.mxu0 %v2723
    %2783 = vmatprep.subr.bf16.mxu0 %v2721
    %2784 = vmatpush1.bf16.msra.mxu0 %v2720
    %2785 = vmatprep.subr.bf16.mxu0 %v2718
    %2786 = vmatpush1.bf16.msra.mxu0 %v2717
    %2787 = vmatprep.subr.bf16.mxu0 %v2715
    %2788 = vmatpush1.bf16.msra.mxu0 %v2714
    %2789 = vmatprep.subr.bf16.mxu0 %v2712
    %2790 = vmatpush1.bf16.msra.mxu0 %v2711
    %2791 = vmatprep.subr.bf16.mxu0 0
    %2792 = vmatpush2.bf16.msra.mxu0 0
    %2793 = vmatprep.subr.bf16.mxu0 0
    %2794 = vmatpush2.bf16.msra.mxu0 0
    %2795 = vmatprep.subr.bf16.mxu0 0
    %2796 = vmatpush2.bf16.msra.mxu0 0
    %2797 = vmatprep.subr.bf16.mxu0 0
    %2798 = vmatpush2.bf16.msra.mxu0 0
    %2799 = vmatprep.subr.bf16.mxu0 0
    %2800 = vmatpush2.bf16.msra.mxu0 0
    %2801 = vmatprep.subr.bf16.mxu0 0
    %2802 = vmatpush2.bf16.msra.mxu0 0
    %2803 = vmatprep.subr.bf16.mxu0 0
    %2804 = vmatpush2.bf16.msra.mxu0 0
    %2805 = vmatprep.subr.bf16.mxu0 0
    %2806 = vmatpush2.bf16.msra.mxu0 0
    %2807 = vmatprep.mubr.bf16.mxu0 0
    %2808 = vmatmul.mubr.bf16.gmra.mxu0 %v2629
    %v2809 = vpop.f32.mrf.mxu0
    %v2810 = vadd.f32 %v2763, %v2809
    %v2811 = vpop.f32.mrf.mxu0
    %v2812 = vadd.f32 %v2767, %v2811
    %v2813 = vpop.f32.mrf.mxu0
    %v2814 = vpop.f32.mrf.mxu0
    %2815 = vdwg.mxu0
    %2816 = vmatprep.subr.bf16.mxu0 0
    %2817 = vmatpush1.bf16.msra.mxu0 %v2734
    %2818 = vmatprep.subr.bf16.mxu0 0
    %2819 = vmatpush1.bf16.msra.mxu0 %v2731
    %2820 = vmatprep.subr.bf16.mxu0 0
    %2821 = vmatpush1.bf16.msra.mxu0 %v2728
    %2822 = vmatprep.subr.bf16.mxu0 0
    %2823 = vmatpush1.bf16.msra.mxu0 %v2725
    %2824 = vmatprep.subr.bf16.mxu0 0
    %2825 = vmatpush1.bf16.msra.mxu0 %v2722
    %2826 = vmatprep.subr.bf16.mxu0 0
    %2827 = vmatpush1.bf16.msra.mxu0 %v2719
    %2828 = vmatprep.subr.bf16.mxu0 0
    %2829 = vmatpush1.bf16.msra.mxu0 %v2716
    %2830 = vmatprep.subr.bf16.mxu0 0
    %2831 = vmatpush1.bf16.msra.mxu0 %v2713
    %2832 = vmatprep.subr.bf16.mxu0 0
    %2833 = vmatpush2.bf16.msra.mxu0 0
    %2834 = vmatprep.subr.bf16.mxu0 0
    %2835 = vmatpush2.bf16.msra.mxu0 0
    %2836 = vmatprep.subr.bf16.mxu0 0
    %2837 = vmatpush2.bf16.msra.mxu0 0
    %2838 = vmatprep.subr.bf16.mxu0 0
    %2839 = vmatpush2.bf16.msra.mxu0 0
    %2840 = vmatprep.subr.bf16.mxu0 0
    %2841 = vmatpush2.bf16.msra.mxu0 0
    %2842 = vmatprep.subr.bf16.mxu0 0
    %2843 = vmatpush2.bf16.msra.mxu0 0
    %2844 = vmatprep.subr.bf16.mxu0 0
    %2845 = vmatpush2.bf16.msra.mxu0 0
    %2846 = vmatprep.subr.bf16.mxu0 0
    %2847 = vmatpush2.bf16.msra.mxu0 0
    %2848 = vmatprep.mubr.bf16.mxu0 0
    %2849 = vmatmul.mubr.bf16.gmra.mxu0 %v2629
    %v2850 = vpop.f32.mrf.mxu0
    %v2851 = vadd.f32 %v2771, %v2850
    %v2852 = vpop.f32.mrf.mxu0
    %v2853 = vpop.f32.mrf.mxu0
    %v2854 = vpop.f32.mrf.mxu0
    %2855 = vdwg.mxu0
    %v2857 = vrot.slane %v2810, 1
    %v2859 = vadd.f32 %v488, %v2857
    %v2860 = vxor.u32 %v2859, 2147483648
    %v2861 = vmul.f32 %v2860, 1.442695
    %v2862 = vpow.pop %v2861
    %v2863 = vadd.f32 %v2862, 1.0
    %v2864 = vrcp.pop %v2863
    %v2865 = vmul.f32 1.0, %v2864
    %v2867 = vrot.slane %v2812, 1
    %v2869 = vadd.f32 %v490, %v2867
    %v2870 = vxor.u32 %v2869, 2147483648
    %v2871 = vmul.f32 %v2870, 1.442695
    %v2872 = vpow.pop %v2871
    %v2873 = vadd.f32 %v2872, 1.0
    %v2874 = vrcp.pop %v2873
    %v2875 = vmul.f32 1.0, %v2874
    %v2877 = vrot.slane %v2851, 1
    %v2879 = vmul.f32 %v2865, %v2877
    %v2880 = vadd.f32 %v529, %v2879
    %v2881 = vtanh.pop %v2880
    %v2882 = vsub.f32 1.0, %v2875
    %v2883 = vmul.f32 %v2882, %v2881
    %v2885 = vrot.slane %v2592, 7
    %v2887 = vmul.f32 %v2875, %v2885
    %v2888 = vadd.f32 %v2883, %v2887
    %2889 = vst [vmem:[#allocation11] sm:$0x80] %v2888
    %v2890 = vld [vmem:[#allocation11] sm:$0xff]
    %v2891 = vpack.c.bf16 %v2890, %v2890
    %v2892 = vld [vmem:[#allocation8] sm:$0xff]
    %v2893 = vld [vmem:[#allocation8 + $0x8] sm:$0xff]
    %v2894 = vld [vmem:[#allocation8 + $0x10] sm:$0xff]
    %v2895 = vld [vmem:[#allocation8 + $0x18] sm:$0xff]
    %v2896 = vld [vmem:[#allocation8 + $0x20] sm:$0xff]
    %v2897 = vld [vmem:[#allocation8 + $0x28] sm:$0xff]
    %v2898 = vld [vmem:[#allocation8 + $0x30] sm:$0xff]
    %v2899 = vld [vmem:[#allocation8 + $0x38] sm:$0xff]
    %v2900 = vld [vmem:[#allocation8 + $0x40] sm:$0xff]
    %v2901 = vld [vmem:[#allocation8 + $0x48] sm:$0xff]
    %v2902 = vld [vmem:[#allocation8 + $0x50] sm:$0xff]
    %v2903 = vld [vmem:[#allocation8 + $0x58] sm:$0xff]
    %v2904 = vld [vmem:[#allocation8 + $0x60] sm:$0xff]
    %v2905 = vld [vmem:[#allocation8 + $0x68] sm:$0xff]
    %v2906 = vld [vmem:[#allocation8 + $0x70] sm:$0xff]
    %v2907 = vld [vmem:[#allocation8 + $0x78] sm:$0xff]
    %v2908 = vld [vmem:[%s8] sm:$0x3]
    %v2910 = vlaneseq
    %v2911 = vshrl.u32 %v2910, 7
    %v2912 = vsub.s32 0, %v2911
    %v2913 = vrot.slane %v2908, %v2912
    %v2914 = vlaneseq
    %v2915 = vshrl.u32 %v2914, 7
    %v2916 = vsub.s32 1, %v2915
    %v2917 = vrot.slane %v2908, %v2916
    %v2936 = vunpack.c.l.b16 %v2892
    %v2937 = vunpack.c.h.b16 %v2892
    %v2938 = vunpack.c.l.b16 %v2893
    %v2939 = vunpack.c.h.b16 %v2893
    %v2940 = vunpack.c.l.b16 %v2894
    %v2941 = vunpack.c.h.b16 %v2894
    %v2942 = vunpack.c.l.b16 %v2895
    %v2943 = vunpack.c.h.b16 %v2895
    %v2944 = vunpack.c.l.b16 %v2896
    %v2945 = vunpack.c.h.b16 %v2896
    %v2946 = vunpack.c.l.b16 %v2897
    %v2947 = vunpack.c.h.b16 %v2897
    %v2948 = vunpack.c.l.b16 %v2898
    %v2949 = vunpack.c.h.b16 %v2898
    %v2950 = vunpack.c.l.b16 %v2899
    %v2951 = vunpack.c.h.b16 %v2899
    %v2952 = vunpack.c.l.b16 %v2900
    %v2953 = vunpack.c.h.b16 %v2900
    %v2954 = vunpack.c.l.b16 %v2901
    %v2955 = vunpack.c.h.b16 %v2901
    %v2956 = vunpack.c.l.b16 %v2902
    %v2957 = vunpack.c.h.b16 %v2902
    %v2958 = vunpack.c.l.b16 %v2903
    %v2959 = vunpack.c.h.b16 %v2903
    %v2960 = vunpack.c.l.b16 %v2904
    %v2961 = vunpack.c.h.b16 %v2904
    %v2962 = vunpack.c.l.b16 %v2905
    %v2963 = vunpack.c.h.b16 %v2905
    %v2964 = vunpack.c.l.b16 %v2906
    %v2965 = vunpack.c.h.b16 %v2906
    %v2966 = vunpack.c.l.b16 %v2907
    %v2967 = vunpack.c.h.b16 %v2907
    %v2968 = vpack.c.b16 %v2938, %v2936
    %v2969 = vpack.c.b16 %v2939, %v2937
    %v2970 = vpack.c.b16 %v2942, %v2940
    %v2971 = vpack.c.b16 %v2943, %v2941
    %v2972 = vpack.c.b16 %v2946, %v2944
    %v2973 = vpack.c.b16 %v2947, %v2945
    %v2974 = vpack.c.b16 %v2950, %v2948
    %v2975 = vpack.c.b16 %v2951, %v2949
    %v2976 = vpack.c.b16 %v2954, %v2952
    %v2977 = vpack.c.b16 %v2955, %v2953
    %v2978 = vpack.c.b16 %v2958, %v2956
    %v2979 = vpack.c.b16 %v2959, %v2957
    %v2980 = vpack.c.b16 %v2962, %v2960
    %v2981 = vpack.c.b16 %v2963, %v2961
    %v2982 = vpack.c.b16 %v2966, %v2964
    %v2983 = vpack.c.b16 %v2967, %v2965
    %3000 = vmatprep.subr.bf16.mxu0 %v2983
    %3001 = vmatpush1.bf16.msra.mxu0 %v2982
    %3002 = vmatprep.subr.bf16.mxu0 %v2981
    %3003 = vmatpush1.bf16.msra.mxu0 %v2980
    %3004 = vmatprep.subr.bf16.mxu0 %v2979
    %3005 = vmatpush1.bf16.msra.mxu0 %v2978
    %3006 = vmatprep.subr.bf16.mxu0 %v2977
    %3007 = vmatpush1.bf16.msra.mxu0 %v2976
    %3008 = vmatprep.subr.bf16.mxu0 %v2975
    %3009 = vmatpush1.bf16.msra.mxu0 %v2974
    %3010 = vmatprep.subr.bf16.mxu0 %v2973
    %3011 = vmatpush1.bf16.msra.mxu0 %v2972
    %3012 = vmatprep.subr.bf16.mxu0 %v2971
    %3013 = vmatpush1.bf16.msra.mxu0 %v2970
    %3014 = vmatprep.subr.bf16.mxu0 %v2969
    %3015 = vmatpush1.bf16.msra.mxu0 %v2968
    %3016 = vmatprep.subr.bf16.mxu0 0
    %3017 = vmatpush2.bf16.msra.mxu0 0
    %3018 = vmatprep.subr.bf16.mxu0 0
    %3019 = vmatpush2.bf16.msra.mxu0 0
    %3020 = vmatprep.subr.bf16.mxu0 0
    %3021 = vmatpush2.bf16.msra.mxu0 0
    %3022 = vmatprep.subr.bf16.mxu0 0
    %3023 = vmatpush2.bf16.msra.mxu0 0
    %3024 = vmatprep.subr.bf16.mxu0 0
    %3025 = vmatpush2.bf16.msra.mxu0 0
    %3026 = vmatprep.subr.bf16.mxu0 0
    %3027 = vmatpush2.bf16.msra.mxu0 0
    %3028 = vmatprep.subr.bf16.mxu0 0
    %3029 = vmatpush2.bf16.msra.mxu0 0
    %3030 = vmatprep.subr.bf16.mxu0 0
    %3031 = vmatpush2.bf16.msra.mxu0 0
    %3032 = vmatprep.mubr.bf16.mxu0 0
    %3033 = vmatmul.mubr.bf16.gmra.mxu0 %v2891
    %v3034 = vpop.f32.mrf.mxu0
    %v3035 = vadd.f32 %v2913, %v3034
    %v3036 = vpop.f32.mrf.mxu0
    %v3037 = vadd.f32 %v2917, %v3036
    %v3038 = vpop.f32.mrf.mxu0
    %v3039 = vpop.f32.mrf.mxu0
    %3040 = vdwg.mxu0
    %v3041 = vmax.f32 %v3035, %v3037
    %3042 = vmax.xlane.f32.xlu0 %v3041
    %v3043 = vpop.xlane.xlu0 %3042
    %v3044 = vsub.f32 %v3035, %v3043
    %v3045 = vsub.f32 %v3037, %v3043
    %v3046 = vmul.f32 %v3044, 1.442695
    %v3047 = vpow.pop %v3046
    %v3048 = vmul.f32 %v3045, 1.442695
    %v3049 = vpow.pop %v3048
    %v3050 = vadd.f32 %v3047, %v3049
    %3051 = vadd.xlane.f32.xlu0 %v3050
    %v3052 = vpop.xlane.xlu0 %3051
    %v3053 = vlog2.pop %v3052
    %v3054 = vmul.f32 %v3053, 0.6931472
    %v3055 = vsub.f32 %v3044, %v3054
    %v3056 = vsub.f32 %v3045, %v3054
    %3057 = vst [vmem:[#allocation10] sm:$0xff] %v3055
    %3058 = vst [vmem:[#allocation10 + $0x8] sm:$0xff] %v3056
    // Predicated region
    $region54: #{decoder_decode.1} parent=1 // pred_check
      _
    $region55: #{decoder_decode.1} parent=1 // pred_check_branch
      %3060 = sbr.rel (0) target = $region57
    $region56: #{decoder_decode.1} parent=1 // pred_region
      %s3062 = ssub.s32 256, 256
      %3063 = vsyncadd [#allocation4], %s3062
      %s3065 = sshll.u32 [#allocation10], 4
      %s3066 = int_to_ptr.vmem [resolvable:$true] %s3065
      %3068 = dma.vmem_to_hbm [thread:$0]  %s3066, 256, %s9, [#allocation4]
    $region57: #{decoder_decode.1} parent=1 // pred_fallthru
      _
    // Predicated region
    $region58: #{decoder_decode.1} parent=1 // pred_check
      _
    $region59: #{decoder_decode.1} parent=1 // pred_check_branch
      %3070 = sbr.rel (0) target = $region61
    $region60: #{decoder_decode.1} parent=1 // pred_region
      %s3072 = ssub.s32 128, 128
      %3073 = vsyncadd [#allocation12], %s3072
      %s3075 = sshll.u32 [#allocation11], 4
      %s3076 = int_to_ptr.vmem [resolvable:$true] %s3075
      %3078 = dma.vmem_to_hbm [thread:$0]  %s3076, 128, %s10, [#allocation12]
    $region61: #{decoder_decode.1} parent=1 // pred_fallthru
      _
    // Predicated region
    $region62: #{decoder_decode.1} parent=1 // pred_check
      _
    $region63: #{decoder_decode.1} parent=1 // pred_check_branch
      %3080 = sbr.rel (0) target = $region65
    $region64: #{decoder_decode.1} parent=1 // pred_region
      %3081 = dma.done [#allocation4], 256
    $region65: #{decoder_decode.1} parent=1 // pred_fallthru
      _
    // Predicated region
    $region66: #{decoder_decode.1} parent=1 // pred_check
      _
    $region67: #{decoder_decode.1} parent=1 // pred_check_branch
      %3083 = sbr.rel (0) target = $region69
    $region68: #{decoder_decode.1} parent=1 // pred_region
      %3084 = dma.done [#allocation12], 128
    $region69: #{decoder_decode.1} parent=1 // pred_fallthru
      _
    %3085 = vsyncpa [#allocation3], 1
    %3086 = vsyncpa [#allocation6], 1
    %3087 = vsyncpa [#allocation9], 1
    %3088 = vsyncpa [#allocation4], 1
    %3089 = vsyncpa [#allocation12], 1

</llo_original>
